<compile_context>
chip_gen: v7x
topology: tpu7x:2x2x1
jax: 0.10.0
libtpu: 0.0.40
codegen_flags: <defaults>
</compile_context>

<pallas_src>
import jax
import jax.numpy as jnp
from jax.experimental import pallas as pl
from jax.experimental.pallas import tpu as pltpu

EPS = 1e-5          # PyTorch BatchNorm default eps
NEG_SLOPE = 0.01    # PyTorch LeakyReLU default negative_slope
N_CLASSES = 10
HPAD = 128          # lane-padded hidden / logit width (100 -> 128, 10 -> 128)


def _leaky_relu(x):
    return jnp.where(x >= 0, x, NEG_SLOPE * x)


def _mean_all(a):
    # full-array mean as two rank-preserving reductions (lane then sublane)
    return jnp.mean(jnp.mean(a, axis=1, keepdims=True), axis=0, keepdims=True)


def fused_classifier_kernel(pT_ref, w1_ref, b1_ref, g1_ref, be1_ref,
                            w2_ref, b2_ref, g2_ref, be2_ref,
                            w3_ref, b3_ref, out_ref):
    """All layers fused; everything stays resident in VMEM / vregs.

    pT_ref : [48, B, 256] VMEM  im2col input, k = cin*16+kh*4+kw, s = oh*16+ow
    w1_ref : [3, 48]      SMEM  conv weights (cout, cin*kh*kw)
    b1/g1/be1 : [3]       SMEM  conv bias / BN2d gamma / BN2d beta
    w2_ref : [768, 128]   VMEM  fc1 weight, out dim zero-padded 100 -> 128
    b2/g2/be2 : [1, 128]  VMEM  (gamma padded with 1, rest with 0)
    w3_ref : [128, 128]   VMEM  fc2 weight, rows 100->128 / cols 10->128 zero-padded
    b3_ref : [1, 128]     VMEM
    out_ref: [B, 10]            softmax probabilities
    """
    B = pT_ref.shape[1]

    # ---- Conv2d(3,3,k=4,s=2,p=1): 48 taps x 3 out-channels of scalar*vector madds
    #      (each pT tile is loaded once; accumulators live in vregs) ----
    accs = [jnp.zeros((B, 256), jnp.float32) + b1_ref[c] for c in range(3)]
    for k in range(48):
        p = pT_ref[k]                               # [B, 256]
        for c in range(3):
            accs[c] = accs[c] + w1_ref[c, k] * p

    # ---- per-channel BatchNorm2d (training-mode batch stats over B*H*W) +
    #      LeakyReLU, folded straight into the first Linear so the "view(-1,768)"
    #      never needs a transpose: h[b,:] += y_c[b,:] @ w2[c*256:(c+1)*256, :] ----
    h = jnp.zeros((B, HPAD), jnp.float32) + b2_ref[...]
    for c in range(3):
        a = accs[c]
        mu = _mean_all(a)
        var = _mean_all((a - mu) * (a - mu))        # biased variance (PyTorch BN)
        yc = (a - mu) * jax.lax.rsqrt(var + EPS) * g1_ref[c] + be1_ref[c]
        yc = _leaky_relu(yc)
        h = h + jnp.dot(yc, w2_ref[c * 256:(c + 1) * 256, :],
                        preferred_element_type=jnp.float32)

    # ---- BatchNorm1d(100) (training-mode batch stats over the batch axis) ----
    mu2 = jnp.mean(h, axis=0, keepdims=True)
    var2 = jnp.mean((h - mu2) * (h - mu2), axis=0, keepdims=True)
    h = (h - mu2) * jax.lax.rsqrt(var2 + EPS) * g2_ref[...] + be2_ref[...]
    h = _leaky_relu(h)

    # ---- Linear(100, 10) on padded lanes + masked softmax ----
    logits = jnp.dot(h, w3_ref[...], preferred_element_type=jnp.float32) + b3_ref[...]
    col = jax.lax.broadcasted_iota(jnp.int32, logits.shape, 1)
    logits = jnp.where(col < N_CLASSES, logits, -1e30)   # padded cols get no mass
    mx = jnp.max(logits, axis=1, keepdims=True)
    e = jnp.exp(logits - mx)
    s = jnp.sum(e, axis=1, keepdims=True)
    inv = pl.reciprocal(s, approx=True)                   # EUP slot (free)
    inv = inv * (2.0 - s * inv)                           # one Newton step
    out_ref[...] = (e * inv)[:, :N_CLASSES]


def classifier_forward(x, params):
    """x: [B, 3, 32, 32] float32 (NCHW). Returns [B, 10] softmax probabilities."""
    B = x.shape[0]
    assert x.shape[1:] == (3, 32, 32)

    # im2col in XLA glue, laid out k-major / lane-dense: pT[k, b, oh*16 + ow].
    # (The conv itself, both BNs, both Linears and the softmax all run inside
    #  one fused Pallas kernel; no intermediate is written back to HBM.)
    xp = jnp.pad(x, ((0, 0), (0, 0), (1, 1), (1, 1)))      # [B, 3, 34, 34]
    cols = [xp[:, cin, kh:kh + 32:2, kw:kw + 32:2]          # [B, 16, 16]
            for cin in range(3) for kh in range(4) for kw in range(4)]
    pT = jnp.stack(cols, axis=0).reshape(48, B, 256)        # [48, B, 256]

    w1f = params["w1"].reshape(3, 48)                        # (cout, cin*kh*kw)
    b1 = params["b1"].reshape(3)
    g1 = params["g1"].reshape(3)
    be1 = params["be1"].reshape(3)

    # Pad MLP lane dims up to 128 so every MXU tile / vreg / store is lane-dense.
    pad_h = HPAD - params["w2"].shape[1]                     # 100 -> 128
    pad_o = HPAD - params["w3"].shape[1]                     # 10  -> 128
    w2p = jnp.pad(params["w2"], ((0, 0), (0, pad_h)))
    b2p = jnp.pad(params["b2"], ((0, 0), (0, pad_h)))
    g2p = jnp.pad(params["g2"], ((0, 0), (0, pad_h)), constant_values=1.0)
    be2p = jnp.pad(params["be2"], ((0, 0), (0, pad_h)))
    w3p = jnp.pad(params["w3"], ((0, pad_h), (0, pad_o)))
    b3p = jnp.pad(params["b3"], ((0, 0), (0, pad_o)))

    vmem = pl.BlockSpec(memory_space=pltpu.MemorySpace.VMEM)
    smem = pl.BlockSpec(memory_space=pltpu.MemorySpace.SMEM)

    # Single gridless call: BatchNorm batch statistics need the whole batch
    # resident, and at these sizes (<2 MiB total VMEM) one block fits every
    # TPU generation comfortably (v5e/v6e/v7x scoped-VMEM limits).
    return pl.pallas_call(
        fused_classifier_kernel,
        out_shape=jax.ShapeDtypeStruct((B, N_CLASSES), jnp.float32),
        in_specs=[vmem, smem, smem, smem, smem,
                  vmem, vmem, vmem, vmem, vmem, vmem],
        out_specs=vmem,
    )(pT, w1f, b1, g1, be1, w2p, b2p, g2p, be2p, w3p, b3p)


def init_params(key):
    """Deterministic synthetic parameters (PyTorch-like uniform fan-in init)."""
    ks = jax.random.split(key, 6)

    def u(k, shape, fan_in):
        bound = 1.0 / jnp.sqrt(float(fan_in))
        return jax.random.uniform(k, shape, jnp.float32, -bound, bound)

    return dict(
        # Conv2d(3, 3, 4, 4)
        w1=u(ks[0], (3, 3, 4, 4), 3 * 4 * 4),
        b1=u(ks[1], (1, 3), 3 * 4 * 4),
        # BatchNorm2d(3): gamma=1, beta=0
        g1=jnp.ones((1, 3), jnp.float32),
        be1=jnp.zeros((1, 3), jnp.float32),
        # Linear(768, 100) stored as [in, out]
        w2=u(ks[2], (768, 100), 768),
        b2=u(ks[3], (1, 100), 768),
        # BatchNorm1d(100)
        g2=jnp.ones((1, 100), jnp.float32),
        be2=jnp.zeros((1, 100), jnp.float32),
        # Linear(100, 10) stored as [in, out]
        w3=u(ks[4], (100, 10), 100),
        b3=u(ks[5], (1, 10), 100),
    )


if __name__ == "__main__":
    key = jax.random.PRNGKey(0)
    pkey, xkey = jax.random.split(key)
    params = init_params(pkey)

    # Spatial/channel dims are dictated by the module (3x32x32 -> 768); batch=8.
    x = jax.random.normal(xkey, (8, 3, 32, 32), jnp.float32)

    fwd = jax.jit(classifier_forward)
    out = jax.block_until_ready(fwd(x, params))

    assert out.shape == (8, 10)
    assert bool(jnp.all(jnp.isfinite(out)))
    # softmax rows sum to 1 (approx reciprocal + Newton step -> ~f32 accurate)
    assert bool(jnp.allclose(jnp.sum(out, axis=1), 1.0, atol=1e-4))
    print("KERNEL_OK")
</pallas_src>

<mosaic_0001>
module attributes {stable_mosaic.version = 11 : i64} {
  func.func @fused_classifier_kernel(%arg0: memref<48x8x256xf32, #tpu.memory_space<vmem>>, %arg1: memref<3x48xf32, #tpu.memory_space<smem>>, %arg2: memref<3xf32, #tpu.memory_space<smem>>, %arg3: memref<3xf32, #tpu.memory_space<smem>>, %arg4: memref<3xf32, #tpu.memory_space<smem>>, %arg5: memref<768x128xf32, #tpu.memory_space<vmem>>, %arg6: memref<1x128xf32, #tpu.memory_space<vmem>>, %arg7: memref<1x128xf32, #tpu.memory_space<vmem>>, %arg8: memref<1x128xf32, #tpu.memory_space<vmem>>, %arg9: memref<128x128xf32, #tpu.memory_space<vmem>>, %arg10: memref<1x128xf32, #tpu.memory_space<vmem>>, %arg11: memref<8x10xf32, #tpu.memory_space<vmem>>) attributes {dimension_semantics = [], scalar_prefetch = 0 : i64, scratch_operands = 0 : i64, tpu.core_type = #tpu.core_type<tc>} {
    %cst = arith.constant 0.000000e+00 : f32
    %0 = vector.broadcast %cst : f32 to vector<8x256xf32>
    %c0 = arith.constant 0 : index
    %1 = memref.load %arg2[%c0] : memref<3xf32, #tpu.memory_space<smem>>
    %2 = vector.broadcast %1 : f32 to vector<8x256xf32>
    %3 = arith.addf %0, %2 : vector<8x256xf32>
    %cst_0 = arith.constant 0.000000e+00 : f32
    %4 = vector.broadcast %cst_0 : f32 to vector<8x256xf32>
    %c1 = arith.constant 1 : index
    %5 = memref.load %arg2[%c1] : memref<3xf32, #tpu.memory_space<smem>>
    %6 = vector.broadcast %5 : f32 to vector<8x256xf32>
    %7 = arith.addf %4, %6 : vector<8x256xf32>
    %cst_1 = arith.constant 0.000000e+00 : f32
    %8 = vector.broadcast %cst_1 : f32 to vector<8x256xf32>
    %c2 = arith.constant 2 : index
    %9 = memref.load %arg2[%c2] : memref<3xf32, #tpu.memory_space<smem>>
    %10 = vector.broadcast %9 : f32 to vector<8x256xf32>
    %11 = arith.addf %8, %10 : vector<8x256xf32>
    %c0_2 = arith.constant 0 : index
    %c0_3 = arith.constant 0 : index
    %c0_4 = arith.constant 0 : index
    %12 = vector.load %arg0[%c0_2, %c0_3, %c0_4] : memref<48x8x256xf32, #tpu.memory_space<vmem>>, vector<1x8x256xf32>
    %13 = vector.shape_cast %12 : vector<1x8x256xf32> to vector<8x256xf32>
    %c0_5 = arith.constant 0 : index
    %c0_6 = arith.constant 0 : index
    %14 = memref.load %arg1[%c0_5, %c0_6] : memref<3x48xf32, #tpu.memory_space<smem>>
    %15 = vector.broadcast %14 : f32 to vector<8x256xf32>
    %16 = arith.mulf %15, %13 : vector<8x256xf32>
    %17 = arith.addf %3, %16 : vector<8x256xf32>
    %c1_7 = arith.constant 1 : index
    %c0_8 = arith.constant 0 : index
    %18 = memref.load %arg1[%c1_7, %c0_8] : memref<3x48xf32, #tpu.memory_space<smem>>
    %19 = vector.broadcast %18 : f32 to vector<8x256xf32>
    %20 = arith.mulf %19, %13 : vector<8x256xf32>
    %21 = arith.addf %7, %20 : vector<8x256xf32>
    %c2_9 = arith.constant 2 : index
    %c0_10 = arith.constant 0 : index
    %22 = memref.load %arg1[%c2_9, %c0_10] : memref<3x48xf32, #tpu.memory_space<smem>>
    %23 = vector.broadcast %22 : f32 to vector<8x256xf32>
    %24 = arith.mulf %23, %13 : vector<8x256xf32>
    %25 = arith.addf %11, %24 : vector<8x256xf32>
    %c1_11 = arith.constant 1 : index
    %c0_12 = arith.constant 0 : index
    %c0_13 = arith.constant 0 : index
    %26 = vector.load %arg0[%c1_11, %c0_12, %c0_13] : memref<48x8x256xf32, #tpu.memory_space<vmem>>, vector<1x8x256xf32>
    %27 = vector.shape_cast %26 : vector<1x8x256xf32> to vector<8x256xf32>
    %c0_14 = arith.constant 0 : index
    %c1_15 = arith.constant 1 : index
    %28 = memref.load %arg1[%c0_14, %c1_15] : memref<3x48xf32, #tpu.memory_space<smem>>
    %29 = vector.broadcast %28 : f32 to vector<8x256xf32>
    %30 = arith.mulf %29, %27 : vector<8x256xf32>
    %31 = arith.addf %17, %30 : vector<8x256xf32>
    %c1_16 = arith.constant 1 : index
    %c1_17 = arith.constant 1 : index
    %32 = memref.load %arg1[%c1_16, %c1_17] : memref<3x48xf32, #tpu.memory_space<smem>>
    %33 = vector.broadcast %32 : f32 to vector<8x256xf32>
    %34 = arith.mulf %33, %27 : vector<8x256xf32>
    %35 = arith.addf %21, %34 : vector<8x256xf32>
    %c2_18 = arith.constant 2 : index
    %c1_19 = arith.constant 1 : index
    %36 = memref.load %arg1[%c2_18, %c1_19] : memref<3x48xf32, #tpu.memory_space<smem>>
    %37 = vector.broadcast %36 : f32 to vector<8x256xf32>
    %38 = arith.mulf %37, %27 : vector<8x256xf32>
    %39 = arith.addf %25, %38 : vector<8x256xf32>
    %c2_20 = arith.constant 2 : index
    %c0_21 = arith.constant 0 : index
    %c0_22 = arith.constant 0 : index
    %40 = vector.load %arg0[%c2_20, %c0_21, %c0_22] : memref<48x8x256xf32, #tpu.memory_space<vmem>>, vector<1x8x256xf32>
    %41 = vector.shape_cast %40 : vector<1x8x256xf32> to vector<8x256xf32>
    %c0_23 = arith.constant 0 : index
    %c2_24 = arith.constant 2 : index
    %42 = memref.load %arg1[%c0_23, %c2_24] : memref<3x48xf32, #tpu.memory_space<smem>>
    %43 = vector.broadcast %42 : f32 to vector<8x256xf32>
    %44 = arith.mulf %43, %41 : vector<8x256xf32>
    %45 = arith.addf %31, %44 : vector<8x256xf32>
    %c1_25 = arith.constant 1 : index
    %c2_26 = arith.constant 2 : index
    %46 = memref.load %arg1[%c1_25, %c2_26] : memref<3x48xf32, #tpu.memory_space<smem>>
    %47 = vector.broadcast %46 : f32 to vector<8x256xf32>
    %48 = arith.mulf %47, %41 : vector<8x256xf32>
    %49 = arith.addf %35, %48 : vector<8x256xf32>
    %c2_27 = arith.constant 2 : index
    %c2_28 = arith.constant 2 : index
    %50 = memref.load %arg1[%c2_27, %c2_28] : memref<3x48xf32, #tpu.memory_space<smem>>
    %51 = vector.broadcast %50 : f32 to vector<8x256xf32>
    %52 = arith.mulf %51, %41 : vector<8x256xf32>
    %53 = arith.addf %39, %52 : vector<8x256xf32>
    %c3 = arith.constant 3 : index
    %c0_29 = arith.constant 0 : index
    %c0_30 = arith.constant 0 : index
    %54 = vector.load %arg0[%c3, %c0_29, %c0_30] : memref<48x8x256xf32, #tpu.memory_space<vmem>>, vector<1x8x256xf32>
    %55 = vector.shape_cast %54 : vector<1x8x256xf32> to vector<8x256xf32>
    %c0_31 = arith.constant 0 : index
    %c3_32 = arith.constant 3 : index
    %56 = memref.load %arg1[%c0_31, %c3_32] : memref<3x48xf32, #tpu.memory_space<smem>>
    %57 = vector.broadcast %56 : f32 to vector<8x256xf32>
    %58 = arith.mulf %57, %55 : vector<8x256xf32>
    %59 = arith.addf %45, %58 : vector<8x256xf32>
    %c1_33 = arith.constant 1 : index
    %c3_34 = arith.constant 3 : index
    %60 = memref.load %arg1[%c1_33, %c3_34] : memref<3x48xf32, #tpu.memory_space<smem>>
    %61 = vector.broadcast %60 : f32 to vector<8x256xf32>
    %62 = arith.mulf %61, %55 : vector<8x256xf32>
    %63 = arith.addf %49, %62 : vector<8x256xf32>
    %c2_35 = arith.constant 2 : index
    %c3_36 = arith.constant 3 : index
    %64 = memref.load %arg1[%c2_35, %c3_36] : memref<3x48xf32, #tpu.memory_space<smem>>
    %65 = vector.broadcast %64 : f32 to vector<8x256xf32>
    %66 = arith.mulf %65, %55 : vector<8x256xf32>
    %67 = arith.addf %53, %66 : vector<8x256xf32>
    %c4 = arith.constant 4 : index
    %c0_37 = arith.constant 0 : index
    %c0_38 = arith.constant 0 : index
    %68 = vector.load %arg0[%c4, %c0_37, %c0_38] : memref<48x8x256xf32, #tpu.memory_space<vmem>>, vector<1x8x256xf32>
    %69 = vector.shape_cast %68 : vector<1x8x256xf32> to vector<8x256xf32>
    %c0_39 = arith.constant 0 : index
    %c4_40 = arith.constant 4 : index
    %70 = memref.load %arg1[%c0_39, %c4_40] : memref<3x48xf32, #tpu.memory_space<smem>>
    %71 = vector.broadcast %70 : f32 to vector<8x256xf32>
    %72 = arith.mulf %71, %69 : vector<8x256xf32>
    %73 = arith.addf %59, %72 : vector<8x256xf32>
    %c1_41 = arith.constant 1 : index
    %c4_42 = arith.constant 4 : index
    %74 = memref.load %arg1[%c1_41, %c4_42] : memref<3x48xf32, #tpu.memory_space<smem>>
    %75 = vector.broadcast %74 : f32 to vector<8x256xf32>
    %76 = arith.mulf %75, %69 : vector<8x256xf32>
    %77 = arith.addf %63, %76 : vector<8x256xf32>
    %c2_43 = arith.constant 2 : index
    %c4_44 = arith.constant 4 : index
    %78 = memref.load %arg1[%c2_43, %c4_44] : memref<3x48xf32, #tpu.memory_space<smem>>
    %79 = vector.broadcast %78 : f32 to vector<8x256xf32>
    %80 = arith.mulf %79, %69 : vector<8x256xf32>
    %81 = arith.addf %67, %80 : vector<8x256xf32>
    %c5 = arith.constant 5 : index
    %c0_45 = arith.constant 0 : index
    %c0_46 = arith.constant 0 : index
    %82 = vector.load %arg0[%c5, %c0_45, %c0_46] : memref<48x8x256xf32, #tpu.memory_space<vmem>>, vector<1x8x256xf32>
    %83 = vector.shape_cast %82 : vector<1x8x256xf32> to vector<8x256xf32>
    %c0_47 = arith.constant 0 : index
    %c5_48 = arith.constant 5 : index
    %84 = memref.load %arg1[%c0_47, %c5_48] : memref<3x48xf32, #tpu.memory_space<smem>>
    %85 = vector.broadcast %84 : f32 to vector<8x256xf32>
    %86 = arith.mulf %85, %83 : vector<8x256xf32>
    %87 = arith.addf %73, %86 : vector<8x256xf32>
    %c1_49 = arith.constant 1 : index
    %c5_50 = arith.constant 5 : index
    %88 = memref.load %arg1[%c1_49, %c5_50] : memref<3x48xf32, #tpu.memory_space<smem>>
    %89 = vector.broadcast %88 : f32 to vector<8x256xf32>
    %90 = arith.mulf %89, %83 : vector<8x256xf32>
    %91 = arith.addf %77, %90 : vector<8x256xf32>
    %c2_51 = arith.constant 2 : index
    %c5_52 = arith.constant 5 : index
    %92 = memref.load %arg1[%c2_51, %c5_52] : memref<3x48xf32, #tpu.memory_space<smem>>
    %93 = vector.broadcast %92 : f32 to vector<8x256xf32>
    %94 = arith.mulf %93, %83 : vector<8x256xf32>
    %95 = arith.addf %81, %94 : vector<8x256xf32>
    %c6 = arith.constant 6 : index
    %c0_53 = arith.constant 0 : index
    %c0_54 = arith.constant 0 : index
    %96 = vector.load %arg0[%c6, %c0_53, %c0_54] : memref<48x8x256xf32, #tpu.memory_space<vmem>>, vector<1x8x256xf32>
    %97 = vector.shape_cast %96 : vector<1x8x256xf32> to vector<8x256xf32>
    %c0_55 = arith.constant 0 : index
    %c6_56 = arith.constant 6 : index
    %98 = memref.load %arg1[%c0_55, %c6_56] : memref<3x48xf32, #tpu.memory_space<smem>>
    %99 = vector.broadcast %98 : f32 to vector<8x256xf32>
    %100 = arith.mulf %99, %97 : vector<8x256xf32>
    %101 = arith.addf %87, %100 : vector<8x256xf32>
    %c1_57 = arith.constant 1 : index
    %c6_58 = arith.constant 6 : index
    %102 = memref.load %arg1[%c1_57, %c6_58] : memref<3x48xf32, #tpu.memory_space<smem>>
    %103 = vector.broadcast %102 : f32 to vector<8x256xf32>
    %104 = arith.mulf %103, %97 : vector<8x256xf32>
    %105 = arith.addf %91, %104 : vector<8x256xf32>
    %c2_59 = arith.constant 2 : index
    %c6_60 = arith.constant 6 : index
    %106 = memref.load %arg1[%c2_59, %c6_60] : memref<3x48xf32, #tpu.memory_space<smem>>
    %107 = vector.broadcast %106 : f32 to vector<8x256xf32>
    %108 = arith.mulf %107, %97 : vector<8x256xf32>
    %109 = arith.addf %95, %108 : vector<8x256xf32>
    %c7 = arith.constant 7 : index
    %c0_61 = arith.constant 0 : index
    %c0_62 = arith.constant 0 : index
    %110 = vector.load %arg0[%c7, %c0_61, %c0_62] : memref<48x8x256xf32, #tpu.memory_space<vmem>>, vector<1x8x256xf32>
    %111 = vector.shape_cast %110 : vector<1x8x256xf32> to vector<8x256xf32>
    %c0_63 = arith.constant 0 : index
    %c7_64 = arith.constant 7 : index
    %112 = memref.load %arg1[%c0_63, %c7_64] : memref<3x48xf32, #tpu.memory_space<smem>>
    %113 = vector.broadcast %112 : f32 to vector<8x256xf32>
    %114 = arith.mulf %113, %111 : vector<8x256xf32>
    %115 = arith.addf %101, %114 : vector<8x256xf32>
    %c1_65 = arith.constant 1 : index
    %c7_66 = arith.constant 7 : index
    %116 = memref.load %arg1[%c1_65, %c7_66] : memref<3x48xf32, #tpu.memory_space<smem>>
    %117 = vector.broadcast %116 : f32 to vector<8x256xf32>
    %118 = arith.mulf %117, %111 : vector<8x256xf32>
    %119 = arith.addf %105, %118 : vector<8x256xf32>
    %c2_67 = arith.constant 2 : index
    %c7_68 = arith.constant 7 : index
    %120 = memref.load %arg1[%c2_67, %c7_68] : memref<3x48xf32, #tpu.memory_space<smem>>
    %121 = vector.broadcast %120 : f32 to vector<8x256xf32>
    %122 = arith.mulf %121, %111 : vector<8x256xf32>
    %123 = arith.addf %109, %122 : vector<8x256xf32>
    %c8 = arith.constant 8 : index
    %c0_69 = arith.constant 0 : index
    %c0_70 = arith.constant 0 : index
    %124 = vector.load %arg0[%c8, %c0_69, %c0_70] : memref<48x8x256xf32, #tpu.memory_space<vmem>>, vector<1x8x256xf32>
    %125 = vector.shape_cast %124 : vector<1x8x256xf32> to vector<8x256xf32>
    %c0_71 = arith.constant 0 : index
    %c8_72 = arith.constant 8 : index
    %126 = memref.load %arg1[%c0_71, %c8_72] : memref<3x48xf32, #tpu.memory_space<smem>>
    %127 = vector.broadcast %126 : f32 to vector<8x256xf32>
    %128 = arith.mulf %127, %125 : vector<8x256xf32>
    %129 = arith.addf %115, %128 : vector<8x256xf32>
    %c1_73 = arith.constant 1 : index
    %c8_74 = arith.constant 8 : index
    %130 = memref.load %arg1[%c1_73, %c8_74] : memref<3x48xf32, #tpu.memory_space<smem>>
    %131 = vector.broadcast %130 : f32 to vector<8x256xf32>
    %132 = arith.mulf %131, %125 : vector<8x256xf32>
    %133 = arith.addf %119, %132 : vector<8x256xf32>
    %c2_75 = arith.constant 2 : index
    %c8_76 = arith.constant 8 : index
    %134 = memref.load %arg1[%c2_75, %c8_76] : memref<3x48xf32, #tpu.memory_space<smem>>
    %135 = vector.broadcast %134 : f32 to vector<8x256xf32>
    %136 = arith.mulf %135, %125 : vector<8x256xf32>
    %137 = arith.addf %123, %136 : vector<8x256xf32>
    %c9 = arith.constant 9 : index
    %c0_77 = arith.constant 0 : index
    %c0_78 = arith.constant 0 : index
    %138 = vector.load %arg0[%c9, %c0_77, %c0_78] : memref<48x8x256xf32, #tpu.memory_space<vmem>>, vector<1x8x256xf32>
    %139 = vector.shape_cast %138 : vector<1x8x256xf32> to vector<8x256xf32>
    %c0_79 = arith.constant 0 : index
    %c9_80 = arith.constant 9 : index
    %140 = memref.load %arg1[%c0_79, %c9_80] : memref<3x48xf32, #tpu.memory_space<smem>>
    %141 = vector.broadcast %140 : f32 to vector<8x256xf32>
    %142 = arith.mulf %141, %139 : vector<8x256xf32>
    %143 = arith.addf %129, %142 : vector<8x256xf32>
    %c1_81 = arith.constant 1 : index
    %c9_82 = arith.constant 9 : index
    %144 = memref.load %arg1[%c1_81, %c9_82] : memref<3x48xf32, #tpu.memory_space<smem>>
    %145 = vector.broadcast %144 : f32 to vector<8x256xf32>
    %146 = arith.mulf %145, %139 : vector<8x256xf32>
    %147 = arith.addf %133, %146 : vector<8x256xf32>
    %c2_83 = arith.constant 2 : index
    %c9_84 = arith.constant 9 : index
    %148 = memref.load %arg1[%c2_83, %c9_84] : memref<3x48xf32, #tpu.memory_space<smem>>
    %149 = vector.broadcast %148 : f32 to vector<8x256xf32>
    %150 = arith.mulf %149, %139 : vector<8x256xf32>
    %151 = arith.addf %137, %150 : vector<8x256xf32>
    %c10 = arith.constant 10 : index
    %c0_85 = arith.constant 0 : index
    %c0_86 = arith.constant 0 : index
    %152 = vector.load %arg0[%c10, %c0_85, %c0_86] : memref<48x8x256xf32, #tpu.memory_space<vmem>>, vector<1x8x256xf32>
    %153 = vector.shape_cast %152 : vector<1x8x256xf32> to vector<8x256xf32>
    %c0_87 = arith.constant 0 : index
    %c10_88 = arith.constant 10 : index
    %154 = memref.load %arg1[%c0_87, %c10_88] : memref<3x48xf32, #tpu.memory_space<smem>>
    %155 = vector.broadcast %154 : f32 to vector<8x256xf32>
    %156 = arith.mulf %155, %153 : vector<8x256xf32>
    %157 = arith.addf %143, %156 : vector<8x256xf32>
    %c1_89 = arith.constant 1 : index
    %c10_90 = arith.constant 10 : index
    %158 = memref.load %arg1[%c1_89, %c10_90] : memref<3x48xf32, #tpu.memory_space<smem>>
    %159 = vector.broadcast %158 : f32 to vector<8x256xf32>
    %160 = arith.mulf %159, %153 : vector<8x256xf32>
    %161 = arith.addf %147, %160 : vector<8x256xf32>
    %c2_91 = arith.constant 2 : index
    %c10_92 = arith.constant 10 : index
    %162 = memref.load %arg1[%c2_91, %c10_92] : memref<3x48xf32, #tpu.memory_space<smem>>
    %163 = vector.broadcast %162 : f32 to vector<8x256xf32>
    %164 = arith.mulf %163, %153 : vector<8x256xf32>
    %165 = arith.addf %151, %164 : vector<8x256xf32>
    %c11 = arith.constant 11 : index
    %c0_93 = arith.constant 0 : index
    %c0_94 = arith.constant 0 : index
    %166 = vector.load %arg0[%c11, %c0_93, %c0_94] : memref<48x8x256xf32, #tpu.memory_space<vmem>>, vector<1x8x256xf32>
    %167 = vector.shape_cast %166 : vector<1x8x256xf32> to vector<8x256xf32>
    %c0_95 = arith.constant 0 : index
    %c11_96 = arith.constant 11 : index
    %168 = memref.load %arg1[%c0_95, %c11_96] : memref<3x48xf32, #tpu.memory_space<smem>>
    %169 = vector.broadcast %168 : f32 to vector<8x256xf32>
    %170 = arith.mulf %169, %167 : vector<8x256xf32>
    %171 = arith.addf %157, %170 : vector<8x256xf32>
    %c1_97 = arith.constant 1 : index
    %c11_98 = arith.constant 11 : index
    %172 = memref.load %arg1[%c1_97, %c11_98] : memref<3x48xf32, #tpu.memory_space<smem>>
    %173 = vector.broadcast %172 : f32 to vector<8x256xf32>
    %174 = arith.mulf %173, %167 : vector<8x256xf32>
    %175 = arith.addf %161, %174 : vector<8x256xf32>
    %c2_99 = arith.constant 2 : index
    %c11_100 = arith.constant 11 : index
    %176 = memref.load %arg1[%c2_99, %c11_100] : memref<3x48xf32, #tpu.memory_space<smem>>
    %177 = vector.broadcast %176 : f32 to vector<8x256xf32>
    %178 = arith.mulf %177, %167 : vector<8x256xf32>
    %179 = arith.addf %165, %178 : vector<8x256xf32>
    %c12 = arith.constant 12 : index
    %c0_101 = arith.constant 0 : index
    %c0_102 = arith.constant 0 : index
    %180 = vector.load %arg0[%c12, %c0_101, %c0_102] : memref<48x8x256xf32, #tpu.memory_space<vmem>>, vector<1x8x256xf32>
    %181 = vector.shape_cast %180 : vector<1x8x256xf32> to vector<8x256xf32>
    %c0_103 = arith.constant 0 : index
    %c12_104 = arith.constant 12 : index
    %182 = memref.load %arg1[%c0_103, %c12_104] : memref<3x48xf32, #tpu.memory_space<smem>>
    %183 = vector.broadcast %182 : f32 to vector<8x256xf32>
    %184 = arith.mulf %183, %181 : vector<8x256xf32>
    %185 = arith.addf %171, %184 : vector<8x256xf32>
    %c1_105 = arith.constant 1 : index
    %c12_106 = arith.constant 12 : index
    %186 = memref.load %arg1[%c1_105, %c12_106] : memref<3x48xf32, #tpu.memory_space<smem>>
    %187 = vector.broadcast %186 : f32 to vector<8x256xf32>
    %188 = arith.mulf %187, %181 : vector<8x256xf32>
    %189 = arith.addf %175, %188 : vector<8x256xf32>
    %c2_107 = arith.constant 2 : index
    %c12_108 = arith.constant 12 : index
    %190 = memref.load %arg1[%c2_107, %c12_108] : memref<3x48xf32, #tpu.memory_space<smem>>
    %191 = vector.broadcast %190 : f32 to vector<8x256xf32>
    %192 = arith.mulf %191, %181 : vector<8x256xf32>
    %193 = arith.addf %179, %192 : vector<8x256xf32>
    %c13 = arith.constant 13 : index
    %c0_109 = arith.constant 0 : index
    %c0_110 = arith.constant 0 : index
    %194 = vector.load %arg0[%c13, %c0_109, %c0_110] : memref<48x8x256xf32, #tpu.memory_space<vmem>>, vector<1x8x256xf32>
    %195 = vector.shape_cast %194 : vector<1x8x256xf32> to vector<8x256xf32>
    %c0_111 = arith.constant 0 : index
    %c13_112 = arith.constant 13 : index
    %196 = memref.load %arg1[%c0_111, %c13_112] : memref<3x48xf32, #tpu.memory_space<smem>>
    %197 = vector.broadcast %196 : f32 to vector<8x256xf32>
    %198 = arith.mulf %197, %195 : vector<8x256xf32>
    %199 = arith.addf %185, %198 : vector<8x256xf32>
    %c1_113 = arith.constant 1 : index
    %c13_114 = arith.constant 13 : index
    %200 = memref.load %arg1[%c1_113, %c13_114] : memref<3x48xf32, #tpu.memory_space<smem>>
    %201 = vector.broadcast %200 : f32 to vector<8x256xf32>
    %202 = arith.mulf %201, %195 : vector<8x256xf32>
    %203 = arith.addf %189, %202 : vector<8x256xf32>
    %c2_115 = arith.constant 2 : index
    %c13_116 = arith.constant 13 : index
    %204 = memref.load %arg1[%c2_115, %c13_116] : memref<3x48xf32, #tpu.memory_space<smem>>
    %205 = vector.broadcast %204 : f32 to vector<8x256xf32>
    %206 = arith.mulf %205, %195 : vector<8x256xf32>
    %207 = arith.addf %193, %206 : vector<8x256xf32>
    %c14 = arith.constant 14 : index
    %c0_117 = arith.constant 0 : index
    %c0_118 = arith.constant 0 : index
    %208 = vector.load %arg0[%c14, %c0_117, %c0_118] : memref<48x8x256xf32, #tpu.memory_space<vmem>>, vector<1x8x256xf32>
    %209 = vector.shape_cast %208 : vector<1x8x256xf32> to vector<8x256xf32>
    %c0_119 = arith.constant 0 : index
    %c14_120 = arith.constant 14 : index
    %210 = memref.load %arg1[%c0_119, %c14_120] : memref<3x48xf32, #tpu.memory_space<smem>>
    %211 = vector.broadcast %210 : f32 to vector<8x256xf32>
    %212 = arith.mulf %211, %209 : vector<8x256xf32>
    %213 = arith.addf %199, %212 : vector<8x256xf32>
    %c1_121 = arith.constant 1 : index
    %c14_122 = arith.constant 14 : index
    %214 = memref.load %arg1[%c1_121, %c14_122] : memref<3x48xf32, #tpu.memory_space<smem>>
    %215 = vector.broadcast %214 : f32 to vector<8x256xf32>
    %216 = arith.mulf %215, %209 : vector<8x256xf32>
    %217 = arith.addf %203, %216 : vector<8x256xf32>
    %c2_123 = arith.constant 2 : index
    %c14_124 = arith.constant 14 : index
    %218 = memref.load %arg1[%c2_123, %c14_124] : memref<3x48xf32, #tpu.memory_space<smem>>
    %219 = vector.broadcast %218 : f32 to vector<8x256xf32>
    %220 = arith.mulf %219, %209 : vector<8x256xf32>
    %221 = arith.addf %207, %220 : vector<8x256xf32>
    %c15 = arith.constant 15 : index
    %c0_125 = arith.constant 0 : index
    %c0_126 = arith.constant 0 : index
    %222 = vector.load %arg0[%c15, %c0_125, %c0_126] : memref<48x8x256xf32, #tpu.memory_space<vmem>>, vector<1x8x256xf32>
    %223 = vector.shape_cast %222 : vector<1x8x256xf32> to vector<8x256xf32>
    %c0_127 = arith.constant 0 : index
    %c15_128 = arith.constant 15 : index
    %224 = memref.load %arg1[%c0_127, %c15_128] : memref<3x48xf32, #tpu.memory_space<smem>>
    %225 = vector.broadcast %224 : f32 to vector<8x256xf32>
    %226 = arith.mulf %225, %223 : vector<8x256xf32>
    %227 = arith.addf %213, %226 : vector<8x256xf32>
    %c1_129 = arith.constant 1 : index
    %c15_130 = arith.constant 15 : index
    %228 = memref.load %arg1[%c1_129, %c15_130] : memref<3x48xf32, #tpu.memory_space<smem>>
    %229 = vector.broadcast %228 : f32 to vector<8x256xf32>
    %230 = arith.mulf %229, %223 : vector<8x256xf32>
    %231 = arith.addf %217, %230 : vector<8x256xf32>
    %c2_131 = arith.constant 2 : index
    %c15_132 = arith.constant 15 : index
    %232 = memref.load %arg1[%c2_131, %c15_132] : memref<3x48xf32, #tpu.memory_space<smem>>
    %233 = vector.broadcast %232 : f32 to vector<8x256xf32>
    %234 = arith.mulf %233, %223 : vector<8x256xf32>
    %235 = arith.addf %221, %234 : vector<8x256xf32>
    %c16 = arith.constant 16 : index
    %c0_133 = arith.constant 0 : index
    %c0_134 = arith.constant 0 : index
    %236 = vector.load %arg0[%c16, %c0_133, %c0_134] : memref<48x8x256xf32, #tpu.memory_space<vmem>>, vector<1x8x256xf32>
    %237 = vector.shape_cast %236 : vector<1x8x256xf32> to vector<8x256xf32>
    %c0_135 = arith.constant 0 : index
    %c16_136 = arith.constant 16 : index
    %238 = memref.load %arg1[%c0_135, %c16_136] : memref<3x48xf32, #tpu.memory_space<smem>>
    %239 = vector.broadcast %238 : f32 to vector<8x256xf32>
    %240 = arith.mulf %239, %237 : vector<8x256xf32>
    %241 = arith.addf %227, %240 : vector<8x256xf32>
    %c1_137 = arith.constant 1 : index
    %c16_138 = arith.constant 16 : index
    %242 = memref.load %arg1[%c1_137, %c16_138] : memref<3x48xf32, #tpu.memory_space<smem>>
    %243 = vector.broadcast %242 : f32 to vector<8x256xf32>
    %244 = arith.mulf %243, %237 : vector<8x256xf32>
    %245 = arith.addf %231, %244 : vector<8x256xf32>
    %c2_139 = arith.constant 2 : index
    %c16_140 = arith.constant 16 : index
    %246 = memref.load %arg1[%c2_139, %c16_140] : memref<3x48xf32, #tpu.memory_space<smem>>
    %247 = vector.broadcast %246 : f32 to vector<8x256xf32>
    %248 = arith.mulf %247, %237 : vector<8x256xf32>
    %249 = arith.addf %235, %248 : vector<8x256xf32>
    %c17 = arith.constant 17 : index
    %c0_141 = arith.constant 0 : index
    %c0_142 = arith.constant 0 : index
    %250 = vector.load %arg0[%c17, %c0_141, %c0_142] : memref<48x8x256xf32, #tpu.memory_space<vmem>>, vector<1x8x256xf32>
    %251 = vector.shape_cast %250 : vector<1x8x256xf32> to vector<8x256xf32>
    %c0_143 = arith.constant 0 : index
    %c17_144 = arith.constant 17 : index
    %252 = memref.load %arg1[%c0_143, %c17_144] : memref<3x48xf32, #tpu.memory_space<smem>>
    %253 = vector.broadcast %252 : f32 to vector<8x256xf32>
    %254 = arith.mulf %253, %251 : vector<8x256xf32>
    %255 = arith.addf %241, %254 : vector<8x256xf32>
    %c1_145 = arith.constant 1 : index
    %c17_146 = arith.constant 17 : index
    %256 = memref.load %arg1[%c1_145, %c17_146] : memref<3x48xf32, #tpu.memory_space<smem>>
    %257 = vector.broadcast %256 : f32 to vector<8x256xf32>
    %258 = arith.mulf %257, %251 : vector<8x256xf32>
    %259 = arith.addf %245, %258 : vector<8x256xf32>
    %c2_147 = arith.constant 2 : index
    %c17_148 = arith.constant 17 : index
    %260 = memref.load %arg1[%c2_147, %c17_148] : memref<3x48xf32, #tpu.memory_space<smem>>
    %261 = vector.broadcast %260 : f32 to vector<8x256xf32>
    %262 = arith.mulf %261, %251 : vector<8x256xf32>
    %263 = arith.addf %249, %262 : vector<8x256xf32>
    %c18 = arith.constant 18 : index
    %c0_149 = arith.constant 0 : index
    %c0_150 = arith.constant 0 : index
    %264 = vector.load %arg0[%c18, %c0_149, %c0_150] : memref<48x8x256xf32, #tpu.memory_space<vmem>>, vector<1x8x256xf32>
    %265 = vector.shape_cast %264 : vector<1x8x256xf32> to vector<8x256xf32>
    %c0_151 = arith.constant 0 : index
    %c18_152 = arith.constant 18 : index
    %266 = memref.load %arg1[%c0_151, %c18_152] : memref<3x48xf32, #tpu.memory_space<smem>>
    %267 = vector.broadcast %266 : f32 to vector<8x256xf32>
    %268 = arith.mulf %267, %265 : vector<8x256xf32>
    %269 = arith.addf %255, %268 : vector<8x256xf32>
    %c1_153 = arith.constant 1 : index
    %c18_154 = arith.constant 18 : index
    %270 = memref.load %arg1[%c1_153, %c18_154] : memref<3x48xf32, #tpu.memory_space<smem>>
    %271 = vector.broadcast %270 : f32 to vector<8x256xf32>
    %272 = arith.mulf %271, %265 : vector<8x256xf32>
    %273 = arith.addf %259, %272 : vector<8x256xf32>
    %c2_155 = arith.constant 2 : index
    %c18_156 = arith.constant 18 : index
    %274 = memref.load %arg1[%c2_155, %c18_156] : memref<3x48xf32, #tpu.memory_space<smem>>
    %275 = vector.broadcast %274 : f32 to vector<8x256xf32>
    %276 = arith.mulf %275, %265 : vector<8x256xf32>
    %277 = arith.addf %263, %276 : vector<8x256xf32>
    %c19 = arith.constant 19 : index
    %c0_157 = arith.constant 0 : index
    %c0_158 = arith.constant 0 : index
    %278 = vector.load %arg0[%c19, %c0_157, %c0_158] : memref<48x8x256xf32, #tpu.memory_space<vmem>>, vector<1x8x256xf32>
    %279 = vector.shape_cast %278 : vector<1x8x256xf32> to vector<8x256xf32>
    %c0_159 = arith.constant 0 : index
    %c19_160 = arith.constant 19 : index
    %280 = memref.load %arg1[%c0_159, %c19_160] : memref<3x48xf32, #tpu.memory_space<smem>>
    %281 = vector.broadcast %280 : f32 to vector<8x256xf32>
    %282 = arith.mulf %281, %279 : vector<8x256xf32>
    %283 = arith.addf %269, %282 : vector<8x256xf32>
    %c1_161 = arith.constant 1 : index
    %c19_162 = arith.constant 19 : index
    %284 = memref.load %arg1[%c1_161, %c19_162] : memref<3x48xf32, #tpu.memory_space<smem>>
    %285 = vector.broadcast %284 : f32 to vector<8x256xf32>
    %286 = arith.mulf %285, %279 : vector<8x256xf32>
    %287 = arith.addf %273, %286 : vector<8x256xf32>
    %c2_163 = arith.constant 2 : index
    %c19_164 = arith.constant 19 : index
    %288 = memref.load %arg1[%c2_163, %c19_164] : memref<3x48xf32, #tpu.memory_space<smem>>
    %289 = vector.broadcast %288 : f32 to vector<8x256xf32>
    %290 = arith.mulf %289, %279 : vector<8x256xf32>
    %291 = arith.addf %277, %290 : vector<8x256xf32>
    %c20 = arith.constant 20 : index
    %c0_165 = arith.constant 0 : index
    %c0_166 = arith.constant 0 : index
    %292 = vector.load %arg0[%c20, %c0_165, %c0_166] : memref<48x8x256xf32, #tpu.memory_space<vmem>>, vector<1x8x256xf32>
    %293 = vector.shape_cast %292 : vector<1x8x256xf32> to vector<8x256xf32>
    %c0_167 = arith.constant 0 : index
    %c20_168 = arith.constant 20 : index
    %294 = memref.load %arg1[%c0_167, %c20_168] : memref<3x48xf32, #tpu.memory_space<smem>>
    %295 = vector.broadcast %294 : f32 to vector<8x256xf32>
    %296 = arith.mulf %295, %293 : vector<8x256xf32>
    %297 = arith.addf %283, %296 : vector<8x256xf32>
    %c1_169 = arith.constant 1 : index
    %c20_170 = arith.constant 20 : index
    %298 = memref.load %arg1[%c1_169, %c20_170] : memref<3x48xf32, #tpu.memory_space<smem>>
    %299 = vector.broadcast %298 : f32 to vector<8x256xf32>
    %300 = arith.mulf %299, %293 : vector<8x256xf32>
    %301 = arith.addf %287, %300 : vector<8x256xf32>
    %c2_171 = arith.constant 2 : index
    %c20_172 = arith.constant 20 : index
    %302 = memref.load %arg1[%c2_171, %c20_172] : memref<3x48xf32, #tpu.memory_space<smem>>
    %303 = vector.broadcast %302 : f32 to vector<8x256xf32>
    %304 = arith.mulf %303, %293 : vector<8x256xf32>
    %305 = arith.addf %291, %304 : vector<8x256xf32>
    %c21 = arith.constant 21 : index
    %c0_173 = arith.constant 0 : index
    %c0_174 = arith.constant 0 : index
    %306 = vector.load %arg0[%c21, %c0_173, %c0_174] : memref<48x8x256xf32, #tpu.memory_space<vmem>>, vector<1x8x256xf32>
    %307 = vector.shape_cast %306 : vector<1x8x256xf32> to vector<8x256xf32>
    %c0_175 = arith.constant 0 : index
    %c21_176 = arith.constant 21 : index
    %308 = memref.load %arg1[%c0_175, %c21_176] : memref<3x48xf32, #tpu.memory_space<smem>>
    %309 = vector.broadcast %308 : f32 to vector<8x256xf32>
    %310 = arith.mulf %309, %307 : vector<8x256xf32>
    %311 = arith.addf %297, %310 : vector<8x256xf32>
    %c1_177 = arith.constant 1 : index
    %c21_178 = arith.constant 21 : index
    %312 = memref.load %arg1[%c1_177, %c21_178] : memref<3x48xf32, #tpu.memory_space<smem>>
    %313 = vector.broadcast %312 : f32 to vector<8x256xf32>
    %314 = arith.mulf %313, %307 : vector<8x256xf32>
    %315 = arith.addf %301, %314 : vector<8x256xf32>
    %c2_179 = arith.constant 2 : index
    %c21_180 = arith.constant 21 : index
    %316 = memref.load %arg1[%c2_179, %c21_180] : memref<3x48xf32, #tpu.memory_space<smem>>
    %317 = vector.broadcast %316 : f32 to vector<8x256xf32>
    %318 = arith.mulf %317, %307 : vector<8x256xf32>
    %319 = arith.addf %305, %318 : vector<8x256xf32>
    %c22 = arith.constant 22 : index
    %c0_181 = arith.constant 0 : index
    %c0_182 = arith.constant 0 : index
    %320 = vector.load %arg0[%c22, %c0_181, %c0_182] : memref<48x8x256xf32, #tpu.memory_space<vmem>>, vector<1x8x256xf32>
    %321 = vector.shape_cast %320 : vector<1x8x256xf32> to vector<8x256xf32>
    %c0_183 = arith.constant 0 : index
    %c22_184 = arith.constant 22 : index
    %322 = memref.load %arg1[%c0_183, %c22_184] : memref<3x48xf32, #tpu.memory_space<smem>>
    %323 = vector.broadcast %322 : f32 to vector<8x256xf32>
    %324 = arith.mulf %323, %321 : vector<8x256xf32>
    %325 = arith.addf %311, %324 : vector<8x256xf32>
    %c1_185 = arith.constant 1 : index
    %c22_186 = arith.constant 22 : index
    %326 = memref.load %arg1[%c1_185, %c22_186] : memref<3x48xf32, #tpu.memory_space<smem>>
    %327 = vector.broadcast %326 : f32 to vector<8x256xf32>
    %328 = arith.mulf %327, %321 : vector<8x256xf32>
    %329 = arith.addf %315, %328 : vector<8x256xf32>
    %c2_187 = arith.constant 2 : index
    %c22_188 = arith.constant 22 : index
    %330 = memref.load %arg1[%c2_187, %c22_188] : memref<3x48xf32, #tpu.memory_space<smem>>
    %331 = vector.broadcast %330 : f32 to vector<8x256xf32>
    %332 = arith.mulf %331, %321 : vector<8x256xf32>
    %333 = arith.addf %319, %332 : vector<8x256xf32>
    %c23 = arith.constant 23 : index
    %c0_189 = arith.constant 0 : index
    %c0_190 = arith.constant 0 : index
    %334 = vector.load %arg0[%c23, %c0_189, %c0_190] : memref<48x8x256xf32, #tpu.memory_space<vmem>>, vector<1x8x256xf32>
    %335 = vector.shape_cast %334 : vector<1x8x256xf32> to vector<8x256xf32>
    %c0_191 = arith.constant 0 : index
    %c23_192 = arith.constant 23 : index
    %336 = memref.load %arg1[%c0_191, %c23_192] : memref<3x48xf32, #tpu.memory_space<smem>>
    %337 = vector.broadcast %336 : f32 to vector<8x256xf32>
    %338 = arith.mulf %337, %335 : vector<8x256xf32>
    %339 = arith.addf %325, %338 : vector<8x256xf32>
    %c1_193 = arith.constant 1 : index
    %c23_194 = arith.constant 23 : index
    %340 = memref.load %arg1[%c1_193, %c23_194] : memref<3x48xf32, #tpu.memory_space<smem>>
    %341 = vector.broadcast %340 : f32 to vector<8x256xf32>
    %342 = arith.mulf %341, %335 : vector<8x256xf32>
    %343 = arith.addf %329, %342 : vector<8x256xf32>
    %c2_195 = arith.constant 2 : index
    %c23_196 = arith.constant 23 : index
    %344 = memref.load %arg1[%c2_195, %c23_196] : memref<3x48xf32, #tpu.memory_space<smem>>
    %345 = vector.broadcast %344 : f32 to vector<8x256xf32>
    %346 = arith.mulf %345, %335 : vector<8x256xf32>
    %347 = arith.addf %333, %346 : vector<8x256xf32>
    %c24 = arith.constant 24 : index
    %c0_197 = arith.constant 0 : index
    %c0_198 = arith.constant 0 : index
    %348 = vector.load %arg0[%c24, %c0_197, %c0_198] : memref<48x8x256xf32, #tpu.memory_space<vmem>>, vector<1x8x256xf32>
    %349 = vector.shape_cast %348 : vector<1x8x256xf32> to vector<8x256xf32>
    %c0_199 = arith.constant 0 : index
    %c24_200 = arith.constant 24 : index
    %350 = memref.load %arg1[%c0_199, %c24_200] : memref<3x48xf32, #tpu.memory_space<smem>>
    %351 = vector.broadcast %350 : f32 to vector<8x256xf32>
    %352 = arith.mulf %351, %349 : vector<8x256xf32>
    %353 = arith.addf %339, %352 : vector<8x256xf32>
    %c1_201 = arith.constant 1 : index
    %c24_202 = arith.constant 24 : index
    %354 = memref.load %arg1[%c1_201, %c24_202] : memref<3x48xf32, #tpu.memory_space<smem>>
    %355 = vector.broadcast %354 : f32 to vector<8x256xf32>
    %356 = arith.mulf %355, %349 : vector<8x256xf32>
    %357 = arith.addf %343, %356 : vector<8x256xf32>
    %c2_203 = arith.constant 2 : index
    %c24_204 = arith.constant 24 : index
    %358 = memref.load %arg1[%c2_203, %c24_204] : memref<3x48xf32, #tpu.memory_space<smem>>
    %359 = vector.broadcast %358 : f32 to vector<8x256xf32>
    %360 = arith.mulf %359, %349 : vector<8x256xf32>
    %361 = arith.addf %347, %360 : vector<8x256xf32>
    %c25 = arith.constant 25 : index
    %c0_205 = arith.constant 0 : index
    %c0_206 = arith.constant 0 : index
    %362 = vector.load %arg0[%c25, %c0_205, %c0_206] : memref<48x8x256xf32, #tpu.memory_space<vmem>>, vector<1x8x256xf32>
    %363 = vector.shape_cast %362 : vector<1x8x256xf32> to vector<8x256xf32>
    %c0_207 = arith.constant 0 : index
    %c25_208 = arith.constant 25 : index
    %364 = memref.load %arg1[%c0_207, %c25_208] : memref<3x48xf32, #tpu.memory_space<smem>>
    %365 = vector.broadcast %364 : f32 to vector<8x256xf32>
    %366 = arith.mulf %365, %363 : vector<8x256xf32>
    %367 = arith.addf %353, %366 : vector<8x256xf32>
    %c1_209 = arith.constant 1 : index
    %c25_210 = arith.constant 25 : index
    %368 = memref.load %arg1[%c1_209, %c25_210] : memref<3x48xf32, #tpu.memory_space<smem>>
    %369 = vector.broadcast %368 : f32 to vector<8x256xf32>
    %370 = arith.mulf %369, %363 : vector<8x256xf32>
    %371 = arith.addf %357, %370 : vector<8x256xf32>
    %c2_211 = arith.constant 2 : index
    %c25_212 = arith.constant 25 : index
    %372 = memref.load %arg1[%c2_211, %c25_212] : memref<3x48xf32, #tpu.memory_space<smem>>
    %373 = vector.broadcast %372 : f32 to vector<8x256xf32>
    %374 = arith.mulf %373, %363 : vector<8x256xf32>
    %375 = arith.addf %361, %374 : vector<8x256xf32>
    %c26 = arith.constant 26 : index
    %c0_213 = arith.constant 0 : index
    %c0_214 = arith.constant 0 : index
    %376 = vector.load %arg0[%c26, %c0_213, %c0_214] : memref<48x8x256xf32, #tpu.memory_space<vmem>>, vector<1x8x256xf32>
    %377 = vector.shape_cast %376 : vector<1x8x256xf32> to vector<8x256xf32>
    %c0_215 = arith.constant 0 : index
    %c26_216 = arith.constant 26 : index
    %378 = memref.load %arg1[%c0_215, %c26_216] : memref<3x48xf32, #tpu.memory_space<smem>>
    %379 = vector.broadcast %378 : f32 to vector<8x256xf32>
    %380 = arith.mulf %379, %377 : vector<8x256xf32>
    %381 = arith.addf %367, %380 : vector<8x256xf32>
    %c1_217 = arith.constant 1 : index
    %c26_218 = arith.constant 26 : index
    %382 = memref.load %arg1[%c1_217, %c26_218] : memref<3x48xf32, #tpu.memory_space<smem>>
    %383 = vector.broadcast %382 : f32 to vector<8x256xf32>
    %384 = arith.mulf %383, %377 : vector<8x256xf32>
    %385 = arith.addf %371, %384 : vector<8x256xf32>
    %c2_219 = arith.constant 2 : index
    %c26_220 = arith.constant 26 : index
    %386 = memref.load %arg1[%c2_219, %c26_220] : memref<3x48xf32, #tpu.memory_space<smem>>
    %387 = vector.broadcast %386 : f32 to vector<8x256xf32>
    %388 = arith.mulf %387, %377 : vector<8x256xf32>
    %389 = arith.addf %375, %388 : vector<8x256xf32>
    %c27 = arith.constant 27 : index
    %c0_221 = arith.constant 0 : index
    %c0_222 = arith.constant 0 : index
    %390 = vector.load %arg0[%c27, %c0_221, %c0_222] : memref<48x8x256xf32, #tpu.memory_space<vmem>>, vector<1x8x256xf32>
    %391 = vector.shape_cast %390 : vector<1x8x256xf32> to vector<8x256xf32>
    %c0_223 = arith.constant 0 : index
    %c27_224 = arith.constant 27 : index
    %392 = memref.load %arg1[%c0_223, %c27_224] : memref<3x48xf32, #tpu.memory_space<smem>>
    %393 = vector.broadcast %392 : f32 to vector<8x256xf32>
    %394 = arith.mulf %393, %391 : vector<8x256xf32>
    %395 = arith.addf %381, %394 : vector<8x256xf32>
    %c1_225 = arith.constant 1 : index
    %c27_226 = arith.constant 27 : index
    %396 = memref.load %arg1[%c1_225, %c27_226] : memref<3x48xf32, #tpu.memory_space<smem>>
    %397 = vector.broadcast %396 : f32 to vector<8x256xf32>
    %398 = arith.mulf %397, %391 : vector<8x256xf32>
    %399 = arith.addf %385, %398 : vector<8x256xf32>
    %c2_227 = arith.constant 2 : index
    %c27_228 = arith.constant 27 : index
    %400 = memref.load %arg1[%c2_227, %c27_228] : memref<3x48xf32, #tpu.memory_space<smem>>
    %401 = vector.broadcast %400 : f32 to vector<8x256xf32>
    %402 = arith.mulf %401, %391 : vector<8x256xf32>
    %403 = arith.addf %389, %402 : vector<8x256xf32>
    %c28 = arith.constant 28 : index
    %c0_229 = arith.constant 0 : index
    %c0_230 = arith.constant 0 : index
    %404 = vector.load %arg0[%c28, %c0_229, %c0_230] : memref<48x8x256xf32, #tpu.memory_space<vmem>>, vector<1x8x256xf32>
    %405 = vector.shape_cast %404 : vector<1x8x256xf32> to vector<8x256xf32>
    %c0_231 = arith.constant 0 : index
    %c28_232 = arith.constant 28 : index
    %406 = memref.load %arg1[%c0_231, %c28_232] : memref<3x48xf32, #tpu.memory_space<smem>>
    %407 = vector.broadcast %406 : f32 to vector<8x256xf32>
    %408 = arith.mulf %407, %405 : vector<8x256xf32>
    %409 = arith.addf %395, %408 : vector<8x256xf32>
    %c1_233 = arith.constant 1 : index
    %c28_234 = arith.constant 28 : index
    %410 = memref.load %arg1[%c1_233, %c28_234] : memref<3x48xf32, #tpu.memory_space<smem>>
    %411 = vector.broadcast %410 : f32 to vector<8x256xf32>
    %412 = arith.mulf %411, %405 : vector<8x256xf32>
    %413 = arith.addf %399, %412 : vector<8x256xf32>
    %c2_235 = arith.constant 2 : index
    %c28_236 = arith.constant 28 : index
    %414 = memref.load %arg1[%c2_235, %c28_236] : memref<3x48xf32, #tpu.memory_space<smem>>
    %415 = vector.broadcast %414 : f32 to vector<8x256xf32>
    %416 = arith.mulf %415, %405 : vector<8x256xf32>
    %417 = arith.addf %403, %416 : vector<8x256xf32>
    %c29 = arith.constant 29 : index
    %c0_237 = arith.constant 0 : index
    %c0_238 = arith.constant 0 : index
    %418 = vector.load %arg0[%c29, %c0_237, %c0_238] : memref<48x8x256xf32, #tpu.memory_space<vmem>>, vector<1x8x256xf32>
    %419 = vector.shape_cast %418 : vector<1x8x256xf32> to vector<8x256xf32>
    %c0_239 = arith.constant 0 : index
    %c29_240 = arith.constant 29 : index
    %420 = memref.load %arg1[%c0_239, %c29_240] : memref<3x48xf32, #tpu.memory_space<smem>>
    %421 = vector.broadcast %420 : f32 to vector<8x256xf32>
    %422 = arith.mulf %421, %419 : vector<8x256xf32>
    %423 = arith.addf %409, %422 : vector<8x256xf32>
    %c1_241 = arith.constant 1 : index
    %c29_242 = arith.constant 29 : index
    %424 = memref.load %arg1[%c1_241, %c29_242] : memref<3x48xf32, #tpu.memory_space<smem>>
    %425 = vector.broadcast %424 : f32 to vector<8x256xf32>
    %426 = arith.mulf %425, %419 : vector<8x256xf32>
    %427 = arith.addf %413, %426 : vector<8x256xf32>
    %c2_243 = arith.constant 2 : index
    %c29_244 = arith.constant 29 : index
    %428 = memref.load %arg1[%c2_243, %c29_244] : memref<3x48xf32, #tpu.memory_space<smem>>
    %429 = vector.broadcast %428 : f32 to vector<8x256xf32>
    %430 = arith.mulf %429, %419 : vector<8x256xf32>
    %431 = arith.addf %417, %430 : vector<8x256xf32>
    %c30 = arith.constant 30 : index
    %c0_245 = arith.constant 0 : index
    %c0_246 = arith.constant 0 : index
    %432 = vector.load %arg0[%c30, %c0_245, %c0_246] : memref<48x8x256xf32, #tpu.memory_space<vmem>>, vector<1x8x256xf32>
    %433 = vector.shape_cast %432 : vector<1x8x256xf32> to vector<8x256xf32>
    %c0_247 = arith.constant 0 : index
    %c30_248 = arith.constant 30 : index
    %434 = memref.load %arg1[%c0_247, %c30_248] : memref<3x48xf32, #tpu.memory_space<smem>>
    %435 = vector.broadcast %434 : f32 to vector<8x256xf32>
    %436 = arith.mulf %435, %433 : vector<8x256xf32>
    %437 = arith.addf %423, %436 : vector<8x256xf32>
    %c1_249 = arith.constant 1 : index
    %c30_250 = arith.constant 30 : index
    %438 = memref.load %arg1[%c1_249, %c30_250] : memref<3x48xf32, #tpu.memory_space<smem>>
    %439 = vector.broadcast %438 : f32 to vector<8x256xf32>
    %440 = arith.mulf %439, %433 : vector<8x256xf32>
    %441 = arith.addf %427, %440 : vector<8x256xf32>
    %c2_251 = arith.constant 2 : index
    %c30_252 = arith.constant 30 : index
    %442 = memref.load %arg1[%c2_251, %c30_252] : memref<3x48xf32, #tpu.memory_space<smem>>
    %443 = vector.broadcast %442 : f32 to vector<8x256xf32>
    %444 = arith.mulf %443, %433 : vector<8x256xf32>
    %445 = arith.addf %431, %444 : vector<8x256xf32>
    %c31 = arith.constant 31 : index
    %c0_253 = arith.constant 0 : index
    %c0_254 = arith.constant 0 : index
    %446 = vector.load %arg0[%c31, %c0_253, %c0_254] : memref<48x8x256xf32, #tpu.memory_space<vmem>>, vector<1x8x256xf32>
    %447 = vector.shape_cast %446 : vector<1x8x256xf32> to vector<8x256xf32>
    %c0_255 = arith.constant 0 : index
    %c31_256 = arith.constant 31 : index
    %448 = memref.load %arg1[%c0_255, %c31_256] : memref<3x48xf32, #tpu.memory_space<smem>>
    %449 = vector.broadcast %448 : f32 to vector<8x256xf32>
    %450 = arith.mulf %449, %447 : vector<8x256xf32>
    %451 = arith.addf %437, %450 : vector<8x256xf32>
    %c1_257 = arith.constant 1 : index
    %c31_258 = arith.constant 31 : index
    %452 = memref.load %arg1[%c1_257, %c31_258] : memref<3x48xf32, #tpu.memory_space<smem>>
    %453 = vector.broadcast %452 : f32 to vector<8x256xf32>
    %454 = arith.mulf %453, %447 : vector<8x256xf32>
    %455 = arith.addf %441, %454 : vector<8x256xf32>
    %c2_259 = arith.constant 2 : index
    %c31_260 = arith.constant 31 : index
    %456 = memref.load %arg1[%c2_259, %c31_260] : memref<3x48xf32, #tpu.memory_space<smem>>
    %457 = vector.broadcast %456 : f32 to vector<8x256xf32>
    %458 = arith.mulf %457, %447 : vector<8x256xf32>
    %459 = arith.addf %445, %458 : vector<8x256xf32>
    %c32 = arith.constant 32 : index
    %c0_261 = arith.constant 0 : index
    %c0_262 = arith.constant 0 : index
    %460 = vector.load %arg0[%c32, %c0_261, %c0_262] : memref<48x8x256xf32, #tpu.memory_space<vmem>>, vector<1x8x256xf32>
    %461 = vector.shape_cast %460 : vector<1x8x256xf32> to vector<8x256xf32>
    %c0_263 = arith.constant 0 : index
    %c32_264 = arith.constant 32 : index
    %462 = memref.load %arg1[%c0_263, %c32_264] : memref<3x48xf32, #tpu.memory_space<smem>>
    %463 = vector.broadcast %462 : f32 to vector<8x256xf32>
    %464 = arith.mulf %463, %461 : vector<8x256xf32>
    %465 = arith.addf %451, %464 : vector<8x256xf32>
    %c1_265 = arith.constant 1 : index
    %c32_266 = arith.constant 32 : index
    %466 = memref.load %arg1[%c1_265, %c32_266] : memref<3x48xf32, #tpu.memory_space<smem>>
    %467 = vector.broadcast %466 : f32 to vector<8x256xf32>
    %468 = arith.mulf %467, %461 : vector<8x256xf32>
    %469 = arith.addf %455, %468 : vector<8x256xf32>
    %c2_267 = arith.constant 2 : index
    %c32_268 = arith.constant 32 : index
    %470 = memref.load %arg1[%c2_267, %c32_268] : memref<3x48xf32, #tpu.memory_space<smem>>
    %471 = vector.broadcast %470 : f32 to vector<8x256xf32>
    %472 = arith.mulf %471, %461 : vector<8x256xf32>
    %473 = arith.addf %459, %472 : vector<8x256xf32>
    %c33 = arith.constant 33 : index
    %c0_269 = arith.constant 0 : index
    %c0_270 = arith.constant 0 : index
    %474 = vector.load %arg0[%c33, %c0_269, %c0_270] : memref<48x8x256xf32, #tpu.memory_space<vmem>>, vector<1x8x256xf32>
    %475 = vector.shape_cast %474 : vector<1x8x256xf32> to vector<8x256xf32>
    %c0_271 = arith.constant 0 : index
    %c33_272 = arith.constant 33 : index
    %476 = memref.load %arg1[%c0_271, %c33_272] : memref<3x48xf32, #tpu.memory_space<smem>>
    %477 = vector.broadcast %476 : f32 to vector<8x256xf32>
    %478 = arith.mulf %477, %475 : vector<8x256xf32>
    %479 = arith.addf %465, %478 : vector<8x256xf32>
    %c1_273 = arith.constant 1 : index
    %c33_274 = arith.constant 33 : index
    %480 = memref.load %arg1[%c1_273, %c33_274] : memref<3x48xf32, #tpu.memory_space<smem>>
    %481 = vector.broadcast %480 : f32 to vector<8x256xf32>
    %482 = arith.mulf %481, %475 : vector<8x256xf32>
    %483 = arith.addf %469, %482 : vector<8x256xf32>
    %c2_275 = arith.constant 2 : index
    %c33_276 = arith.constant 33 : index
    %484 = memref.load %arg1[%c2_275, %c33_276] : memref<3x48xf32, #tpu.memory_space<smem>>
    %485 = vector.broadcast %484 : f32 to vector<8x256xf32>
    %486 = arith.mulf %485, %475 : vector<8x256xf32>
    %487 = arith.addf %473, %486 : vector<8x256xf32>
    %c34 = arith.constant 34 : index
    %c0_277 = arith.constant 0 : index
    %c0_278 = arith.constant 0 : index
    %488 = vector.load %arg0[%c34, %c0_277, %c0_278] : memref<48x8x256xf32, #tpu.memory_space<vmem>>, vector<1x8x256xf32>
    %489 = vector.shape_cast %488 : vector<1x8x256xf32> to vector<8x256xf32>
    %c0_279 = arith.constant 0 : index
    %c34_280 = arith.constant 34 : index
    %490 = memref.load %arg1[%c0_279, %c34_280] : memref<3x48xf32, #tpu.memory_space<smem>>
    %491 = vector.broadcast %490 : f32 to vector<8x256xf32>
    %492 = arith.mulf %491, %489 : vector<8x256xf32>
    %493 = arith.addf %479, %492 : vector<8x256xf32>
    %c1_281 = arith.constant 1 : index
    %c34_282 = arith.constant 34 : index
    %494 = memref.load %arg1[%c1_281, %c34_282] : memref<3x48xf32, #tpu.memory_space<smem>>
    %495 = vector.broadcast %494 : f32 to vector<8x256xf32>
    %496 = arith.mulf %495, %489 : vector<8x256xf32>
    %497 = arith.addf %483, %496 : vector<8x256xf32>
    %c2_283 = arith.constant 2 : index
    %c34_284 = arith.constant 34 : index
    %498 = memref.load %arg1[%c2_283, %c34_284] : memref<3x48xf32, #tpu.memory_space<smem>>
    %499 = vector.broadcast %498 : f32 to vector<8x256xf32>
    %500 = arith.mulf %499, %489 : vector<8x256xf32>
    %501 = arith.addf %487, %500 : vector<8x256xf32>
    %c35 = arith.constant 35 : index
    %c0_285 = arith.constant 0 : index
    %c0_286 = arith.constant 0 : index
    %502 = vector.load %arg0[%c35, %c0_285, %c0_286] : memref<48x8x256xf32, #tpu.memory_space<vmem>>, vector<1x8x256xf32>
    %503 = vector.shape_cast %502 : vector<1x8x256xf32> to vector<8x256xf32>
    %c0_287 = arith.constant 0 : index
    %c35_288 = arith.constant 35 : index
    %504 = memref.load %arg1[%c0_287, %c35_288] : memref<3x48xf32, #tpu.memory_space<smem>>
    %505 = vector.broadcast %504 : f32 to vector<8x256xf32>
    %506 = arith.mulf %505, %503 : vector<8x256xf32>
    %507 = arith.addf %493, %506 : vector<8x256xf32>
    %c1_289 = arith.constant 1 : index
    %c35_290 = arith.constant 35 : index
    %508 = memref.load %arg1[%c1_289, %c35_290] : memref<3x48xf32, #tpu.memory_space<smem>>
    %509 = vector.broadcast %508 : f32 to vector<8x256xf32>
    %510 = arith.mulf %509, %503 : vector<8x256xf32>
    %511 = arith.addf %497, %510 : vector<8x256xf32>
    %c2_291 = arith.constant 2 : index
    %c35_292 = arith.constant 35 : index
    %512 = memref.load %arg1[%c2_291, %c35_292] : memref<3x48xf32, #tpu.memory_space<smem>>
    %513 = vector.broadcast %512 : f32 to vector<8x256xf32>
    %514 = arith.mulf %513, %503 : vector<8x256xf32>
    %515 = arith.addf %501, %514 : vector<8x256xf32>
    %c36 = arith.constant 36 : index
    %c0_293 = arith.constant 0 : index
    %c0_294 = arith.constant 0 : index
    %516 = vector.load %arg0[%c36, %c0_293, %c0_294] : memref<48x8x256xf32, #tpu.memory_space<vmem>>, vector<1x8x256xf32>
    %517 = vector.shape_cast %516 : vector<1x8x256xf32> to vector<8x256xf32>
    %c0_295 = arith.constant 0 : index
    %c36_296 = arith.constant 36 : index
    %518 = memref.load %arg1[%c0_295, %c36_296] : memref<3x48xf32, #tpu.memory_space<smem>>
    %519 = vector.broadcast %518 : f32 to vector<8x256xf32>
    %520 = arith.mulf %519, %517 : vector<8x256xf32>
    %521 = arith.addf %507, %520 : vector<8x256xf32>
    %c1_297 = arith.constant 1 : index
    %c36_298 = arith.constant 36 : index
    %522 = memref.load %arg1[%c1_297, %c36_298] : memref<3x48xf32, #tpu.memory_space<smem>>
    %523 = vector.broadcast %522 : f32 to vector<8x256xf32>
    %524 = arith.mulf %523, %517 : vector<8x256xf32>
    %525 = arith.addf %511, %524 : vector<8x256xf32>
    %c2_299 = arith.constant 2 : index
    %c36_300 = arith.constant 36 : index
    %526 = memref.load %arg1[%c2_299, %c36_300] : memref<3x48xf32, #tpu.memory_space<smem>>
    %527 = vector.broadcast %526 : f32 to vector<8x256xf32>
    %528 = arith.mulf %527, %517 : vector<8x256xf32>
    %529 = arith.addf %515, %528 : vector<8x256xf32>
    %c37 = arith.constant 37 : index
    %c0_301 = arith.constant 0 : index
    %c0_302 = arith.constant 0 : index
    %530 = vector.load %arg0[%c37, %c0_301, %c0_302] : memref<48x8x256xf32, #tpu.memory_space<vmem>>, vector<1x8x256xf32>
    %531 = vector.shape_cast %530 : vector<1x8x256xf32> to vector<8x256xf32>
    %c0_303 = arith.constant 0 : index
    %c37_304 = arith.constant 37 : index
    %532 = memref.load %arg1[%c0_303, %c37_304] : memref<3x48xf32, #tpu.memory_space<smem>>
    %533 = vector.broadcast %532 : f32 to vector<8x256xf32>
    %534 = arith.mulf %533, %531 : vector<8x256xf32>
    %535 = arith.addf %521, %534 : vector<8x256xf32>
    %c1_305 = arith.constant 1 : index
    %c37_306 = arith.constant 37 : index
    %536 = memref.load %arg1[%c1_305, %c37_306] : memref<3x48xf32, #tpu.memory_space<smem>>
    %537 = vector.broadcast %536 : f32 to vector<8x256xf32>
    %538 = arith.mulf %537, %531 : vector<8x256xf32>
    %539 = arith.addf %525, %538 : vector<8x256xf32>
    %c2_307 = arith.constant 2 : index
    %c37_308 = arith.constant 37 : index
    %540 = memref.load %arg1[%c2_307, %c37_308] : memref<3x48xf32, #tpu.memory_space<smem>>
    %541 = vector.broadcast %540 : f32 to vector<8x256xf32>
    %542 = arith.mulf %541, %531 : vector<8x256xf32>
    %543 = arith.addf %529, %542 : vector<8x256xf32>
    %c38 = arith.constant 38 : index
    %c0_309 = arith.constant 0 : index
    %c0_310 = arith.constant 0 : index
    %544 = vector.load %arg0[%c38, %c0_309, %c0_310] : memref<48x8x256xf32, #tpu.memory_space<vmem>>, vector<1x8x256xf32>
    %545 = vector.shape_cast %544 : vector<1x8x256xf32> to vector<8x256xf32>
    %c0_311 = arith.constant 0 : index
    %c38_312 = arith.constant 38 : index
    %546 = memref.load %arg1[%c0_311, %c38_312] : memref<3x48xf32, #tpu.memory_space<smem>>
    %547 = vector.broadcast %546 : f32 to vector<8x256xf32>
    %548 = arith.mulf %547, %545 : vector<8x256xf32>
    %549 = arith.addf %535, %548 : vector<8x256xf32>
    %c1_313 = arith.constant 1 : index
    %c38_314 = arith.constant 38 : index
    %550 = memref.load %arg1[%c1_313, %c38_314] : memref<3x48xf32, #tpu.memory_space<smem>>
    %551 = vector.broadcast %550 : f32 to vector<8x256xf32>
    %552 = arith.mulf %551, %545 : vector<8x256xf32>
    %553 = arith.addf %539, %552 : vector<8x256xf32>
    %c2_315 = arith.constant 2 : index
    %c38_316 = arith.constant 38 : index
    %554 = memref.load %arg1[%c2_315, %c38_316] : memref<3x48xf32, #tpu.memory_space<smem>>
    %555 = vector.broadcast %554 : f32 to vector<8x256xf32>
    %556 = arith.mulf %555, %545 : vector<8x256xf32>
    %557 = arith.addf %543, %556 : vector<8x256xf32>
    %c39 = arith.constant 39 : index
    %c0_317 = arith.constant 0 : index
    %c0_318 = arith.constant 0 : index
    %558 = vector.load %arg0[%c39, %c0_317, %c0_318] : memref<48x8x256xf32, #tpu.memory_space<vmem>>, vector<1x8x256xf32>
    %559 = vector.shape_cast %558 : vector<1x8x256xf32> to vector<8x256xf32>
    %c0_319 = arith.constant 0 : index
    %c39_320 = arith.constant 39 : index
    %560 = memref.load %arg1[%c0_319, %c39_320] : memref<3x48xf32, #tpu.memory_space<smem>>
    %561 = vector.broadcast %560 : f32 to vector<8x256xf32>
    %562 = arith.mulf %561, %559 : vector<8x256xf32>
    %563 = arith.addf %549, %562 : vector<8x256xf32>
    %c1_321 = arith.constant 1 : index
    %c39_322 = arith.constant 39 : index
    %564 = memref.load %arg1[%c1_321, %c39_322] : memref<3x48xf32, #tpu.memory_space<smem>>
    %565 = vector.broadcast %564 : f32 to vector<8x256xf32>
    %566 = arith.mulf %565, %559 : vector<8x256xf32>
    %567 = arith.addf %553, %566 : vector<8x256xf32>
    %c2_323 = arith.constant 2 : index
    %c39_324 = arith.constant 39 : index
    %568 = memref.load %arg1[%c2_323, %c39_324] : memref<3x48xf32, #tpu.memory_space<smem>>
    %569 = vector.broadcast %568 : f32 to vector<8x256xf32>
    %570 = arith.mulf %569, %559 : vector<8x256xf32>
    %571 = arith.addf %557, %570 : vector<8x256xf32>
    %c40 = arith.constant 40 : index
    %c0_325 = arith.constant 0 : index
    %c0_326 = arith.constant 0 : index
    %572 = vector.load %arg0[%c40, %c0_325, %c0_326] : memref<48x8x256xf32, #tpu.memory_space<vmem>>, vector<1x8x256xf32>
    %573 = vector.shape_cast %572 : vector<1x8x256xf32> to vector<8x256xf32>
    %c0_327 = arith.constant 0 : index
    %c40_328 = arith.constant 40 : index
    %574 = memref.load %arg1[%c0_327, %c40_328] : memref<3x48xf32, #tpu.memory_space<smem>>
    %575 = vector.broadcast %574 : f32 to vector<8x256xf32>
    %576 = arith.mulf %575, %573 : vector<8x256xf32>
    %577 = arith.addf %563, %576 : vector<8x256xf32>
    %c1_329 = arith.constant 1 : index
    %c40_330 = arith.constant 40 : index
    %578 = memref.load %arg1[%c1_329, %c40_330] : memref<3x48xf32, #tpu.memory_space<smem>>
    %579 = vector.broadcast %578 : f32 to vector<8x256xf32>
    %580 = arith.mulf %579, %573 : vector<8x256xf32>
    %581 = arith.addf %567, %580 : vector<8x256xf32>
    %c2_331 = arith.constant 2 : index
    %c40_332 = arith.constant 40 : index
    %582 = memref.load %arg1[%c2_331, %c40_332] : memref<3x48xf32, #tpu.memory_space<smem>>
    %583 = vector.broadcast %582 : f32 to vector<8x256xf32>
    %584 = arith.mulf %583, %573 : vector<8x256xf32>
    %585 = arith.addf %571, %584 : vector<8x256xf32>
    %c41 = arith.constant 41 : index
    %c0_333 = arith.constant 0 : index
    %c0_334 = arith.constant 0 : index
    %586 = vector.load %arg0[%c41, %c0_333, %c0_334] : memref<48x8x256xf32, #tpu.memory_space<vmem>>, vector<1x8x256xf32>
    %587 = vector.shape_cast %586 : vector<1x8x256xf32> to vector<8x256xf32>
    %c0_335 = arith.constant 0 : index
    %c41_336 = arith.constant 41 : index
    %588 = memref.load %arg1[%c0_335, %c41_336] : memref<3x48xf32, #tpu.memory_space<smem>>
    %589 = vector.broadcast %588 : f32 to vector<8x256xf32>
    %590 = arith.mulf %589, %587 : vector<8x256xf32>
    %591 = arith.addf %577, %590 : vector<8x256xf32>
    %c1_337 = arith.constant 1 : index
    %c41_338 = arith.constant 41 : index
    %592 = memref.load %arg1[%c1_337, %c41_338] : memref<3x48xf32, #tpu.memory_space<smem>>
    %593 = vector.broadcast %592 : f32 to vector<8x256xf32>
    %594 = arith.mulf %593, %587 : vector<8x256xf32>
    %595 = arith.addf %581, %594 : vector<8x256xf32>
    %c2_339 = arith.constant 2 : index
    %c41_340 = arith.constant 41 : index
    %596 = memref.load %arg1[%c2_339, %c41_340] : memref<3x48xf32, #tpu.memory_space<smem>>
    %597 = vector.broadcast %596 : f32 to vector<8x256xf32>
    %598 = arith.mulf %597, %587 : vector<8x256xf32>
    %599 = arith.addf %585, %598 : vector<8x256xf32>
    %c42 = arith.constant 42 : index
    %c0_341 = arith.constant 0 : index
    %c0_342 = arith.constant 0 : index
    %600 = vector.load %arg0[%c42, %c0_341, %c0_342] : memref<48x8x256xf32, #tpu.memory_space<vmem>>, vector<1x8x256xf32>
    %601 = vector.shape_cast %600 : vector<1x8x256xf32> to vector<8x256xf32>
    %c0_343 = arith.constant 0 : index
    %c42_344 = arith.constant 42 : index
    %602 = memref.load %arg1[%c0_343, %c42_344] : memref<3x48xf32, #tpu.memory_space<smem>>
    %603 = vector.broadcast %602 : f32 to vector<8x256xf32>
    %604 = arith.mulf %603, %601 : vector<8x256xf32>
    %605 = arith.addf %591, %604 : vector<8x256xf32>
    %c1_345 = arith.constant 1 : index
    %c42_346 = arith.constant 42 : index
    %606 = memref.load %arg1[%c1_345, %c42_346] : memref<3x48xf32, #tpu.memory_space<smem>>
    %607 = vector.broadcast %606 : f32 to vector<8x256xf32>
    %608 = arith.mulf %607, %601 : vector<8x256xf32>
    %609 = arith.addf %595, %608 : vector<8x256xf32>
    %c2_347 = arith.constant 2 : index
    %c42_348 = arith.constant 42 : index
    %610 = memref.load %arg1[%c2_347, %c42_348] : memref<3x48xf32, #tpu.memory_space<smem>>
    %611 = vector.broadcast %610 : f32 to vector<8x256xf32>
    %612 = arith.mulf %611, %601 : vector<8x256xf32>
    %613 = arith.addf %599, %612 : vector<8x256xf32>
    %c43 = arith.constant 43 : index
    %c0_349 = arith.constant 0 : index
    %c0_350 = arith.constant 0 : index
    %614 = vector.load %arg0[%c43, %c0_349, %c0_350] : memref<48x8x256xf32, #tpu.memory_space<vmem>>, vector<1x8x256xf32>
    %615 = vector.shape_cast %614 : vector<1x8x256xf32> to vector<8x256xf32>
    %c0_351 = arith.constant 0 : index
    %c43_352 = arith.constant 43 : index
    %616 = memref.load %arg1[%c0_351, %c43_352] : memref<3x48xf32, #tpu.memory_space<smem>>
    %617 = vector.broadcast %616 : f32 to vector<8x256xf32>
    %618 = arith.mulf %617, %615 : vector<8x256xf32>
    %619 = arith.addf %605, %618 : vector<8x256xf32>
    %c1_353 = arith.constant 1 : index
    %c43_354 = arith.constant 43 : index
    %620 = memref.load %arg1[%c1_353, %c43_354] : memref<3x48xf32, #tpu.memory_space<smem>>
    %621 = vector.broadcast %620 : f32 to vector<8x256xf32>
    %622 = arith.mulf %621, %615 : vector<8x256xf32>
    %623 = arith.addf %609, %622 : vector<8x256xf32>
    %c2_355 = arith.constant 2 : index
    %c43_356 = arith.constant 43 : index
    %624 = memref.load %arg1[%c2_355, %c43_356] : memref<3x48xf32, #tpu.memory_space<smem>>
    %625 = vector.broadcast %624 : f32 to vector<8x256xf32>
    %626 = arith.mulf %625, %615 : vector<8x256xf32>
    %627 = arith.addf %613, %626 : vector<8x256xf32>
    %c44 = arith.constant 44 : index
    %c0_357 = arith.constant 0 : index
    %c0_358 = arith.constant 0 : index
    %628 = vector.load %arg0[%c44, %c0_357, %c0_358] : memref<48x8x256xf32, #tpu.memory_space<vmem>>, vector<1x8x256xf32>
    %629 = vector.shape_cast %628 : vector<1x8x256xf32> to vector<8x256xf32>
    %c0_359 = arith.constant 0 : index
    %c44_360 = arith.constant 44 : index
    %630 = memref.load %arg1[%c0_359, %c44_360] : memref<3x48xf32, #tpu.memory_space<smem>>
    %631 = vector.broadcast %630 : f32 to vector<8x256xf32>
    %632 = arith.mulf %631, %629 : vector<8x256xf32>
    %633 = arith.addf %619, %632 : vector<8x256xf32>
    %c1_361 = arith.constant 1 : index
    %c44_362 = arith.constant 44 : index
    %634 = memref.load %arg1[%c1_361, %c44_362] : memref<3x48xf32, #tpu.memory_space<smem>>
    %635 = vector.broadcast %634 : f32 to vector<8x256xf32>
    %636 = arith.mulf %635, %629 : vector<8x256xf32>
    %637 = arith.addf %623, %636 : vector<8x256xf32>
    %c2_363 = arith.constant 2 : index
    %c44_364 = arith.constant 44 : index
    %638 = memref.load %arg1[%c2_363, %c44_364] : memref<3x48xf32, #tpu.memory_space<smem>>
    %639 = vector.broadcast %638 : f32 to vector<8x256xf32>
    %640 = arith.mulf %639, %629 : vector<8x256xf32>
    %641 = arith.addf %627, %640 : vector<8x256xf32>
    %c45 = arith.constant 45 : index
    %c0_365 = arith.constant 0 : index
    %c0_366 = arith.constant 0 : index
    %642 = vector.load %arg0[%c45, %c0_365, %c0_366] : memref<48x8x256xf32, #tpu.memory_space<vmem>>, vector<1x8x256xf32>
    %643 = vector.shape_cast %642 : vector<1x8x256xf32> to vector<8x256xf32>
    %c0_367 = arith.constant 0 : index
    %c45_368 = arith.constant 45 : index
    %644 = memref.load %arg1[%c0_367, %c45_368] : memref<3x48xf32, #tpu.memory_space<smem>>
    %645 = vector.broadcast %644 : f32 to vector<8x256xf32>
    %646 = arith.mulf %645, %643 : vector<8x256xf32>
    %647 = arith.addf %633, %646 : vector<8x256xf32>
    %c1_369 = arith.constant 1 : index
    %c45_370 = arith.constant 45 : index
    %648 = memref.load %arg1[%c1_369, %c45_370] : memref<3x48xf32, #tpu.memory_space<smem>>
    %649 = vector.broadcast %648 : f32 to vector<8x256xf32>
    %650 = arith.mulf %649, %643 : vector<8x256xf32>
    %651 = arith.addf %637, %650 : vector<8x256xf32>
    %c2_371 = arith.constant 2 : index
    %c45_372 = arith.constant 45 : index
    %652 = memref.load %arg1[%c2_371, %c45_372] : memref<3x48xf32, #tpu.memory_space<smem>>
    %653 = vector.broadcast %652 : f32 to vector<8x256xf32>
    %654 = arith.mulf %653, %643 : vector<8x256xf32>
    %655 = arith.addf %641, %654 : vector<8x256xf32>
    %c46 = arith.constant 46 : index
    %c0_373 = arith.constant 0 : index
    %c0_374 = arith.constant 0 : index
    %656 = vector.load %arg0[%c46, %c0_373, %c0_374] : memref<48x8x256xf32, #tpu.memory_space<vmem>>, vector<1x8x256xf32>
    %657 = vector.shape_cast %656 : vector<1x8x256xf32> to vector<8x256xf32>
    %c0_375 = arith.constant 0 : index
    %c46_376 = arith.constant 46 : index
    %658 = memref.load %arg1[%c0_375, %c46_376] : memref<3x48xf32, #tpu.memory_space<smem>>
    %659 = vector.broadcast %658 : f32 to vector<8x256xf32>
    %660 = arith.mulf %659, %657 : vector<8x256xf32>
    %661 = arith.addf %647, %660 : vector<8x256xf32>
    %c1_377 = arith.constant 1 : index
    %c46_378 = arith.constant 46 : index
    %662 = memref.load %arg1[%c1_377, %c46_378] : memref<3x48xf32, #tpu.memory_space<smem>>
    %663 = vector.broadcast %662 : f32 to vector<8x256xf32>
    %664 = arith.mulf %663, %657 : vector<8x256xf32>
    %665 = arith.addf %651, %664 : vector<8x256xf32>
    %c2_379 = arith.constant 2 : index
    %c46_380 = arith.constant 46 : index
    %666 = memref.load %arg1[%c2_379, %c46_380] : memref<3x48xf32, #tpu.memory_space<smem>>
    %667 = vector.broadcast %666 : f32 to vector<8x256xf32>
    %668 = arith.mulf %667, %657 : vector<8x256xf32>
    %669 = arith.addf %655, %668 : vector<8x256xf32>
    %c47 = arith.constant 47 : index
    %c0_381 = arith.constant 0 : index
    %c0_382 = arith.constant 0 : index
    %670 = vector.load %arg0[%c47, %c0_381, %c0_382] : memref<48x8x256xf32, #tpu.memory_space<vmem>>, vector<1x8x256xf32>
    %671 = vector.shape_cast %670 : vector<1x8x256xf32> to vector<8x256xf32>
    %c0_383 = arith.constant 0 : index
    %c47_384 = arith.constant 47 : index
    %672 = memref.load %arg1[%c0_383, %c47_384] : memref<3x48xf32, #tpu.memory_space<smem>>
    %673 = vector.broadcast %672 : f32 to vector<8x256xf32>
    %674 = arith.mulf %673, %671 : vector<8x256xf32>
    %675 = arith.addf %661, %674 : vector<8x256xf32>
    %c1_385 = arith.constant 1 : index
    %c47_386 = arith.constant 47 : index
    %676 = memref.load %arg1[%c1_385, %c47_386] : memref<3x48xf32, #tpu.memory_space<smem>>
    %677 = vector.broadcast %676 : f32 to vector<8x256xf32>
    %678 = arith.mulf %677, %671 : vector<8x256xf32>
    %679 = arith.addf %665, %678 : vector<8x256xf32>
    %c2_387 = arith.constant 2 : index
    %c47_388 = arith.constant 47 : index
    %680 = memref.load %arg1[%c2_387, %c47_388] : memref<3x48xf32, #tpu.memory_space<smem>>
    %681 = vector.broadcast %680 : f32 to vector<8x256xf32>
    %682 = arith.mulf %681, %671 : vector<8x256xf32>
    %683 = arith.addf %669, %682 : vector<8x256xf32>
    %cst_389 = arith.constant 0.000000e+00 : f32
    %684 = vector.broadcast %cst_389 : f32 to vector<8x128xf32>
    %c0_390 = arith.constant 0 : index
    %c0_391 = arith.constant 0 : index
    %685 = vector.load %arg6[%c0_390, %c0_391] : memref<1x128xf32, #tpu.memory_space<vmem>>, vector<1x128xf32>
    %686 = vector.broadcast %685 : vector<1x128xf32> to vector<8x128xf32>
    %687 = arith.addf %684, %686 : vector<8x128xf32>
    %cst_392 = arith.constant dense<0.000000e+00> : vector<8xf32>
    %688 = vector.multi_reduction <add>, %675, %cst_392 [1] : vector<8x256xf32> to vector<8xf32>
    %689 = vector.shape_cast %688 : vector<8xf32> to vector<8x1xf32>
    %cst_393 = arith.constant 2.560000e+02 : f32
    %690 = vector.broadcast %cst_393 : f32 to vector<8x1xf32>
    %691 = arith.divf %689, %690 : vector<8x1xf32>
    %cst_394 = arith.constant dense<0.000000e+00> : vector<1xf32>
    %692 = vector.multi_reduction <add>, %691, %cst_394 [0] : vector<8x1xf32> to vector<1xf32>
    %693 = vector.shape_cast %692 : vector<1xf32> to vector<1x1xf32>
    %cst_395 = arith.constant 8.000000e+00 : f32
    %694 = vector.broadcast %cst_395 : f32 to vector<1x1xf32>
    %695 = arith.divf %693, %694 : vector<1x1xf32>
    %696 = vector.broadcast %695 : vector<1x1xf32> to vector<8x256xf32>
    %697 = arith.subf %675, %696 : vector<8x256xf32>
    %698 = vector.broadcast %695 : vector<1x1xf32> to vector<8x256xf32>
    %699 = arith.subf %675, %698 : vector<8x256xf32>
    %700 = arith.mulf %697, %699 : vector<8x256xf32>
    %cst_396 = arith.constant dense<0.000000e+00> : vector<8xf32>
    %701 = vector.multi_reduction <add>, %700, %cst_396 [1] : vector<8x256xf32> to vector<8xf32>
    %702 = vector.shape_cast %701 : vector<8xf32> to vector<8x1xf32>
    %cst_397 = arith.constant 2.560000e+02 : f32
    %703 = vector.broadcast %cst_397 : f32 to vector<8x1xf32>
    %704 = arith.divf %702, %703 : vector<8x1xf32>
    %cst_398 = arith.constant dense<0.000000e+00> : vector<1xf32>
    %705 = vector.multi_reduction <add>, %704, %cst_398 [0] : vector<8x1xf32> to vector<1xf32>
    %706 = vector.shape_cast %705 : vector<1xf32> to vector<1x1xf32>
    %cst_399 = arith.constant 8.000000e+00 : f32
    %707 = vector.broadcast %cst_399 : f32 to vector<1x1xf32>
    %708 = arith.divf %706, %707 : vector<1x1xf32>
    %709 = vector.broadcast %695 : vector<1x1xf32> to vector<8x256xf32>
    %710 = arith.subf %675, %709 : vector<8x256xf32>
    %cst_400 = arith.constant 9.99999974E-6 : f32
    %711 = vector.broadcast %cst_400 : f32 to vector<1x1xf32>
    %712 = arith.addf %708, %711 : vector<1x1xf32>
    %713 = math.rsqrt %712 : vector<1x1xf32>
    %714 = vector.broadcast %713 : vector<1x1xf32> to vector<8x256xf32>
    %715 = arith.mulf %710, %714 : vector<8x256xf32>
    %c0_401 = arith.constant 0 : index
    %716 = memref.load %arg3[%c0_401] : memref<3xf32, #tpu.memory_space<smem>>
    %717 = vector.broadcast %716 : f32 to vector<8x256xf32>
    %718 = arith.mulf %715, %717 : vector<8x256xf32>
    %c0_402 = arith.constant 0 : index
    %719 = memref.load %arg4[%c0_402] : memref<3xf32, #tpu.memory_space<smem>>
    %720 = vector.broadcast %719 : f32 to vector<8x256xf32>
    %721 = arith.addf %718, %720 : vector<8x256xf32>
    %cst_403 = arith.constant 0.000000e+00 : f32
    %722 = vector.broadcast %cst_403 : f32 to vector<8x256xf32>
    %723 = arith.cmpf oge, %721, %722 : vector<8x256xf32>
    %cst_404 = arith.constant 0.00999999977 : f32
    %724 = vector.broadcast %cst_404 : f32 to vector<8x256xf32>
    %725 = arith.mulf %724, %721 : vector<8x256xf32>
    %726 = arith.select %723, %721, %725 : vector<8x256xi1>, vector<8x256xf32>
    %c0_405 = arith.constant 0 : index
    %c0_406 = arith.constant 0 : index
    %727 = vector.load %arg5[%c0_405, %c0_406] : memref<768x128xf32, #tpu.memory_space<vmem>>, vector<256x128xf32>
    %cst_407 = arith.constant dense<0.000000e+00> : vector<8x128xf32>
    %728 = tpu.matmul %726, %727, %cst_407 {dimension_numbers = #tpu.dot_dimension_numbers<[1], [0], [0], [1], [0, 0, 1, 1], [], []>} : vector<8x256xf32>, vector<256x128xf32>, vector<8x128xf32> -> vector<8x128xf32>
    %729 = arith.addf %687, %728 : vector<8x128xf32>
    %cst_408 = arith.constant dense<0.000000e+00> : vector<8xf32>
    %730 = vector.multi_reduction <add>, %679, %cst_408 [1] : vector<8x256xf32> to vector<8xf32>
    %731 = vector.shape_cast %730 : vector<8xf32> to vector<8x1xf32>
    %cst_409 = arith.constant 2.560000e+02 : f32
    %732 = vector.broadcast %cst_409 : f32 to vector<8x1xf32>
    %733 = arith.divf %731, %732 : vector<8x1xf32>
    %cst_410 = arith.constant dense<0.000000e+00> : vector<1xf32>
    %734 = vector.multi_reduction <add>, %733, %cst_410 [0] : vector<8x1xf32> to vector<1xf32>
    %735 = vector.shape_cast %734 : vector<1xf32> to vector<1x1xf32>
    %cst_411 = arith.constant 8.000000e+00 : f32
    %736 = vector.broadcast %cst_411 : f32 to vector<1x1xf32>
    %737 = arith.divf %735, %736 : vector<1x1xf32>
    %738 = vector.broadcast %737 : vector<1x1xf32> to vector<8x256xf32>
    %739 = arith.subf %679, %738 : vector<8x256xf32>
    %740 = vector.broadcast %737 : vector<1x1xf32> to vector<8x256xf32>
    %741 = arith.subf %679, %740 : vector<8x256xf32>
    %742 = arith.mulf %739, %741 : vector<8x256xf32>
    %cst_412 = arith.constant dense<0.000000e+00> : vector<8xf32>
    %743 = vector.multi_reduction <add>, %742, %cst_412 [1] : vector<8x256xf32> to vector<8xf32>
    %744 = vector.shape_cast %743 : vector<8xf32> to vector<8x1xf32>
    %cst_413 = arith.constant 2.560000e+02 : f32
    %745 = vector.broadcast %cst_413 : f32 to vector<8x1xf32>
    %746 = arith.divf %744, %745 : vector<8x1xf32>
    %cst_414 = arith.constant dense<0.000000e+00> : vector<1xf32>
    %747 = vector.multi_reduction <add>, %746, %cst_414 [0] : vector<8x1xf32> to vector<1xf32>
    %748 = vector.shape_cast %747 : vector<1xf32> to vector<1x1xf32>
    %cst_415 = arith.constant 8.000000e+00 : f32
    %749 = vector.broadcast %cst_415 : f32 to vector<1x1xf32>
    %750 = arith.divf %748, %749 : vector<1x1xf32>
    %751 = vector.broadcast %737 : vector<1x1xf32> to vector<8x256xf32>
    %752 = arith.subf %679, %751 : vector<8x256xf32>
    %cst_416 = arith.constant 9.99999974E-6 : f32
    %753 = vector.broadcast %cst_416 : f32 to vector<1x1xf32>
    %754 = arith.addf %750, %753 : vector<1x1xf32>
    %755 = math.rsqrt %754 : vector<1x1xf32>
    %756 = vector.broadcast %755 : vector<1x1xf32> to vector<8x256xf32>
    %757 = arith.mulf %752, %756 : vector<8x256xf32>
    %c1_417 = arith.constant 1 : index
    %758 = memref.load %arg3[%c1_417] : memref<3xf32, #tpu.memory_space<smem>>
    %759 = vector.broadcast %758 : f32 to vector<8x256xf32>
    %760 = arith.mulf %757, %759 : vector<8x256xf32>
    %c1_418 = arith.constant 1 : index
    %761 = memref.load %arg4[%c1_418] : memref<3xf32, #tpu.memory_space<smem>>
    %762 = vector.broadcast %761 : f32 to vector<8x256xf32>
    %763 = arith.addf %760, %762 : vector<8x256xf32>
    %cst_419 = arith.constant 0.000000e+00 : f32
    %764 = vector.broadcast %cst_419 : f32 to vector<8x256xf32>
    %765 = arith.cmpf oge, %763, %764 : vector<8x256xf32>
    %cst_420 = arith.constant 0.00999999977 : f32
    %766 = vector.broadcast %cst_420 : f32 to vector<8x256xf32>
    %767 = arith.mulf %766, %763 : vector<8x256xf32>
    %768 = arith.select %765, %763, %767 : vector<8x256xi1>, vector<8x256xf32>
    %c256 = arith.constant 256 : index
    %c0_421 = arith.constant 0 : index
    %769 = vector.load %arg5[%c256, %c0_421] : memref<768x128xf32, #tpu.memory_space<vmem>>, vector<256x128xf32>
    %cst_422 = arith.constant dense<0.000000e+00> : vector<8x128xf32>
    %770 = tpu.matmul %768, %769, %cst_422 {dimension_numbers = #tpu.dot_dimension_numbers<[1], [0], [0], [1], [0, 0, 1, 1], [], []>} : vector<8x256xf32>, vector<256x128xf32>, vector<8x128xf32> -> vector<8x128xf32>
    %771 = arith.addf %729, %770 : vector<8x128xf32>
    %cst_423 = arith.constant dense<0.000000e+00> : vector<8xf32>
    %772 = vector.multi_reduction <add>, %683, %cst_423 [1] : vector<8x256xf32> to vector<8xf32>
    %773 = vector.shape_cast %772 : vector<8xf32> to vector<8x1xf32>
    %cst_424 = arith.constant 2.560000e+02 : f32
    %774 = vector.broadcast %cst_424 : f32 to vector<8x1xf32>
    %775 = arith.divf %773, %774 : vector<8x1xf32>
    %cst_425 = arith.constant dense<0.000000e+00> : vector<1xf32>
    %776 = vector.multi_reduction <add>, %775, %cst_425 [0] : vector<8x1xf32> to vector<1xf32>
    %777 = vector.shape_cast %776 : vector<1xf32> to vector<1x1xf32>
    %cst_426 = arith.constant 8.000000e+00 : f32
    %778 = vector.broadcast %cst_426 : f32 to vector<1x1xf32>
    %779 = arith.divf %777, %778 : vector<1x1xf32>
    %780 = vector.broadcast %779 : vector<1x1xf32> to vector<8x256xf32>
    %781 = arith.subf %683, %780 : vector<8x256xf32>
    %782 = vector.broadcast %779 : vector<1x1xf32> to vector<8x256xf32>
    %783 = arith.subf %683, %782 : vector<8x256xf32>
    %784 = arith.mulf %781, %783 : vector<8x256xf32>
    %cst_427 = arith.constant dense<0.000000e+00> : vector<8xf32>
    %785 = vector.multi_reduction <add>, %784, %cst_427 [1] : vector<8x256xf32> to vector<8xf32>
    %786 = vector.shape_cast %785 : vector<8xf32> to vector<8x1xf32>
    %cst_428 = arith.constant 2.560000e+02 : f32
    %787 = vector.broadcast %cst_428 : f32 to vector<8x1xf32>
    %788 = arith.divf %786, %787 : vector<8x1xf32>
    %cst_429 = arith.constant dense<0.000000e+00> : vector<1xf32>
    %789 = vector.multi_reduction <add>, %788, %cst_429 [0] : vector<8x1xf32> to vector<1xf32>
    %790 = vector.shape_cast %789 : vector<1xf32> to vector<1x1xf32>
    %cst_430 = arith.constant 8.000000e+00 : f32
    %791 = vector.broadcast %cst_430 : f32 to vector<1x1xf32>
    %792 = arith.divf %790, %791 : vector<1x1xf32>
    %793 = vector.broadcast %779 : vector<1x1xf32> to vector<8x256xf32>
    %794 = arith.subf %683, %793 : vector<8x256xf32>
    %cst_431 = arith.constant 9.99999974E-6 : f32
    %795 = vector.broadcast %cst_431 : f32 to vector<1x1xf32>
    %796 = arith.addf %792, %795 : vector<1x1xf32>
    %797 = math.rsqrt %796 : vector<1x1xf32>
    %798 = vector.broadcast %797 : vector<1x1xf32> to vector<8x256xf32>
    %799 = arith.mulf %794, %798 : vector<8x256xf32>
    %c2_432 = arith.constant 2 : index
    %800 = memref.load %arg3[%c2_432] : memref<3xf32, #tpu.memory_space<smem>>
    %801 = vector.broadcast %800 : f32 to vector<8x256xf32>
    %802 = arith.mulf %799, %801 : vector<8x256xf32>
    %c2_433 = arith.constant 2 : index
    %803 = memref.load %arg4[%c2_433] : memref<3xf32, #tpu.memory_space<smem>>
    %804 = vector.broadcast %803 : f32 to vector<8x256xf32>
    %805 = arith.addf %802, %804 : vector<8x256xf32>
    %cst_434 = arith.constant 0.000000e+00 : f32
    %806 = vector.broadcast %cst_434 : f32 to vector<8x256xf32>
    %807 = arith.cmpf oge, %805, %806 : vector<8x256xf32>
    %cst_435 = arith.constant 0.00999999977 : f32
    %808 = vector.broadcast %cst_435 : f32 to vector<8x256xf32>
    %809 = arith.mulf %808, %805 : vector<8x256xf32>
    %810 = arith.select %807, %805, %809 : vector<8x256xi1>, vector<8x256xf32>
    %c512 = arith.constant 512 : index
    %c0_436 = arith.constant 0 : index
    %811 = vector.load %arg5[%c512, %c0_436] : memref<768x128xf32, #tpu.memory_space<vmem>>, vector<256x128xf32>
    %cst_437 = arith.constant dense<0.000000e+00> : vector<8x128xf32>
    %812 = tpu.matmul %810, %811, %cst_437 {dimension_numbers = #tpu.dot_dimension_numbers<[1], [0], [0], [1], [0, 0, 1, 1], [], []>} : vector<8x256xf32>, vector<256x128xf32>, vector<8x128xf32> -> vector<8x128xf32>
    %813 = arith.addf %771, %812 : vector<8x128xf32>
    %cst_438 = arith.constant dense<0.000000e+00> : vector<128xf32>
    %814 = vector.multi_reduction <add>, %813, %cst_438 [0] : vector<8x128xf32> to vector<128xf32>
    %815 = vector.shape_cast %814 : vector<128xf32> to vector<1x128xf32>
    %cst_439 = arith.constant 8.000000e+00 : f32
    %816 = vector.broadcast %cst_439 : f32 to vector<1x128xf32>
    %817 = arith.divf %815, %816 : vector<1x128xf32>
    %818 = vector.broadcast %817 : vector<1x128xf32> to vector<8x128xf32>
    %819 = arith.subf %813, %818 : vector<8x128xf32>
    %820 = vector.broadcast %817 : vector<1x128xf32> to vector<8x128xf32>
    %821 = arith.subf %813, %820 : vector<8x128xf32>
    %822 = arith.mulf %819, %821 : vector<8x128xf32>
    %cst_440 = arith.constant dense<0.000000e+00> : vector<128xf32>
    %823 = vector.multi_reduction <add>, %822, %cst_440 [0] : vector<8x128xf32> to vector<128xf32>
    %824 = vector.shape_cast %823 : vector<128xf32> to vector<1x128xf32>
    %cst_441 = arith.constant 8.000000e+00 : f32
    %825 = vector.broadcast %cst_441 : f32 to vector<1x128xf32>
    %826 = arith.divf %824, %825 : vector<1x128xf32>
    %827 = vector.broadcast %817 : vector<1x128xf32> to vector<8x128xf32>
    %828 = arith.subf %813, %827 : vector<8x128xf32>
    %cst_442 = arith.constant 9.99999974E-6 : f32
    %829 = vector.broadcast %cst_442 : f32 to vector<1x128xf32>
    %830 = arith.addf %826, %829 : vector<1x128xf32>
    %831 = math.rsqrt %830 : vector<1x128xf32>
    %832 = vector.broadcast %831 : vector<1x128xf32> to vector<8x128xf32>
    %833 = arith.mulf %828, %832 : vector<8x128xf32>
    %c0_443 = arith.constant 0 : index
    %c0_444 = arith.constant 0 : index
    %834 = vector.load %arg7[%c0_443, %c0_444] : memref<1x128xf32, #tpu.memory_space<vmem>>, vector<1x128xf32>
    %835 = vector.broadcast %834 : vector<1x128xf32> to vector<8x128xf32>
    %836 = arith.mulf %833, %835 : vector<8x128xf32>
    %c0_445 = arith.constant 0 : index
    %c0_446 = arith.constant 0 : index
    %837 = vector.load %arg8[%c0_445, %c0_446] : memref<1x128xf32, #tpu.memory_space<vmem>>, vector<1x128xf32>
    %838 = vector.broadcast %837 : vector<1x128xf32> to vector<8x128xf32>
    %839 = arith.addf %836, %838 : vector<8x128xf32>
    %cst_447 = arith.constant 0.000000e+00 : f32
    %840 = vector.broadcast %cst_447 : f32 to vector<8x128xf32>
    %841 = arith.cmpf oge, %839, %840 : vector<8x128xf32>
    %cst_448 = arith.constant 0.00999999977 : f32
    %842 = vector.broadcast %cst_448 : f32 to vector<8x128xf32>
    %843 = arith.mulf %842, %839 : vector<8x128xf32>
    %844 = arith.select %841, %839, %843 : vector<8x128xi1>, vector<8x128xf32>
    %c0_449 = arith.constant 0 : index
    %c0_450 = arith.constant 0 : index
    %845 = vector.load %arg9[%c0_449, %c0_450] : memref<128x128xf32, #tpu.memory_space<vmem>>, vector<128x128xf32>
    %cst_451 = arith.constant dense<0.000000e+00> : vector<8x128xf32>
    %846 = tpu.matmul %844, %845, %cst_451 {dimension_numbers = #tpu.dot_dimension_numbers<[1], [0], [0], [1], [0, 0, 1, 1], [], []>} : vector<8x128xf32>, vector<128x128xf32>, vector<8x128xf32> -> vector<8x128xf32>
    %c0_452 = arith.constant 0 : index
    %c0_453 = arith.constant 0 : index
    %847 = vector.load %arg10[%c0_452, %c0_453] : memref<1x128xf32, #tpu.memory_space<vmem>>, vector<1x128xf32>
    %848 = vector.broadcast %847 : vector<1x128xf32> to vector<8x128xf32>
    %849 = arith.addf %846, %848 : vector<8x128xf32>
    %850 = tpu.iota {dimensions = array<i32: 1>} : vector<8x128xi32>
    %c10_i32 = arith.constant 10 : i32
    %851 = vector.broadcast %c10_i32 : i32 to vector<8x128xi32>
    %852 = arith.cmpi slt, %850, %851 : vector<8x128xi32>
    %cst_454 = arith.constant -1.000000e+30 : f32
    %853 = vector.broadcast %cst_454 : f32 to vector<8x128xf32>
    %854 = arith.select %852, %849, %853 : vector<8x128xi1>, vector<8x128xf32>
    %cst_455 = arith.constant dense<0xFF800000> : vector<8xf32>
    %855 = vector.multi_reduction <maximumf>, %854, %cst_455 [1] : vector<8x128xf32> to vector<8xf32>
    %856 = vector.shape_cast %855 : vector<8xf32> to vector<8x1xf32>
    %857 = vector.broadcast %856 : vector<8x1xf32> to vector<8x128xf32>
    %858 = arith.subf %854, %857 : vector<8x128xf32>
    %859 = math.exp %858 : vector<8x128xf32>
    %cst_456 = arith.constant dense<0.000000e+00> : vector<8xf32>
    %860 = vector.multi_reduction <add>, %859, %cst_456 [1] : vector<8x128xf32> to vector<8xf32>
    %861 = vector.shape_cast %860 : vector<8xf32> to vector<8x1xf32>
    %862 = tpu.reciprocal %861 {approx = true} : vector<8x1xf32> -> vector<8x1xf32>
    %863 = arith.mulf %861, %862 : vector<8x1xf32>
    %cst_457 = arith.constant 2.000000e+00 : f32
    %864 = vector.broadcast %cst_457 : f32 to vector<8x1xf32>
    %865 = arith.subf %864, %863 : vector<8x1xf32>
    %866 = arith.mulf %862, %865 : vector<8x1xf32>
    %867 = vector.broadcast %866 : vector<8x1xf32> to vector<8x128xf32>
    %868 = arith.mulf %859, %867 : vector<8x128xf32>
    %869 = vector.extract_strided_slice %868 {offsets = [0, 0], sizes = [8, 10], strides = [1, 1]} : vector<8x128xf32> to vector<8x10xf32>
    %c0_458 = arith.constant 0 : index
    %c0_459 = arith.constant 0 : index
    %870 = vector.load %arg11[%c0_458, %c0_459] : memref<8x10xf32, #tpu.memory_space<vmem>>, vector<8x10xf32>
    tpu.vector_store %arg11[%c0_458, %c0_459], %869 {strides = array<i32>} : memref<8x10xf32, #tpu.memory_space<vmem>>, vector<8x10xf32>,
    return
  }
}

</mosaic_0001>

<llo_original>
// kernel: classifier_forward.1
$region0: #{classifier_forward.1}
  #allocation0 [shape = 'u32[]', space=smem, size = 0x4, offset = 0x4, fixed_abs, tag = 'smem constant byte address 0x4 - core index']
  #allocation1 [shape = 'u32[144,128]{1,0:T(1,128)}', space=vmem, size = 0x12000, scoped, tag = 'internal scratch']
  %s0 = inlined_call_operand.vmem [shape: f32[48,8,256], index: 0, kind: input, shape index: {}]
  %s1 = inlined_call_operand.vmem [shape: f32[3,48], index: 1, kind: input, shape index: {}]
  %s2 = inlined_call_operand.vmem [shape: f32[3], index: 2, kind: input, shape index: {}]
  %s3 = inlined_call_operand.vmem [shape: f32[3], index: 3, kind: input, shape index: {}]
  %s4 = inlined_call_operand.vmem [shape: f32[3], index: 4, kind: input, shape index: {}]
  %s5 = inlined_call_operand.vmem [shape: f32[768,128], index: 5, kind: input, shape index: {}]
  %s6 = inlined_call_operand.vmem [shape: f32[1,128], index: 6, kind: input, shape index: {}]
  %s7 = inlined_call_operand.vmem [shape: f32[1,128], index: 7, kind: input, shape index: {}]
  %s8 = inlined_call_operand.vmem [shape: f32[1,128], index: 8, kind: input, shape index: {}]
  %s9 = inlined_call_operand.vmem [shape: f32[128,128], index: 9, kind: input, shape index: {}]
  %s10 = inlined_call_operand.vmem [shape: f32[1,128], index: 10, kind: input, shape index: {}]
  %s11 = inlined_call_operand.hbm [shape: f32[8,10], index: 11, kind: output, shape index: {}]
  %s12 = sld [smem:[#allocation0]]
  $region70: #{classifier_forward.1} parent=0
    _
  %s14 = ssub.s32 1, %s12
  %s15 = scalar_select 0, %s14, %s12
  $region1: #{classifier_forward.1} parent=0
    #allocation2 [shape = 'u8[2048]{0}', space=smem, size = 0x800, scoped, tag = 'input window, operand 1, single buffered']
    #allocation3 [shape = 's32[1]{0}', space=sflag, size = 0x4, scoped, tag = 'scoped memory for classifier_forward.1']
    #allocation4 [shape = 's32[1]{0}', space=sflag, size = 0x4, scoped, tag = 'scoped memory for classifier_forward.1']
    #allocation5 [shape = 'u8[512]{0}', space=smem, size = 0x200, scoped, tag = 'input window, operand 2, single buffered']
    #allocation6 [shape = 's32[1]{0}', space=sflag, size = 0x4, scoped, tag = 'scoped memory for classifier_forward.1']
    #allocation7 [shape = 'u8[512]{0}', space=smem, size = 0x200, scoped, tag = 'input window, operand 3, single buffered']
    #allocation8 [shape = 'u8[512]{0}', space=smem, size = 0x200, scoped, tag = 'input window, operand 4, single buffered']
    #allocation9 [shape = 's32[1]{0}', space=sflag, size = 0x4, scoped, tag = 'scoped memory for classifier_forward.1']
    #allocation10 [shape = 'u8[4096]{0}', space=vmem, size = 0x1000, scoped, tag = 'output window, operand 0, single buffered']
    %16 = vsyncpa [#allocation4], 0
    %17 = vsyncpa [#allocation6], 0
    %18 = vsyncpa [#allocation9], 0
    %19 = vsyncpa [#allocation3], 0
    // Predicated region
    $region2: #{classifier_forward.1} parent=1 // pred_check
      _
    $region3: #{classifier_forward.1} parent=1 // pred_check_branch
      %21 = sbr.rel (0) target = $region5
    $region4: #{classifier_forward.1} parent=1 // pred_region
      _
    $region5: #{classifier_forward.1} parent=1 // pred_fallthru
      _
    // Predicated region
    $region6: #{classifier_forward.1} parent=1 // pred_check
      _
    $region7: #{classifier_forward.1} parent=1 // pred_check_branch
      %23 = sbr.rel (0) target = $region9
    $region8: #{classifier_forward.1} parent=1 // pred_region
      %s25 = ssub.s32 64, 64
      %26 = vsyncadd [#allocation4], %s25
      %s28 = sshll.u32 %s1, 4
      %s29 = int_to_ptr.vmem [resolvable:$true] %s28
      %31 = dma.vmem_to_smem %s29, 64, [#allocation2], [#allocation4]
    $region9: #{classifier_forward.1} parent=1 // pred_fallthru
      _
    // Predicated region
    $region10: #{classifier_forward.1} parent=1 // pred_check
      _
    $region11: #{classifier_forward.1} parent=1 // pred_check_branch
      %33 = sbr.rel (0) target = $region13
    $region12: #{classifier_forward.1} parent=1 // pred_region
      %s35 = ssub.s32 16, 16
      %36 = vsyncadd [#allocation6], %s35
      %s38 = sshll.u32 %s2, 4
      %s39 = int_to_ptr.vmem [resolvable:$true] %s38
      %41 = dma.vmem_to_smem %s39, 16, [#allocation5], [#allocation6]
    $region13: #{classifier_forward.1} parent=1 // pred_fallthru
      _
    // Predicated region
    $region14: #{classifier_forward.1} parent=1 // pred_check
      _
    $region15: #{classifier_forward.1} parent=1 // pred_check_branch
      %43 = sbr.rel (0) target = $region17
    $region16: #{classifier_forward.1} parent=1 // pred_region
      %s45 = ssub.s32 16, 16
      %46 = vsyncadd [#allocation6], %s45
      %s48 = sshll.u32 %s3, 4
      %s49 = int_to_ptr.vmem [resolvable:$true] %s48
      %51 = dma.vmem_to_smem %s49, 16, [#allocation7], [#allocation6]
    $region17: #{classifier_forward.1} parent=1 // pred_fallthru
      _
    // Predicated region
    $region18: #{classifier_forward.1} parent=1 // pred_check
      _
    $region19: #{classifier_forward.1} parent=1 // pred_check_branch
      %53 = sbr.rel (0) target = $region21
    $region20: #{classifier_forward.1} parent=1 // pred_region
      %s55 = ssub.s32 16, 16
      %56 = vsyncadd [#allocation9], %s55
      %s58 = sshll.u32 %s4, 4
      %s59 = int_to_ptr.vmem [resolvable:$true] %s58
      %61 = dma.vmem_to_smem %s59, 16, [#allocation8], [#allocation9]
    $region21: #{classifier_forward.1} parent=1 // pred_fallthru
      _
    // Predicated region
    $region22: #{classifier_forward.1} parent=1 // pred_check
      _
    $region23: #{classifier_forward.1} parent=1 // pred_check_branch
      %63 = sbr.rel (0) target = $region25
    $region24: #{classifier_forward.1} parent=1 // pred_region
      _
    $region25: #{classifier_forward.1} parent=1 // pred_fallthru
      _
    // Predicated region
    $region26: #{classifier_forward.1} parent=1 // pred_check
      _
    $region27: #{classifier_forward.1} parent=1 // pred_check_branch
      %65 = sbr.rel (0) target = $region29
    $region28: #{classifier_forward.1} parent=1 // pred_region
      _
    $region29: #{classifier_forward.1} parent=1 // pred_fallthru
      _
    // Predicated region
    $region30: #{classifier_forward.1} parent=1 // pred_check
      _
    $region31: #{classifier_forward.1} parent=1 // pred_check_branch
      %67 = sbr.rel (0) target = $region33
    $region32: #{classifier_forward.1} parent=1 // pred_region
      _
    $region33: #{classifier_forward.1} parent=1 // pred_fallthru
      _
    // Predicated region
    $region34: #{classifier_forward.1} parent=1 // pred_check
      _
    $region35: #{classifier_forward.1} parent=1 // pred_check_branch
      %69 = sbr.rel (0) target = $region37
    $region36: #{classifier_forward.1} parent=1 // pred_region
      _
    $region37: #{classifier_forward.1} parent=1 // pred_fallthru
      _
    // Predicated region
    $region38: #{classifier_forward.1} parent=1 // pred_check
      _
    $region39: #{classifier_forward.1} parent=1 // pred_check_branch
      %71 = sbr.rel (0) target = $region41
    $region40: #{classifier_forward.1} parent=1 // pred_region
      _
    $region41: #{classifier_forward.1} parent=1 // pred_fallthru
      _
    // Predicated region
    $region42: #{classifier_forward.1} parent=1 // pred_check
      _
    $region43: #{classifier_forward.1} parent=1 // pred_check_branch
      %73 = sbr.rel (0) target = $region45
    $region44: #{classifier_forward.1} parent=1 // pred_region
      _
    $region45: #{classifier_forward.1} parent=1 // pred_fallthru
      _
    // Predicated region
    $region46: #{classifier_forward.1} parent=1 // pred_check
      _
    $region47: #{classifier_forward.1} parent=1 // pred_check_branch
      %75 = sbr.rel (0) target = $region49
    $region48: #{classifier_forward.1} parent=1 // pred_region
      %76 = dma.done [#allocation4], 64
    $region49: #{classifier_forward.1} parent=1 // pred_fallthru
      _
    // Predicated region
    $region50: #{classifier_forward.1} parent=1 // pred_check
      _
    $region51: #{classifier_forward.1} parent=1 // pred_check_branch
      %78 = sbr.rel (0) target = $region53
    $region52: #{classifier_forward.1} parent=1 // pred_region
      %79 = dma.done [#allocation6], 16
    $region53: #{classifier_forward.1} parent=1 // pred_fallthru
      _
    // Predicated region
    $region54: #{classifier_forward.1} parent=1 // pred_check
      _
    $region55: #{classifier_forward.1} parent=1 // pred_check_branch
      %81 = sbr.rel (0) target = $region57
    $region56: #{classifier_forward.1} parent=1 // pred_region
      %82 = dma.done [#allocation6], 16
    $region57: #{classifier_forward.1} parent=1 // pred_fallthru
      _
    // Predicated region
    $region58: #{classifier_forward.1} parent=1 // pred_check
      _
    $region59: #{classifier_forward.1} parent=1 // pred_check_branch
      %84 = sbr.rel (0) target = $region61
    $region60: #{classifier_forward.1} parent=1 // pred_region
      %85 = dma.done [#allocation9], 16
    $region61: #{classifier_forward.1} parent=1 // pred_fallthru
      _
    %86 = sfence
    %s87 = sld [smem:[#allocation5]]
    %v88 = vstv %s87
    %v89 = vadd.f32 %v88, 0.0
    %s90 = sld [smem:[#allocation5 + $0x1]]
    %v91 = vstv %s90
    %v92 = vadd.f32 %v91, 0.0
    %s93 = sld [smem:[#allocation5 + $0x2]]
    %v94 = vstv %s93
    %v95 = vadd.f32 %v94, 0.0
    %v96 = vld [vmem:[%s0] sm:$0xff]
    %v97 = vld [vmem:[%s0 + $0x8] sm:$0xff]
    %s98 = sld [smem:[#allocation2]]
    %v99 = vstv %s98
    %v100 = vmul.f32 %v99, %v96
    %v101 = vmul.f32 %v99, %v97
    %v102 = vadd.f32 %v89, %v100
    %v103 = vadd.f32 %v89, %v101
    %s104 = sld [smem:[#allocation2 + $0x80]]
    %v105 = vstv %s104
    %v106 = vmul.f32 %v105, %v96
    %v107 = vmul.f32 %v105, %v97
    %v108 = vadd.f32 %v92, %v106
    %v109 = vadd.f32 %v92, %v107
    %s110 = sld [smem:[#allocation2 + $0x100]]
    %v111 = vstv %s110
    %v112 = vmul.f32 %v111, %v96
    %v113 = vmul.f32 %v111, %v97
    %v114 = vadd.f32 %v95, %v112
    %v115 = vadd.f32 %v95, %v113
    %s116 = scalar_lea.vmem %s0, 16
    %v117 = vld [vmem:[%s116] sm:$0xff]
    %v118 = vld [vmem:[%s116 + $0x8] sm:$0xff]
    %s119 = sld [smem:[#allocation2 + $0x1]]
    %v120 = vstv %s119
    %v121 = vmul.f32 %v120, %v117
    %v122 = vmul.f32 %v120, %v118
    %v123 = vadd.f32 %v102, %v121
    %v124 = vadd.f32 %v103, %v122
    %s125 = sld [smem:[#allocation2 + $0x81]]
    %v126 = vstv %s125
    %v127 = vmul.f32 %v126, %v117
    %v128 = vmul.f32 %v126, %v118
    %v129 = vadd.f32 %v108, %v127
    %v130 = vadd.f32 %v109, %v128
    %s131 = sld [smem:[#allocation2 + $0x101]]
    %v132 = vstv %s131
    %v133 = vmul.f32 %v132, %v117
    %v134 = vmul.f32 %v132, %v118
    %v135 = vadd.f32 %v114, %v133
    %v136 = vadd.f32 %v115, %v134
    %s137 = scalar_lea.vmem %s0, 32
    %v138 = vld [vmem:[%s137] sm:$0xff]
    %v139 = vld [vmem:[%s137 + $0x8] sm:$0xff]
    %s140 = sld [smem:[#allocation2 + $0x2]]
    %v141 = vstv %s140
    %v142 = vmul.f32 %v141, %v138
    %v143 = vmul.f32 %v141, %v139
    %v144 = vadd.f32 %v123, %v142
    %v145 = vadd.f32 %v124, %v143
    %s146 = sld [smem:[#allocation2 + $0x82]]
    %v147 = vstv %s146
    %v148 = vmul.f32 %v147, %v138
    %v149 = vmul.f32 %v147, %v139
    %v150 = vadd.f32 %v129, %v148
    %v151 = vadd.f32 %v130, %v149
    %s152 = sld [smem:[#allocation2 + $0x102]]
    %v153 = vstv %s152
    %v154 = vmul.f32 %v153, %v138
    %v155 = vmul.f32 %v153, %v139
    %v156 = vadd.f32 %v135, %v154
    %v157 = vadd.f32 %v136, %v155
    %s158 = scalar_lea.vmem %s0, 48
    %v159 = vld [vmem:[%s158] sm:$0xff]
    %v160 = vld [vmem:[%s158 + $0x8] sm:$0xff]
    %s161 = sld [smem:[#allocation2 + $0x3]]
    %v162 = vstv %s161
    %v163 = vmul.f32 %v162, %v159
    %v164 = vmul.f32 %v162, %v160
    %v165 = vadd.f32 %v144, %v163
    %v166 = vadd.f32 %v145, %v164
    %s167 = sld [smem:[#allocation2 + $0x83]]
    %v168 = vstv %s167
    %v169 = vmul.f32 %v168, %v159
    %v170 = vmul.f32 %v168, %v160
    %v171 = vadd.f32 %v150, %v169
    %v172 = vadd.f32 %v151, %v170
    %s173 = sld [smem:[#allocation2 + $0x103]]
    %v174 = vstv %s173
    %v175 = vmul.f32 %v174, %v159
    %v176 = vmul.f32 %v174, %v160
    %v177 = vadd.f32 %v156, %v175
    %v178 = vadd.f32 %v157, %v176
    %s179 = scalar_lea.vmem %s0, 64
    %v180 = vld [vmem:[%s179] sm:$0xff]
    %v181 = vld [vmem:[%s179 + $0x8] sm:$0xff]
    %s182 = sld [smem:[#allocation2 + $0x4]]
    %v183 = vstv %s182
    %v184 = vmul.f32 %v183, %v180
    %v185 = vmul.f32 %v183, %v181
    %v186 = vadd.f32 %v165, %v184
    %v187 = vadd.f32 %v166, %v185
    %s188 = sld [smem:[#allocation2 + $0x84]]
    %v189 = vstv %s188
    %v190 = vmul.f32 %v189, %v180
    %v191 = vmul.f32 %v189, %v181
    %v192 = vadd.f32 %v171, %v190
    %v193 = vadd.f32 %v172, %v191
    %s194 = sld [smem:[#allocation2 + $0x104]]
    %v195 = vstv %s194
    %v196 = vmul.f32 %v195, %v180
    %v197 = vmul.f32 %v195, %v181
    %v198 = vadd.f32 %v177, %v196
    %v199 = vadd.f32 %v178, %v197
    %s200 = scalar_lea.vmem %s0, 80
    %v201 = vld [vmem:[%s200] sm:$0xff]
    %v202 = vld [vmem:[%s200 + $0x8] sm:$0xff]
    %s203 = sld [smem:[#allocation2 + $0x5]]
    %v204 = vstv %s203
    %v205 = vmul.f32 %v204, %v201
    %v206 = vmul.f32 %v204, %v202
    %v207 = vadd.f32 %v186, %v205
    %v208 = vadd.f32 %v187, %v206
    %s209 = sld [smem:[#allocation2 + $0x85]]
    %v210 = vstv %s209
    %v211 = vmul.f32 %v210, %v201
    %v212 = vmul.f32 %v210, %v202
    %v213 = vadd.f32 %v192, %v211
    %v214 = vadd.f32 %v193, %v212
    %s215 = sld [smem:[#allocation2 + $0x105]]
    %v216 = vstv %s215
    %v217 = vmul.f32 %v216, %v201
    %v218 = vmul.f32 %v216, %v202
    %v219 = vadd.f32 %v198, %v217
    %v220 = vadd.f32 %v199, %v218
    %s221 = scalar_lea.vmem %s0, 96
    %v222 = vld [vmem:[%s221] sm:$0xff]
    %v223 = vld [vmem:[%s221 + $0x8] sm:$0xff]
    %s224 = sld [smem:[#allocation2 + $0x6]]
    %v225 = vstv %s224
    %v226 = vmul.f32 %v225, %v222
    %v227 = vmul.f32 %v225, %v223
    %v228 = vadd.f32 %v207, %v226
    %v229 = vadd.f32 %v208, %v227
    %s230 = sld [smem:[#allocation2 + $0x86]]
    %v231 = vstv %s230
    %v232 = vmul.f32 %v231, %v222
    %v233 = vmul.f32 %v231, %v223
    %v234 = vadd.f32 %v213, %v232
    %v235 = vadd.f32 %v214, %v233
    %s236 = sld [smem:[#allocation2 + $0x106]]
    %v237 = vstv %s236
    %v238 = vmul.f32 %v237, %v222
    %v239 = vmul.f32 %v237, %v223
    %v240 = vadd.f32 %v219, %v238
    %v241 = vadd.f32 %v220, %v239
    %s242 = scalar_lea.vmem %s0, 112
    %v243 = vld [vmem:[%s242] sm:$0xff]
    %v244 = vld [vmem:[%s242 + $0x8] sm:$0xff]
    %s245 = sld [smem:[#allocation2 + $0x7]]
    %v246 = vstv %s245
    %v247 = vmul.f32 %v246, %v243
    %v248 = vmul.f32 %v246, %v244
    %v249 = vadd.f32 %v228, %v247
    %v250 = vadd.f32 %v229, %v248
    %s251 = sld [smem:[#allocation2 + $0x87]]
    %v252 = vstv %s251
    %v253 = vmul.f32 %v252, %v243
    %v254 = vmul.f32 %v252, %v244
    %v255 = vadd.f32 %v234, %v253
    %v256 = vadd.f32 %v235, %v254
    %s257 = sld [smem:[#allocation2 + $0x107]]
    %v258 = vstv %s257
    %v259 = vmul.f32 %v258, %v243
    %v260 = vmul.f32 %v258, %v244
    %v261 = vadd.f32 %v240, %v259
    %v262 = vadd.f32 %v241, %v260
    %s263 = scalar_lea.vmem %s0, 128
    %v264 = vld [vmem:[%s263] sm:$0xff]
    %v265 = vld [vmem:[%s263 + $0x8] sm:$0xff]
    %s266 = sld [smem:[#allocation2 + $0x8]]
    %v267 = vstv %s266
    %v268 = vmul.f32 %v267, %v264
    %v269 = vmul.f32 %v267, %v265
    %v270 = vadd.f32 %v249, %v268
    %v271 = vadd.f32 %v250, %v269
    %s272 = sld [smem:[#allocation2 + $0x88]]
    %v273 = vstv %s272
    %v274 = vmul.f32 %v273, %v264
    %v275 = vmul.f32 %v273, %v265
    %v276 = vadd.f32 %v255, %v274
    %v277 = vadd.f32 %v256, %v275
    %s278 = sld [smem:[#allocation2 + $0x108]]
    %v279 = vstv %s278
    %v280 = vmul.f32 %v279, %v264
    %v281 = vmul.f32 %v279, %v265
    %v282 = vadd.f32 %v261, %v280
    %v283 = vadd.f32 %v262, %v281
    %s284 = scalar_lea.vmem %s0, 144
    %v285 = vld [vmem:[%s284] sm:$0xff]
    %v286 = vld [vmem:[%s284 + $0x8] sm:$0xff]
    %s287 = sld [smem:[#allocation2 + $0x9]]
    %v288 = vstv %s287
    %v289 = vmul.f32 %v288, %v285
    %v290 = vmul.f32 %v288, %v286
    %v291 = vadd.f32 %v270, %v289
    %v292 = vadd.f32 %v271, %v290
    %s293 = sld [smem:[#allocation2 + $0x89]]
    %v294 = vstv %s293
    %v295 = vmul.f32 %v294, %v285
    %v296 = vmul.f32 %v294, %v286
    %v297 = vadd.f32 %v276, %v295
    %v298 = vadd.f32 %v277, %v296
    %s299 = sld [smem:[#allocation2 + $0x109]]
    %v300 = vstv %s299
    %v301 = vmul.f32 %v300, %v285
    %v302 = vmul.f32 %v300, %v286
    %v303 = vadd.f32 %v282, %v301
    %v304 = vadd.f32 %v283, %v302
    %s305 = scalar_lea.vmem %s0, 160
    %v306 = vld [vmem:[%s305] sm:$0xff]
    %v307 = vld [vmem:[%s305 + $0x8] sm:$0xff]
    %s308 = sld [smem:[#allocation2 + $0xa]]
    %v309 = vstv %s308
    %v310 = vmul.f32 %v309, %v306
    %v311 = vmul.f32 %v309, %v307
    %v312 = vadd.f32 %v291, %v310
    %v313 = vadd.f32 %v292, %v311
    %s314 = sld [smem:[#allocation2 + $0x8a]]
    %v315 = vstv %s314
    %v316 = vmul.f32 %v315, %v306
    %v317 = vmul.f32 %v315, %v307
    %v318 = vadd.f32 %v297, %v316
    %v319 = vadd.f32 %v298, %v317
    %s320 = sld [smem:[#allocation2 + $0x10a]]
    %v321 = vstv %s320
    %v322 = vmul.f32 %v321, %v306
    %v323 = vmul.f32 %v321, %v307
    %v324 = vadd.f32 %v303, %v322
    %v325 = vadd.f32 %v304, %v323
    %s326 = scalar_lea.vmem %s0, 176
    %v327 = vld [vmem:[%s326] sm:$0xff]
    %v328 = vld [vmem:[%s326 + $0x8] sm:$0xff]
    %s329 = sld [smem:[#allocation2 + $0xb]]
    %v330 = vstv %s329
    %v331 = vmul.f32 %v330, %v327
    %v332 = vmul.f32 %v330, %v328
    %v333 = vadd.f32 %v312, %v331
    %v334 = vadd.f32 %v313, %v332
    %s335 = sld [smem:[#allocation2 + $0x8b]]
    %v336 = vstv %s335
    %v337 = vmul.f32 %v336, %v327
    %v338 = vmul.f32 %v336, %v328
    %v339 = vadd.f32 %v318, %v337
    %v340 = vadd.f32 %v319, %v338
    %s341 = sld [smem:[#allocation2 + $0x10b]]
    %v342 = vstv %s341
    %v343 = vmul.f32 %v342, %v327
    %v344 = vmul.f32 %v342, %v328
    %v345 = vadd.f32 %v324, %v343
    %v346 = vadd.f32 %v325, %v344
    %s347 = scalar_lea.vmem %s0, 192
    %v348 = vld [vmem:[%s347] sm:$0xff]
    %v349 = vld [vmem:[%s347 + $0x8] sm:$0xff]
    %s350 = sld [smem:[#allocation2 + $0xc]]
    %v351 = vstv %s350
    %v352 = vmul.f32 %v351, %v348
    %v353 = vmul.f32 %v351, %v349
    %v354 = vadd.f32 %v333, %v352
    %v355 = vadd.f32 %v334, %v353
    %s356 = sld [smem:[#allocation2 + $0x8c]]
    %v357 = vstv %s356
    %v358 = vmul.f32 %v357, %v348
    %v359 = vmul.f32 %v357, %v349
    %v360 = vadd.f32 %v339, %v358
    %v361 = vadd.f32 %v340, %v359
    %s362 = sld [smem:[#allocation2 + $0x10c]]
    %v363 = vstv %s362
    %v364 = vmul.f32 %v363, %v348
    %v365 = vmul.f32 %v363, %v349
    %v366 = vadd.f32 %v345, %v364
    %v367 = vadd.f32 %v346, %v365
    %s368 = scalar_lea.vmem %s0, 208
    %v369 = vld [vmem:[%s368] sm:$0xff]
    %v370 = vld [vmem:[%s368 + $0x8] sm:$0xff]
    %s371 = sld [smem:[#allocation2 + $0xd]]
    %v372 = vstv %s371
    %v373 = vmul.f32 %v372, %v369
    %v374 = vmul.f32 %v372, %v370
    %v375 = vadd.f32 %v354, %v373
    %v376 = vadd.f32 %v355, %v374
    %s377 = sld [smem:[#allocation2 + $0x8d]]
    %v378 = vstv %s377
    %v379 = vmul.f32 %v378, %v369
    %v380 = vmul.f32 %v378, %v370
    %v381 = vadd.f32 %v360, %v379
    %v382 = vadd.f32 %v361, %v380
    %s383 = sld [smem:[#allocation2 + $0x10d]]
    %v384 = vstv %s383
    %v385 = vmul.f32 %v384, %v369
    %v386 = vmul.f32 %v384, %v370
    %v387 = vadd.f32 %v366, %v385
    %v388 = vadd.f32 %v367, %v386
    %s389 = scalar_lea.vmem %s0, 224
    %v390 = vld [vmem:[%s389] sm:$0xff]
    %v391 = vld [vmem:[%s389 + $0x8] sm:$0xff]
    %s392 = sld [smem:[#allocation2 + $0xe]]
    %v393 = vstv %s392
    %v394 = vmul.f32 %v393, %v390
    %v395 = vmul.f32 %v393, %v391
    %v396 = vadd.f32 %v375, %v394
    %v397 = vadd.f32 %v376, %v395
    %s398 = sld [smem:[#allocation2 + $0x8e]]
    %v399 = vstv %s398
    %v400 = vmul.f32 %v399, %v390
    %v401 = vmul.f32 %v399, %v391
    %v402 = vadd.f32 %v381, %v400
    %v403 = vadd.f32 %v382, %v401
    %s404 = sld [smem:[#allocation2 + $0x10e]]
    %v405 = vstv %s404
    %v406 = vmul.f32 %v405, %v390
    %v407 = vmul.f32 %v405, %v391
    %v408 = vadd.f32 %v387, %v406
    %v409 = vadd.f32 %v388, %v407
    %s410 = scalar_lea.vmem %s0, 240
    %v411 = vld [vmem:[%s410] sm:$0xff]
    %v412 = vld [vmem:[%s410 + $0x8] sm:$0xff]
    %s413 = sld [smem:[#allocation2 + $0xf]]
    %v414 = vstv %s413
    %v415 = vmul.f32 %v414, %v411
    %v416 = vmul.f32 %v414, %v412
    %v417 = vadd.f32 %v396, %v415
    %v418 = vadd.f32 %v397, %v416
    %s419 = sld [smem:[#allocation2 + $0x8f]]
    %v420 = vstv %s419
    %v421 = vmul.f32 %v420, %v411
    %v422 = vmul.f32 %v420, %v412
    %v423 = vadd.f32 %v402, %v421
    %v424 = vadd.f32 %v403, %v422
    %s425 = sld [smem:[#allocation2 + $0x10f]]
    %v426 = vstv %s425
    %v427 = vmul.f32 %v426, %v411
    %v428 = vmul.f32 %v426, %v412
    %v429 = vadd.f32 %v408, %v427
    %v430 = vadd.f32 %v409, %v428
    %s431 = scalar_lea.vmem %s0, 256
    %v432 = vld [vmem:[%s431] sm:$0xff]
    %v433 = vld [vmem:[%s431 + $0x8] sm:$0xff]
    %s434 = sld [smem:[#allocation2 + $0x10]]
    %v435 = vstv %s434
    %v436 = vmul.f32 %v435, %v432
    %v437 = vmul.f32 %v435, %v433
    %v438 = vadd.f32 %v417, %v436
    %v439 = vadd.f32 %v418, %v437
    %s440 = sld [smem:[#allocation2 + $0x90]]
    %v441 = vstv %s440
    %v442 = vmul.f32 %v441, %v432
    %v443 = vmul.f32 %v441, %v433
    %v444 = vadd.f32 %v423, %v442
    %v445 = vadd.f32 %v424, %v443
    %s446 = sld [smem:[#allocation2 + $0x110]]
    %v447 = vstv %s446
    %v448 = vmul.f32 %v447, %v432
    %v449 = vmul.f32 %v447, %v433
    %v450 = vadd.f32 %v429, %v448
    %v451 = vadd.f32 %v430, %v449
    %s452 = scalar_lea.vmem %s0, 272
    %v453 = vld [vmem:[%s452] sm:$0xff]
    %v454 = vld [vmem:[%s452 + $0x8] sm:$0xff]
    %s455 = sld [smem:[#allocation2 + $0x11]]
    %v456 = vstv %s455
    %v457 = vmul.f32 %v456, %v453
    %v458 = vmul.f32 %v456, %v454
    %v459 = vadd.f32 %v438, %v457
    %v460 = vadd.f32 %v439, %v458
    %s461 = sld [smem:[#allocation2 + $0x91]]
    %v462 = vstv %s461
    %v463 = vmul.f32 %v462, %v453
    %v464 = vmul.f32 %v462, %v454
    %v465 = vadd.f32 %v444, %v463
    %v466 = vadd.f32 %v445, %v464
    %s467 = sld [smem:[#allocation2 + $0x111]]
    %v468 = vstv %s467
    %v469 = vmul.f32 %v468, %v453
    %v470 = vmul.f32 %v468, %v454
    %v471 = vadd.f32 %v450, %v469
    %v472 = vadd.f32 %v451, %v470
    %s473 = scalar_lea.vmem %s0, 288
    %v474 = vld [vmem:[%s473] sm:$0xff]
    %v475 = vld [vmem:[%s473 + $0x8] sm:$0xff]
    %s476 = sld [smem:[#allocation2 + $0x12]]
    %v477 = vstv %s476
    %v478 = vmul.f32 %v477, %v474
    %v479 = vmul.f32 %v477, %v475
    %v480 = vadd.f32 %v459, %v478
    %v481 = vadd.f32 %v460, %v479
    %s482 = sld [smem:[#allocation2 + $0x92]]
    %v483 = vstv %s482
    %v484 = vmul.f32 %v483, %v474
    %v485 = vmul.f32 %v483, %v475
    %v486 = vadd.f32 %v465, %v484
    %v487 = vadd.f32 %v466, %v485
    %s488 = sld [smem:[#allocation2 + $0x112]]
    %v489 = vstv %s488
    %v490 = vmul.f32 %v489, %v474
    %v491 = vmul.f32 %v489, %v475
    %v492 = vadd.f32 %v471, %v490
    %v493 = vadd.f32 %v472, %v491
    %s494 = scalar_lea.vmem %s0, 304
    %v495 = vld [vmem:[%s494] sm:$0xff]
    %v496 = vld [vmem:[%s494 + $0x8] sm:$0xff]
    %s497 = sld [smem:[#allocation2 + $0x13]]
    %v498 = vstv %s497
    %v499 = vmul.f32 %v498, %v495
    %v500 = vmul.f32 %v498, %v496
    %v501 = vadd.f32 %v480, %v499
    %v502 = vadd.f32 %v481, %v500
    %s503 = sld [smem:[#allocation2 + $0x93]]
    %v504 = vstv %s503
    %v505 = vmul.f32 %v504, %v495
    %v506 = vmul.f32 %v504, %v496
    %v507 = vadd.f32 %v486, %v505
    %v508 = vadd.f32 %v487, %v506
    %s509 = sld [smem:[#allocation2 + $0x113]]
    %v510 = vstv %s509
    %v511 = vmul.f32 %v510, %v495
    %v512 = vmul.f32 %v510, %v496
    %v513 = vadd.f32 %v492, %v511
    %v514 = vadd.f32 %v493, %v512
    %s515 = scalar_lea.vmem %s0, 320
    %v516 = vld [vmem:[%s515] sm:$0xff]
    %v517 = vld [vmem:[%s515 + $0x8] sm:$0xff]
    %s518 = sld [smem:[#allocation2 + $0x14]]
    %v519 = vstv %s518
    %v520 = vmul.f32 %v519, %v516
    %v521 = vmul.f32 %v519, %v517
    %v522 = vadd.f32 %v501, %v520
    %v523 = vadd.f32 %v502, %v521
    %s524 = sld [smem:[#allocation2 + $0x94]]
    %v525 = vstv %s524
    %v526 = vmul.f32 %v525, %v516
    %v527 = vmul.f32 %v525, %v517
    %v528 = vadd.f32 %v507, %v526
    %v529 = vadd.f32 %v508, %v527
    %s530 = sld [smem:[#allocation2 + $0x114]]
    %v531 = vstv %s530
    %v532 = vmul.f32 %v531, %v516
    %v533 = vmul.f32 %v531, %v517
    %v534 = vadd.f32 %v513, %v532
    %v535 = vadd.f32 %v514, %v533
    %s536 = scalar_lea.vmem %s0, 336
    %v537 = vld [vmem:[%s536] sm:$0xff]
    %v538 = vld [vmem:[%s536 + $0x8] sm:$0xff]
    %s539 = sld [smem:[#allocation2 + $0x15]]
    %v540 = vstv %s539
    %v541 = vmul.f32 %v540, %v537
    %v542 = vmul.f32 %v540, %v538
    %v543 = vadd.f32 %v522, %v541
    %v544 = vadd.f32 %v523, %v542
    %s545 = sld [smem:[#allocation2 + $0x95]]
    %v546 = vstv %s545
    %v547 = vmul.f32 %v546, %v537
    %v548 = vmul.f32 %v546, %v538
    %v549 = vadd.f32 %v528, %v547
    %v550 = vadd.f32 %v529, %v548
    %s551 = sld [smem:[#allocation2 + $0x115]]
    %v552 = vstv %s551
    %v553 = vmul.f32 %v552, %v537
    %v554 = vmul.f32 %v552, %v538
    %v555 = vadd.f32 %v534, %v553
    %v556 = vadd.f32 %v535, %v554
    %s557 = scalar_lea.vmem %s0, 352
    %v558 = vld [vmem:[%s557] sm:$0xff]
    %v559 = vld [vmem:[%s557 + $0x8] sm:$0xff]
    %s560 = sld [smem:[#allocation2 + $0x16]]
    %v561 = vstv %s560
    %v562 = vmul.f32 %v561, %v558
    %v563 = vmul.f32 %v561, %v559
    %v564 = vadd.f32 %v543, %v562
    %v565 = vadd.f32 %v544, %v563
    %s566 = sld [smem:[#allocation2 + $0x96]]
    %v567 = vstv %s566
    %v568 = vmul.f32 %v567, %v558
    %v569 = vmul.f32 %v567, %v559
    %v570 = vadd.f32 %v549, %v568
    %v571 = vadd.f32 %v550, %v569
    %s572 = sld [smem:[#allocation2 + $0x116]]
    %v573 = vstv %s572
    %v574 = vmul.f32 %v573, %v558
    %v575 = vmul.f32 %v573, %v559
    %v576 = vadd.f32 %v555, %v574
    %v577 = vadd.f32 %v556, %v575
    %s578 = scalar_lea.vmem %s0, 368
    %v579 = vld [vmem:[%s578] sm:$0xff]
    %v580 = vld [vmem:[%s578 + $0x8] sm:$0xff]
    %s581 = sld [smem:[#allocation2 + $0x17]]
    %v582 = vstv %s581
    %v583 = vmul.f32 %v582, %v579
    %v584 = vmul.f32 %v582, %v580
    %v585 = vadd.f32 %v564, %v583
    %v586 = vadd.f32 %v565, %v584
    %s587 = sld [smem:[#allocation2 + $0x97]]
    %v588 = vstv %s587
    %v589 = vmul.f32 %v588, %v579
    %v590 = vmul.f32 %v588, %v580
    %v591 = vadd.f32 %v570, %v589
    %v592 = vadd.f32 %v571, %v590
    %s593 = sld [smem:[#allocation2 + $0x117]]
    %v594 = vstv %s593
    %v595 = vmul.f32 %v594, %v579
    %v596 = vmul.f32 %v594, %v580
    %v597 = vadd.f32 %v576, %v595
    %v598 = vadd.f32 %v577, %v596
    %s599 = scalar_lea.vmem %s0, 384
    %v600 = vld [vmem:[%s599] sm:$0xff]
    %v601 = vld [vmem:[%s599 + $0x8] sm:$0xff]
    %s602 = sld [smem:[#allocation2 + $0x18]]
    %v603 = vstv %s602
    %v604 = vmul.f32 %v603, %v600
    %v605 = vmul.f32 %v603, %v601
    %v606 = vadd.f32 %v585, %v604
    %v607 = vadd.f32 %v586, %v605
    %s608 = sld [smem:[#allocation2 + $0x98]]
    %v609 = vstv %s608
    %v610 = vmul.f32 %v609, %v600
    %v611 = vmul.f32 %v609, %v601
    %v612 = vadd.f32 %v591, %v610
    %v613 = vadd.f32 %v592, %v611
    %s614 = sld [smem:[#allocation2 + $0x118]]
    %v615 = vstv %s614
    %v616 = vmul.f32 %v615, %v600
    %v617 = vmul.f32 %v615, %v601
    %v618 = vadd.f32 %v597, %v616
    %v619 = vadd.f32 %v598, %v617
    %s620 = scalar_lea.vmem %s0, 400
    %v621 = vld [vmem:[%s620] sm:$0xff]
    %v622 = vld [vmem:[%s620 + $0x8] sm:$0xff]
    %s623 = sld [smem:[#allocation2 + $0x19]]
    %v624 = vstv %s623
    %v625 = vmul.f32 %v624, %v621
    %v626 = vmul.f32 %v624, %v622
    %v627 = vadd.f32 %v606, %v625
    %v628 = vadd.f32 %v607, %v626
    %s629 = sld [smem:[#allocation2 + $0x99]]
    %v630 = vstv %s629
    %v631 = vmul.f32 %v630, %v621
    %v632 = vmul.f32 %v630, %v622
    %v633 = vadd.f32 %v612, %v631
    %v634 = vadd.f32 %v613, %v632
    %s635 = sld [smem:[#allocation2 + $0x119]]
    %v636 = vstv %s635
    %v637 = vmul.f32 %v636, %v621
    %v638 = vmul.f32 %v636, %v622
    %v639 = vadd.f32 %v618, %v637
    %v640 = vadd.f32 %v619, %v638
    %s641 = scalar_lea.vmem %s0, 416
    %v642 = vld [vmem:[%s641] sm:$0xff]
    %v643 = vld [vmem:[%s641 + $0x8] sm:$0xff]
    %s644 = sld [smem:[#allocation2 + $0x1a]]
    %v645 = vstv %s644
    %v646 = vmul.f32 %v645, %v642
    %v647 = vmul.f32 %v645, %v643
    %v648 = vadd.f32 %v627, %v646
    %v649 = vadd.f32 %v628, %v647
    %s650 = sld [smem:[#allocation2 + $0x9a]]
    %v651 = vstv %s650
    %v652 = vmul.f32 %v651, %v642
    %v653 = vmul.f32 %v651, %v643
    %v654 = vadd.f32 %v633, %v652
    %v655 = vadd.f32 %v634, %v653
    %s656 = sld [smem:[#allocation2 + $0x11a]]
    %v657 = vstv %s656
    %v658 = vmul.f32 %v657, %v642
    %v659 = vmul.f32 %v657, %v643
    %v660 = vadd.f32 %v639, %v658
    %v661 = vadd.f32 %v640, %v659
    %s662 = scalar_lea.vmem %s0, 432
    %v663 = vld [vmem:[%s662] sm:$0xff]
    %v664 = vld [vmem:[%s662 + $0x8] sm:$0xff]
    %s665 = sld [smem:[#allocation2 + $0x1b]]
    %v666 = vstv %s665
    %v667 = vmul.f32 %v666, %v663
    %v668 = vmul.f32 %v666, %v664
    %v669 = vadd.f32 %v648, %v667
    %v670 = vadd.f32 %v649, %v668
    %s671 = sld [smem:[#allocation2 + $0x9b]]
    %v672 = vstv %s671
    %v673 = vmul.f32 %v672, %v663
    %v674 = vmul.f32 %v672, %v664
    %v675 = vadd.f32 %v654, %v673
    %v676 = vadd.f32 %v655, %v674
    %s677 = sld [smem:[#allocation2 + $0x11b]]
    %v678 = vstv %s677
    %v679 = vmul.f32 %v678, %v663
    %v680 = vmul.f32 %v678, %v664
    %v681 = vadd.f32 %v660, %v679
    %v682 = vadd.f32 %v661, %v680
    %s683 = scalar_lea.vmem %s0, 448
    %v684 = vld [vmem:[%s683] sm:$0xff]
    %v685 = vld [vmem:[%s683 + $0x8] sm:$0xff]
    %s686 = sld [smem:[#allocation2 + $0x1c]]
    %v687 = vstv %s686
    %v688 = vmul.f32 %v687, %v684
    %v689 = vmul.f32 %v687, %v685
    %v690 = vadd.f32 %v669, %v688
    %v691 = vadd.f32 %v670, %v689
    %s692 = sld [smem:[#allocation2 + $0x9c]]
    %v693 = vstv %s692
    %v694 = vmul.f32 %v693, %v684
    %v695 = vmul.f32 %v693, %v685
    %v696 = vadd.f32 %v675, %v694
    %v697 = vadd.f32 %v676, %v695
    %s698 = sld [smem:[#allocation2 + $0x11c]]
    %v699 = vstv %s698
    %v700 = vmul.f32 %v699, %v684
    %v701 = vmul.f32 %v699, %v685
    %v702 = vadd.f32 %v681, %v700
    %v703 = vadd.f32 %v682, %v701
    %s704 = scalar_lea.vmem %s0, 464
    %v705 = vld [vmem:[%s704] sm:$0xff]
    %v706 = vld [vmem:[%s704 + $0x8] sm:$0xff]
    %s707 = sld [smem:[#allocation2 + $0x1d]]
    %v708 = vstv %s707
    %v709 = vmul.f32 %v708, %v705
    %v710 = vmul.f32 %v708, %v706
    %v711 = vadd.f32 %v690, %v709
    %v712 = vadd.f32 %v691, %v710
    %s713 = sld [smem:[#allocation2 + $0x9d]]
    %v714 = vstv %s713
    %v715 = vmul.f32 %v714, %v705
    %v716 = vmul.f32 %v714, %v706
    %v717 = vadd.f32 %v696, %v715
    %v718 = vadd.f32 %v697, %v716
    %s719 = sld [smem:[#allocation2 + $0x11d]]
    %v720 = vstv %s719
    %v721 = vmul.f32 %v720, %v705
    %v722 = vmul.f32 %v720, %v706
    %v723 = vadd.f32 %v702, %v721
    %v724 = vadd.f32 %v703, %v722
    %s725 = scalar_lea.vmem %s0, 480
    %v726 = vld [vmem:[%s725] sm:$0xff]
    %v727 = vld [vmem:[%s725 + $0x8] sm:$0xff]
    %s728 = sld [smem:[#allocation2 + $0x1e]]
    %v729 = vstv %s728
    %v730 = vmul.f32 %v729, %v726
    %v731 = vmul.f32 %v729, %v727
    %v732 = vadd.f32 %v711, %v730
    %v733 = vadd.f32 %v712, %v731
    %s734 = sld [smem:[#allocation2 + $0x9e]]
    %v735 = vstv %s734
    %v736 = vmul.f32 %v735, %v726
    %v737 = vmul.f32 %v735, %v727
    %v738 = vadd.f32 %v717, %v736
    %v739 = vadd.f32 %v718, %v737
    %s740 = sld [smem:[#allocation2 + $0x11e]]
    %v741 = vstv %s740
    %v742 = vmul.f32 %v741, %v726
    %v743 = vmul.f32 %v741, %v727
    %v744 = vadd.f32 %v723, %v742
    %v745 = vadd.f32 %v724, %v743
    %s746 = scalar_lea.vmem %s0, 496
    %v747 = vld [vmem:[%s746] sm:$0xff]
    %v748 = vld [vmem:[%s746 + $0x8] sm:$0xff]
    %s749 = sld [smem:[#allocation2 + $0x1f]]
    %v750 = vstv %s749
    %v751 = vmul.f32 %v750, %v747
    %v752 = vmul.f32 %v750, %v748
    %v753 = vadd.f32 %v732, %v751
    %v754 = vadd.f32 %v733, %v752
    %s755 = sld [smem:[#allocation2 + $0x9f]]
    %v756 = vstv %s755
    %v757 = vmul.f32 %v756, %v747
    %v758 = vmul.f32 %v756, %v748
    %v759 = vadd.f32 %v738, %v757
    %v760 = vadd.f32 %v739, %v758
    %s761 = sld [smem:[#allocation2 + $0x11f]]
    %v762 = vstv %s761
    %v763 = vmul.f32 %v762, %v747
    %v764 = vmul.f32 %v762, %v748
    %v765 = vadd.f32 %v744, %v763
    %v766 = vadd.f32 %v745, %v764
    %s767 = scalar_lea.vmem %s0, 512
    %v768 = vld [vmem:[%s767] sm:$0xff]
    %v769 = vld [vmem:[%s767 + $0x8] sm:$0xff]
    %s770 = sld [smem:[#allocation2 + $0x20]]
    %v771 = vstv %s770
    %v772 = vmul.f32 %v771, %v768
    %v773 = vmul.f32 %v771, %v769
    %v774 = vadd.f32 %v753, %v772
    %v775 = vadd.f32 %v754, %v773
    %s776 = sld [smem:[#allocation2 + $0xa0]]
    %v777 = vstv %s776
    %v778 = vmul.f32 %v777, %v768
    %v779 = vmul.f32 %v777, %v769
    %v780 = vadd.f32 %v759, %v778
    %v781 = vadd.f32 %v760, %v779
    %s782 = sld [smem:[#allocation2 + $0x120]]
    %v783 = vstv %s782
    %v784 = vmul.f32 %v783, %v768
    %v785 = vmul.f32 %v783, %v769
    %v786 = vadd.f32 %v765, %v784
    %v787 = vadd.f32 %v766, %v785
    %s788 = scalar_lea.vmem %s0, 528
    %v789 = vld [vmem:[%s788] sm:$0xff]
    %v790 = vld [vmem:[%s788 + $0x8] sm:$0xff]
    %s791 = sld [smem:[#allocation2 + $0x21]]
    %v792 = vstv %s791
    %v793 = vmul.f32 %v792, %v789
    %v794 = vmul.f32 %v792, %v790
    %v795 = vadd.f32 %v774, %v793
    %v796 = vadd.f32 %v775, %v794
    %s797 = sld [smem:[#allocation2 + $0xa1]]
    %v798 = vstv %s797
    %v799 = vmul.f32 %v798, %v789
    %v800 = vmul.f32 %v798, %v790
    %v801 = vadd.f32 %v780, %v799
    %v802 = vadd.f32 %v781, %v800
    %s803 = sld [smem:[#allocation2 + $0x121]]
    %v804 = vstv %s803
    %v805 = vmul.f32 %v804, %v789
    %v806 = vmul.f32 %v804, %v790
    %v807 = vadd.f32 %v786, %v805
    %v808 = vadd.f32 %v787, %v806
    %s809 = scalar_lea.vmem %s0, 544
    %v810 = vld [vmem:[%s809] sm:$0xff]
    %v811 = vld [vmem:[%s809 + $0x8] sm:$0xff]
    %s812 = sld [smem:[#allocation2 + $0x22]]
    %v813 = vstv %s812
    %v814 = vmul.f32 %v813, %v810
    %v815 = vmul.f32 %v813, %v811
    %v816 = vadd.f32 %v795, %v814
    %v817 = vadd.f32 %v796, %v815
    %s818 = sld [smem:[#allocation2 + $0xa2]]
    %v819 = vstv %s818
    %v820 = vmul.f32 %v819, %v810
    %v821 = vmul.f32 %v819, %v811
    %v822 = vadd.f32 %v801, %v820
    %v823 = vadd.f32 %v802, %v821
    %s824 = sld [smem:[#allocation2 + $0x122]]
    %v825 = vstv %s824
    %v826 = vmul.f32 %v825, %v810
    %v827 = vmul.f32 %v825, %v811
    %v828 = vadd.f32 %v807, %v826
    %v829 = vadd.f32 %v808, %v827
    %s830 = scalar_lea.vmem %s0, 560
    %v831 = vld [vmem:[%s830] sm:$0xff]
    %v832 = vld [vmem:[%s830 + $0x8] sm:$0xff]
    %s833 = sld [smem:[#allocation2 + $0x23]]
    %v834 = vstv %s833
    %v835 = vmul.f32 %v834, %v831
    %v836 = vmul.f32 %v834, %v832
    %v837 = vadd.f32 %v816, %v835
    %v838 = vadd.f32 %v817, %v836
    %s839 = sld [smem:[#allocation2 + $0xa3]]
    %v840 = vstv %s839
    %v841 = vmul.f32 %v840, %v831
    %v842 = vmul.f32 %v840, %v832
    %v843 = vadd.f32 %v822, %v841
    %v844 = vadd.f32 %v823, %v842
    %s845 = sld [smem:[#allocation2 + $0x123]]
    %v846 = vstv %s845
    %v847 = vmul.f32 %v846, %v831
    %v848 = vmul.f32 %v846, %v832
    %v849 = vadd.f32 %v828, %v847
    %v850 = vadd.f32 %v829, %v848
    %s851 = scalar_lea.vmem %s0, 576
    %v852 = vld [vmem:[%s851] sm:$0xff]
    %v853 = vld [vmem:[%s851 + $0x8] sm:$0xff]
    %s854 = sld [smem:[#allocation2 + $0x24]]
    %v855 = vstv %s854
    %v856 = vmul.f32 %v855, %v852
    %v857 = vmul.f32 %v855, %v853
    %v858 = vadd.f32 %v837, %v856
    %v859 = vadd.f32 %v838, %v857
    %s860 = sld [smem:[#allocation2 + $0xa4]]
    %v861 = vstv %s860
    %v862 = vmul.f32 %v861, %v852
    %v863 = vmul.f32 %v861, %v853
    %v864 = vadd.f32 %v843, %v862
    %v865 = vadd.f32 %v844, %v863
    %s866 = sld [smem:[#allocation2 + $0x124]]
    %v867 = vstv %s866
    %v868 = vmul.f32 %v867, %v852
    %v869 = vmul.f32 %v867, %v853
    %v870 = vadd.f32 %v849, %v868
    %v871 = vadd.f32 %v850, %v869
    %s872 = scalar_lea.vmem %s0, 592
    %v873 = vld [vmem:[%s872] sm:$0xff]
    %v874 = vld [vmem:[%s872 + $0x8] sm:$0xff]
    %s875 = sld [smem:[#allocation2 + $0x25]]
    %v876 = vstv %s875
    %v877 = vmul.f32 %v876, %v873
    %v878 = vmul.f32 %v876, %v874
    %v879 = vadd.f32 %v858, %v877
    %v880 = vadd.f32 %v859, %v878
    %s881 = sld [smem:[#allocation2 + $0xa5]]
    %v882 = vstv %s881
    %v883 = vmul.f32 %v882, %v873
    %v884 = vmul.f32 %v882, %v874
    %v885 = vadd.f32 %v864, %v883
    %v886 = vadd.f32 %v865, %v884
    %s887 = sld [smem:[#allocation2 + $0x125]]
    %v888 = vstv %s887
    %v889 = vmul.f32 %v888, %v873
    %v890 = vmul.f32 %v888, %v874
    %v891 = vadd.f32 %v870, %v889
    %v892 = vadd.f32 %v871, %v890
    %s893 = scalar_lea.vmem %s0, 608
    %v894 = vld [vmem:[%s893] sm:$0xff]
    %v895 = vld [vmem:[%s893 + $0x8] sm:$0xff]
    %s896 = sld [smem:[#allocation2 + $0x26]]
    %v897 = vstv %s896
    %v898 = vmul.f32 %v897, %v894
    %v899 = vmul.f32 %v897, %v895
    %v900 = vadd.f32 %v879, %v898
    %v901 = vadd.f32 %v880, %v899
    %s902 = sld [smem:[#allocation2 + $0xa6]]
    %v903 = vstv %s902
    %v904 = vmul.f32 %v903, %v894
    %v905 = vmul.f32 %v903, %v895
    %v906 = vadd.f32 %v885, %v904
    %v907 = vadd.f32 %v886, %v905
    %s908 = sld [smem:[#allocation2 + $0x126]]
    %v909 = vstv %s908
    %v910 = vmul.f32 %v909, %v894
    %v911 = vmul.f32 %v909, %v895
    %v912 = vadd.f32 %v891, %v910
    %v913 = vadd.f32 %v892, %v911
    %s914 = scalar_lea.vmem %s0, 624
    %v915 = vld [vmem:[%s914] sm:$0xff]
    %v916 = vld [vmem:[%s914 + $0x8] sm:$0xff]
    %s917 = sld [smem:[#allocation2 + $0x27]]
    %v918 = vstv %s917
    %v919 = vmul.f32 %v918, %v915
    %v920 = vmul.f32 %v918, %v916
    %v921 = vadd.f32 %v900, %v919
    %v922 = vadd.f32 %v901, %v920
    %s923 = sld [smem:[#allocation2 + $0xa7]]
    %v924 = vstv %s923
    %v925 = vmul.f32 %v924, %v915
    %v926 = vmul.f32 %v924, %v916
    %v927 = vadd.f32 %v906, %v925
    %v928 = vadd.f32 %v907, %v926
    %s929 = sld [smem:[#allocation2 + $0x127]]
    %v930 = vstv %s929
    %v931 = vmul.f32 %v930, %v915
    %v932 = vmul.f32 %v930, %v916
    %v933 = vadd.f32 %v912, %v931
    %v934 = vadd.f32 %v913, %v932
    %s935 = scalar_lea.vmem %s0, 640
    %v936 = vld [vmem:[%s935] sm:$0xff]
    %v937 = vld [vmem:[%s935 + $0x8] sm:$0xff]
    %s938 = sld [smem:[#allocation2 + $0x28]]
    %v939 = vstv %s938
    %v940 = vmul.f32 %v939, %v936
    %v941 = vmul.f32 %v939, %v937
    %v942 = vadd.f32 %v921, %v940
    %v943 = vadd.f32 %v922, %v941
    %s944 = sld [smem:[#allocation2 + $0xa8]]
    %v945 = vstv %s944
    %v946 = vmul.f32 %v945, %v936
    %v947 = vmul.f32 %v945, %v937
    %v948 = vadd.f32 %v927, %v946
    %v949 = vadd.f32 %v928, %v947
    %s950 = sld [smem:[#allocation2 + $0x128]]
    %v951 = vstv %s950
    %v952 = vmul.f32 %v951, %v936
    %v953 = vmul.f32 %v951, %v937
    %v954 = vadd.f32 %v933, %v952
    %v955 = vadd.f32 %v934, %v953
    %s956 = scalar_lea.vmem %s0, 656
    %v957 = vld [vmem:[%s956] sm:$0xff]
    %v958 = vld [vmem:[%s956 + $0x8] sm:$0xff]
    %s959 = sld [smem:[#allocation2 + $0x29]]
    %v960 = vstv %s959
    %v961 = vmul.f32 %v960, %v957
    %v962 = vmul.f32 %v960, %v958
    %v963 = vadd.f32 %v942, %v961
    %v964 = vadd.f32 %v943, %v962
    %s965 = sld [smem:[#allocation2 + $0xa9]]
    %v966 = vstv %s965
    %v967 = vmul.f32 %v966, %v957
    %v968 = vmul.f32 %v966, %v958
    %v969 = vadd.f32 %v948, %v967
    %v970 = vadd.f32 %v949, %v968
    %s971 = sld [smem:[#allocation2 + $0x129]]
    %v972 = vstv %s971
    %v973 = vmul.f32 %v972, %v957
    %v974 = vmul.f32 %v972, %v958
    %v975 = vadd.f32 %v954, %v973
    %v976 = vadd.f32 %v955, %v974
    %s977 = scalar_lea.vmem %s0, 672
    %v978 = vld [vmem:[%s977] sm:$0xff]
    %v979 = vld [vmem:[%s977 + $0x8] sm:$0xff]
    %s980 = sld [smem:[#allocation2 + $0x2a]]
    %v981 = vstv %s980
    %v982 = vmul.f32 %v981, %v978
    %v983 = vmul.f32 %v981, %v979
    %v984 = vadd.f32 %v963, %v982
    %v985 = vadd.f32 %v964, %v983
    %s986 = sld [smem:[#allocation2 + $0xaa]]
    %v987 = vstv %s986
    %v988 = vmul.f32 %v987, %v978
    %v989 = vmul.f32 %v987, %v979
    %v990 = vadd.f32 %v969, %v988
    %v991 = vadd.f32 %v970, %v989
    %s992 = sld [smem:[#allocation2 + $0x12a]]
    %v993 = vstv %s992
    %v994 = vmul.f32 %v993, %v978
    %v995 = vmul.f32 %v993, %v979
    %v996 = vadd.f32 %v975, %v994
    %v997 = vadd.f32 %v976, %v995
    %s998 = scalar_lea.vmem %s0, 688
    %v999 = vld [vmem:[%s998] sm:$0xff]
    %v1000 = vld [vmem:[%s998 + $0x8] sm:$0xff]
    %s1001 = sld [smem:[#allocation2 + $0x2b]]
    %v1002 = vstv %s1001
    %v1003 = vmul.f32 %v1002, %v999
    %v1004 = vmul.f32 %v1002, %v1000
    %v1005 = vadd.f32 %v984, %v1003
    %v1006 = vadd.f32 %v985, %v1004
    %s1007 = sld [smem:[#allocation2 + $0xab]]
    %v1008 = vstv %s1007
    %v1009 = vmul.f32 %v1008, %v999
    %v1010 = vmul.f32 %v1008, %v1000
    %v1011 = vadd.f32 %v990, %v1009
    %v1012 = vadd.f32 %v991, %v1010
    %s1013 = sld [smem:[#allocation2 + $0x12b]]
    %v1014 = vstv %s1013
    %v1015 = vmul.f32 %v1014, %v999
    %v1016 = vmul.f32 %v1014, %v1000
    %v1017 = vadd.f32 %v996, %v1015
    %v1018 = vadd.f32 %v997, %v1016
    %s1019 = scalar_lea.vmem %s0, 704
    %v1020 = vld [vmem:[%s1019] sm:$0xff]
    %v1021 = vld [vmem:[%s1019 + $0x8] sm:$0xff]
    %s1022 = sld [smem:[#allocation2 + $0x2c]]
    %v1023 = vstv %s1022
    %v1024 = vmul.f32 %v1023, %v1020
    %v1025 = vmul.f32 %v1023, %v1021
    %v1026 = vadd.f32 %v1005, %v1024
    %v1027 = vadd.f32 %v1006, %v1025
    %s1028 = sld [smem:[#allocation2 + $0xac]]
    %v1029 = vstv %s1028
    %v1030 = vmul.f32 %v1029, %v1020
    %v1031 = vmul.f32 %v1029, %v1021
    %v1032 = vadd.f32 %v1011, %v1030
    %v1033 = vadd.f32 %v1012, %v1031
    %s1034 = sld [smem:[#allocation2 + $0x12c]]
    %v1035 = vstv %s1034
    %v1036 = vmul.f32 %v1035, %v1020
    %v1037 = vmul.f32 %v1035, %v1021
    %v1038 = vadd.f32 %v1017, %v1036
    %v1039 = vadd.f32 %v1018, %v1037
    %s1040 = scalar_lea.vmem %s0, 720
    %v1041 = vld [vmem:[%s1040] sm:$0xff]
    %v1042 = vld [vmem:[%s1040 + $0x8] sm:$0xff]
    %s1043 = sld [smem:[#allocation2 + $0x2d]]
    %v1044 = vstv %s1043
    %v1045 = vmul.f32 %v1044, %v1041
    %v1046 = vmul.f32 %v1044, %v1042
    %v1047 = vadd.f32 %v1026, %v1045
    %v1048 = vadd.f32 %v1027, %v1046
    %s1049 = sld [smem:[#allocation2 + $0xad]]
    %v1050 = vstv %s1049
    %v1051 = vmul.f32 %v1050, %v1041
    %v1052 = vmul.f32 %v1050, %v1042
    %v1053 = vadd.f32 %v1032, %v1051
    %v1054 = vadd.f32 %v1033, %v1052
    %s1055 = sld [smem:[#allocation2 + $0x12d]]
    %v1056 = vstv %s1055
    %v1057 = vmul.f32 %v1056, %v1041
    %v1058 = vmul.f32 %v1056, %v1042
    %v1059 = vadd.f32 %v1038, %v1057
    %v1060 = vadd.f32 %v1039, %v1058
    %s1061 = scalar_lea.vmem %s0, 736
    %v1062 = vld [vmem:[%s1061] sm:$0xff]
    %v1063 = vld [vmem:[%s1061 + $0x8] sm:$0xff]
    %s1064 = sld [smem:[#allocation2 + $0x2e]]
    %v1065 = vstv %s1064
    %v1066 = vmul.f32 %v1065, %v1062
    %v1067 = vmul.f32 %v1065, %v1063
    %v1068 = vadd.f32 %v1047, %v1066
    %v1069 = vadd.f32 %v1048, %v1067
    %s1070 = sld [smem:[#allocation2 + $0xae]]
    %v1071 = vstv %s1070
    %v1072 = vmul.f32 %v1071, %v1062
    %v1073 = vmul.f32 %v1071, %v1063
    %v1074 = vadd.f32 %v1053, %v1072
    %v1075 = vadd.f32 %v1054, %v1073
    %s1076 = sld [smem:[#allocation2 + $0x12e]]
    %v1077 = vstv %s1076
    %v1078 = vmul.f32 %v1077, %v1062
    %v1079 = vmul.f32 %v1077, %v1063
    %v1080 = vadd.f32 %v1059, %v1078
    %v1081 = vadd.f32 %v1060, %v1079
    %s1082 = scalar_lea.vmem %s0, 752
    %v1083 = vld [vmem:[%s1082] sm:$0xff]
    %v1084 = vld [vmem:[%s1082 + $0x8] sm:$0xff]
    %s1085 = sld [smem:[#allocation2 + $0x2f]]
    %v1086 = vstv %s1085
    %v1087 = vmul.f32 %v1086, %v1083
    %v1088 = vmul.f32 %v1086, %v1084
    %v1089 = vadd.f32 %v1068, %v1087
    %v1090 = vadd.f32 %v1069, %v1088
    %s1091 = sld [smem:[#allocation2 + $0xaf]]
    %v1092 = vstv %s1091
    %v1093 = vmul.f32 %v1092, %v1083
    %v1094 = vmul.f32 %v1092, %v1084
    %v1095 = vadd.f32 %v1074, %v1093
    %v1096 = vadd.f32 %v1075, %v1094
    %s1097 = sld [smem:[#allocation2 + $0x12f]]
    %v1098 = vstv %s1097
    %v1099 = vmul.f32 %v1098, %v1083
    %v1100 = vmul.f32 %v1098, %v1084
    %v1101 = vadd.f32 %v1080, %v1099
    %v1102 = vadd.f32 %v1081, %v1100
    %v1103 = vld [vmem:[%s6] sm:$0x1]
    %v1105 = vlaneseq
    %v1106 = vshrl.u32 %v1105, 7
    %v1107 = vsub.s32 0, %v1106
    %v1108 = vrot.slane %v1103, %v1107
    %v1110 = vadd.f32 %v1108, 0.0
    %v1111 = vadd.f32 %v1089, %v1090
    %1112 = vadd.xlane.f32.xlu0 %v1111
    %v1113 = vpop.xlane.xlu0 %1112
    %v1114 = vrcp.pop 256.0
    %v1115 = vmul.f32 %v1113, %v1114
    %v1116 = vrot.slane %v1115, 4
    %v1117 = vadd.f32 %v1115, %v1116
    %v1118 = vrot.slane %v1117, 2
    %v1119 = vadd.f32 %v1117, %v1118
    %v1120 = vrot.slane %v1119, 1
    %v1121 = vadd.f32 %v1119, %v1120
    %v1122 = vrcp.pop 8.0
    %v1123 = vmul.f32 %v1121, %v1122
    %v1124 = vsub.f32 %v1089, %v1123
    %v1125 = vsub.f32 %v1090, %v1123
    %v1126 = vmul.f32 %v1124, %v1124
    %v1127 = vmul.f32 %v1125, %v1125
    %v1128 = vadd.f32 %v1126, %v1127
    %1129 = vadd.xlane.f32.xlu0 %v1128
    %v1130 = vpop.xlane.xlu0 %1129
    %v1131 = vmul.f32 %v1130, %v1114
    %v1132 = vrot.slane %v1131, 4
    %v1133 = vadd.f32 %v1131, %v1132
    %v1134 = vrot.slane %v1133, 2
    %v1135 = vadd.f32 %v1133, %v1134
    %v1136 = vrot.slane %v1135, 1
    %v1137 = vadd.f32 %v1135, %v1136
    %v1138 = vmul.f32 %v1137, %v1122
    %v1139 = vadd.f32 %v1138, 1e-05
    %v1140 = vrsqrt.pop %v1139
    %v1141 = vmul.f32 %v1124, %v1140
    %v1142 = vmul.f32 %v1125, %v1140
    %s1143 = sld [smem:[#allocation7]]
    %v1144 = vstv %s1143
    %v1145 = vmul.f32 %v1141, %v1144
    %v1146 = vmul.f32 %v1142, %v1144
    %s1147 = sld [smem:[#allocation8]]
    %v1148 = vstv %s1147
    %v1149 = vadd.f32 %v1145, %v1148
    %v1150 = vadd.f32 %v1146, %v1148
    %vm1151 = vcmp.ge.f32.partialorder %v1149, 0.0
    %vm1152 = vcmp.ge.f32.partialorder %v1150, 0.0
    %v1153 = vmul.f32 %v1149, 0.01
    %v1154 = vmul.f32 %v1150, 0.01
    %v1155 = vsel %vm1151, %v1149, %v1153
    %v1156 = vsel %vm1152, %v1150, %v1154
    %v1157 = vld [vmem:[%s5] sm:$0xff]
    %v1158 = vld [vmem:[%s5 + $0x8] sm:$0xff]
    %v1159 = vld [vmem:[%s5 + $0x10] sm:$0xff]
    %v1160 = vld [vmem:[%s5 + $0x18] sm:$0xff]
    %v1161 = vld [vmem:[%s5 + $0x20] sm:$0xff]
    %v1162 = vld [vmem:[%s5 + $0x28] sm:$0xff]
    %v1163 = vld [vmem:[%s5 + $0x30] sm:$0xff]
    %v1164 = vld [vmem:[%s5 + $0x38] sm:$0xff]
    %v1165 = vld [vmem:[%s5 + $0x40] sm:$0xff]
    %v1166 = vld [vmem:[%s5 + $0x48] sm:$0xff]
    %v1167 = vld [vmem:[%s5 + $0x50] sm:$0xff]
    %v1168 = vld [vmem:[%s5 + $0x58] sm:$0xff]
    %v1169 = vld [vmem:[%s5 + $0x60] sm:$0xff]
    %v1170 = vld [vmem:[%s5 + $0x68] sm:$0xff]
    %v1171 = vld [vmem:[%s5 + $0x70] sm:$0xff]
    %v1172 = vld [vmem:[%s5 + $0x78] sm:$0xff]
    %v1173 = vld [vmem:[%s5 + $0x80] sm:$0xff]
    %v1174 = vld [vmem:[%s5 + $0x88] sm:$0xff]
    %v1175 = vld [vmem:[%s5 + $0x90] sm:$0xff]
    %v1176 = vld [vmem:[%s5 + $0x98] sm:$0xff]
    %v1177 = vld [vmem:[%s5 + $0xa0] sm:$0xff]
    %v1178 = vld [vmem:[%s5 + $0xa8] sm:$0xff]
    %v1179 = vld [vmem:[%s5 + $0xb0] sm:$0xff]
    %v1180 = vld [vmem:[%s5 + $0xb8] sm:$0xff]
    %v1181 = vld [vmem:[%s5 + $0xc0] sm:$0xff]
    %v1182 = vld [vmem:[%s5 + $0xc8] sm:$0xff]
    %v1183 = vld [vmem:[%s5 + $0xd0] sm:$0xff]
    %v1184 = vld [vmem:[%s5 + $0xd8] sm:$0xff]
    %v1185 = vld [vmem:[%s5 + $0xe0] sm:$0xff]
    %v1186 = vld [vmem:[%s5 + $0xe8] sm:$0xff]
    %v1187 = vld [vmem:[%s5 + $0xf0] sm:$0xff]
    %v1188 = vld [vmem:[%s5 + $0xf8] sm:$0xff]
    %1189 = vmatprep.subr.mxu0 0.0
    %1190 = vmatpush1.msra.mxu0 %v1157
    %1191 = vmatprep.subr.mxu0 0.0
    %1192 = vmatpush1.msra.mxu0 %v1158
    %1193 = vmatprep.subr.mxu0 0.0
    %1194 = vmatpush1.msra.mxu0 %v1159
    %1195 = vmatprep.subr.mxu0 0.0
    %1196 = vmatpush1.msra.mxu0 %v1160
    %1197 = vmatprep.subr.mxu0 0.0
    %1198 = vmatpush1.msra.mxu0 %v1161
    %1199 = vmatprep.subr.mxu0 0.0
    %1200 = vmatpush1.msra.mxu0 %v1162
    %1201 = vmatprep.subr.mxu0 0.0
    %1202 = vmatpush1.msra.mxu0 %v1163
    %1203 = vmatprep.subr.mxu0 0.0
    %1204 = vmatpush1.msra.mxu0 %v1164
    %1205 = vmatprep.subr.mxu0 0.0
    %1206 = vmatpush1.msra.mxu0 %v1165
    %1207 = vmatprep.subr.mxu0 0.0
    %1208 = vmatpush1.msra.mxu0 %v1166
    %1209 = vmatprep.subr.mxu0 0.0
    %1210 = vmatpush1.msra.mxu0 %v1167
    %1211 = vmatprep.subr.mxu0 0.0
    %1212 = vmatpush1.msra.mxu0 %v1168
    %1213 = vmatprep.subr.mxu0 0.0
    %1214 = vmatpush1.msra.mxu0 %v1169
    %1215 = vmatprep.subr.mxu0 0.0
    %1216 = vmatpush1.msra.mxu0 %v1170
    %1217 = vmatprep.subr.mxu0 0.0
    %1218 = vmatpush1.msra.mxu0 %v1171
    %1219 = vmatprep.subr.mxu0 0.0
    %1220 = vmatpush1.msra.mxu0 %v1172
    %1221 = vmatprep.subr.mxu0 0.0
    %1222 = vmatpush1.msra.mxu0 %v1173
    %1223 = vmatprep.subr.mxu0 0.0
    %1224 = vmatpush1.msra.mxu0 %v1174
    %1225 = vmatprep.subr.mxu0 0.0
    %1226 = vmatpush1.msra.mxu0 %v1175
    %1227 = vmatprep.subr.mxu0 0.0
    %1228 = vmatpush1.msra.mxu0 %v1176
    %1229 = vmatprep.subr.mxu0 0.0
    %1230 = vmatpush1.msra.mxu0 %v1177
    %1231 = vmatprep.subr.mxu0 0.0
    %1232 = vmatpush1.msra.mxu0 %v1178
    %1233 = vmatprep.subr.mxu0 0.0
    %1234 = vmatpush1.msra.mxu0 %v1179
    %1235 = vmatprep.subr.mxu0 0.0
    %1236 = vmatpush1.msra.mxu0 %v1180
    %1237 = vmatprep.subr.mxu0 0.0
    %1238 = vmatpush1.msra.mxu0 %v1181
    %1239 = vmatprep.subr.mxu0 0.0
    %1240 = vmatpush1.msra.mxu0 %v1182
    %1241 = vmatprep.subr.mxu0 0.0
    %1242 = vmatpush1.msra.mxu0 %v1183
    %1243 = vmatprep.subr.mxu0 0.0
    %1244 = vmatpush1.msra.mxu0 %v1184
    %1245 = vmatprep.subr.mxu0 0.0
    %1246 = vmatpush1.msra.mxu0 %v1185
    %1247 = vmatprep.subr.mxu0 0.0
    %1248 = vmatpush1.msra.mxu0 %v1186
    %1249 = vmatprep.subr.mxu0 0.0
    %1250 = vmatpush1.msra.mxu0 %v1187
    %1251 = vmatprep.subr.mxu0 0.0
    %1252 = vmatpush1.msra.mxu0 %v1188
    %1253 = vmatprep.mubr.f32.mxu0 %v1156
    %1254 = vmatmul.mubr.f32.gmra.mrb[0].mxu0 %v1155
    %v1255 = vpop.f32.mrb[0].mxu0
    %v1256 = vadd.f32 0.0, %v1255
    %v1257 = vpop.f32.mrb[0].mxu0
    %1258 = vdwg.mxu0
    %v1259 = vadd.f32 %v1110, %v1256
    %v1260 = vadd.f32 %v1095, %v1096
    %1261 = vadd.xlane.f32.xlu0 %v1260
    %v1262 = vpop.xlane.xlu0 %1261
    %v1263 = vmul.f32 %v1262, %v1114
    %v1264 = vrot.slane %v1263, 4
    %v1265 = vadd.f32 %v1263, %v1264
    %v1266 = vrot.slane %v1265, 2
    %v1267 = vadd.f32 %v1265, %v1266
    %v1268 = vrot.slane %v1267, 1
    %v1269 = vadd.f32 %v1267, %v1268
    %v1270 = vmul.f32 %v1269, %v1122
    %v1271 = vsub.f32 %v1095, %v1270
    %v1272 = vsub.f32 %v1096, %v1270
    %v1273 = vmul.f32 %v1271, %v1271
    %v1274 = vmul.f32 %v1272, %v1272
    %v1275 = vadd.f32 %v1273, %v1274
    %1276 = vadd.xlane.f32.xlu0 %v1275
    %v1277 = vpop.xlane.xlu0 %1276
    %v1278 = vmul.f32 %v1277, %v1114
    %v1279 = vrot.slane %v1278, 4
    %v1280 = vadd.f32 %v1278, %v1279
    %v1281 = vrot.slane %v1280, 2
    %v1282 = vadd.f32 %v1280, %v1281
    %v1283 = vrot.slane %v1282, 1
    %v1284 = vadd.f32 %v1282, %v1283
    %v1285 = vmul.f32 %v1284, %v1122
    %v1286 = vadd.f32 %v1285, 1e-05
    %v1287 = vrsqrt.pop %v1286
    %v1288 = vmul.f32 %v1271, %v1287
    %v1289 = vmul.f32 %v1272, %v1287
    %s1290 = sld [smem:[#allocation7 + $0x1]]
    %v1291 = vstv %s1290
    %v1292 = vmul.f32 %v1288, %v1291
    %v1293 = vmul.f32 %v1289, %v1291
    %s1294 = sld [smem:[#allocation8 + $0x1]]
    %v1295 = vstv %s1294
    %v1296 = vadd.f32 %v1292, %v1295
    %v1297 = vadd.f32 %v1293, %v1295
    %vm1298 = vcmp.ge.f32.partialorder %v1296, 0.0
    %vm1299 = vcmp.ge.f32.partialorder %v1297, 0.0
    %v1300 = vmul.f32 %v1296, 0.01
    %v1301 = vmul.f32 %v1297, 0.01
    %v1302 = vsel %vm1298, %v1296, %v1300
    %v1303 = vsel %vm1299, %v1297, %v1301
    %v1304 = vld [vmem:[%s5 + $0x100] sm:$0xff]
    %v1305 = vld [vmem:[%s5 + $0x108] sm:$0xff]
    %v1306 = vld [vmem:[%s5 + $0x110] sm:$0xff]
    %v1307 = vld [vmem:[%s5 + $0x118] sm:$0xff]
    %v1308 = vld [vmem:[%s5 + $0x120] sm:$0xff]
    %v1309 = vld [vmem:[%s5 + $0x128] sm:$0xff]
    %v1310 = vld [vmem:[%s5 + $0x130] sm:$0xff]
    %v1311 = vld [vmem:[%s5 + $0x138] sm:$0xff]
    %v1312 = vld [vmem:[%s5 + $0x140] sm:$0xff]
    %v1313 = vld [vmem:[%s5 + $0x148] sm:$0xff]
    %v1314 = vld [vmem:[%s5 + $0x150] sm:$0xff]
    %v1315 = vld [vmem:[%s5 + $0x158] sm:$0xff]
    %v1316 = vld [vmem:[%s5 + $0x160] sm:$0xff]
    %v1317 = vld [vmem:[%s5 + $0x168] sm:$0xff]
    %v1318 = vld [vmem:[%s5 + $0x170] sm:$0xff]
    %v1319 = vld [vmem:[%s5 + $0x178] sm:$0xff]
    %v1320 = vld [vmem:[%s5 + $0x180] sm:$0xff]
    %v1321 = vld [vmem:[%s5 + $0x188] sm:$0xff]
    %v1322 = vld [vmem:[%s5 + $0x190] sm:$0xff]
    %v1323 = vld [vmem:[%s5 + $0x198] sm:$0xff]
    %v1324 = vld [vmem:[%s5 + $0x1a0] sm:$0xff]
    %v1325 = vld [vmem:[%s5 + $0x1a8] sm:$0xff]
    %v1326 = vld [vmem:[%s5 + $0x1b0] sm:$0xff]
    %v1327 = vld [vmem:[%s5 + $0x1b8] sm:$0xff]
    %v1328 = vld [vmem:[%s5 + $0x1c0] sm:$0xff]
    %v1329 = vld [vmem:[%s5 + $0x1c8] sm:$0xff]
    %v1330 = vld [vmem:[%s5 + $0x1d0] sm:$0xff]
    %v1331 = vld [vmem:[%s5 + $0x1d8] sm:$0xff]
    %v1332 = vld [vmem:[%s5 + $0x1e0] sm:$0xff]
    %v1333 = vld [vmem:[%s5 + $0x1e8] sm:$0xff]
    %v1334 = vld [vmem:[%s5 + $0x1f0] sm:$0xff]
    %v1335 = vld [vmem:[%s5 + $0x1f8] sm:$0xff]
    %1336 = vmatprep.subr.mxu0 0.0
    %1337 = vmatpush1.msra.mxu0 %v1304
    %1338 = vmatprep.subr.mxu0 0.0
    %1339 = vmatpush1.msra.mxu0 %v1305
    %1340 = vmatprep.subr.mxu0 0.0
    %1341 = vmatpush1.msra.mxu0 %v1306
    %1342 = vmatprep.subr.mxu0 0.0
    %1343 = vmatpush1.msra.mxu0 %v1307
    %1344 = vmatprep.subr.mxu0 0.0
    %1345 = vmatpush1.msra.mxu0 %v1308
    %1346 = vmatprep.subr.mxu0 0.0
    %1347 = vmatpush1.msra.mxu0 %v1309
    %1348 = vmatprep.subr.mxu0 0.0
    %1349 = vmatpush1.msra.mxu0 %v1310
    %1350 = vmatprep.subr.mxu0 0.0
    %1351 = vmatpush1.msra.mxu0 %v1311
    %1352 = vmatprep.subr.mxu0 0.0
    %1353 = vmatpush1.msra.mxu0 %v1312
    %1354 = vmatprep.subr.mxu0 0.0
    %1355 = vmatpush1.msra.mxu0 %v1313
    %1356 = vmatprep.subr.mxu0 0.0
    %1357 = vmatpush1.msra.mxu0 %v1314
    %1358 = vmatprep.subr.mxu0 0.0
    %1359 = vmatpush1.msra.mxu0 %v1315
    %1360 = vmatprep.subr.mxu0 0.0
    %1361 = vmatpush1.msra.mxu0 %v1316
    %1362 = vmatprep.subr.mxu0 0.0
    %1363 = vmatpush1.msra.mxu0 %v1317
    %1364 = vmatprep.subr.mxu0 0.0
    %1365 = vmatpush1.msra.mxu0 %v1318
    %1366 = vmatprep.subr.mxu0 0.0
    %1367 = vmatpush1.msra.mxu0 %v1319
    %1368 = vmatprep.subr.mxu0 0.0
    %1369 = vmatpush1.msra.mxu0 %v1320
    %1370 = vmatprep.subr.mxu0 0.0
    %1371 = vmatpush1.msra.mxu0 %v1321
    %1372 = vmatprep.subr.mxu0 0.0
    %1373 = vmatpush1.msra.mxu0 %v1322
    %1374 = vmatprep.subr.mxu0 0.0
    %1375 = vmatpush1.msra.mxu0 %v1323
    %1376 = vmatprep.subr.mxu0 0.0
    %1377 = vmatpush1.msra.mxu0 %v1324
    %1378 = vmatprep.subr.mxu0 0.0
    %1379 = vmatpush1.msra.mxu0 %v1325
    %1380 = vmatprep.subr.mxu0 0.0
    %1381 = vmatpush1.msra.mxu0 %v1326
    %1382 = vmatprep.subr.mxu0 0.0
    %1383 = vmatpush1.msra.mxu0 %v1327
    %1384 = vmatprep.subr.mxu0 0.0
    %1385 = vmatpush1.msra.mxu0 %v1328
    %1386 = vmatprep.subr.mxu0 0.0
    %1387 = vmatpush1.msra.mxu0 %v1329
    %1388 = vmatprep.subr.mxu0 0.0
    %1389 = vmatpush1.msra.mxu0 %v1330
    %1390 = vmatprep.subr.mxu0 0.0
    %1391 = vmatpush1.msra.mxu0 %v1331
    %1392 = vmatprep.subr.mxu0 0.0
    %1393 = vmatpush1.msra.mxu0 %v1332
    %1394 = vmatprep.subr.mxu0 0.0
    %1395 = vmatpush1.msra.mxu0 %v1333
    %1396 = vmatprep.subr.mxu0 0.0
    %1397 = vmatpush1.msra.mxu0 %v1334
    %1398 = vmatprep.subr.mxu0 0.0
    %1399 = vmatpush1.msra.mxu0 %v1335
    %1400 = vmatprep.mubr.f32.mxu0 %v1303
    %1401 = vmatmul.mubr.f32.gmra.mrb[0].mxu0 %v1302
    %v1402 = vpop.f32.mrb[0].mxu0
    %v1403 = vadd.f32 0.0, %v1402
    %v1404 = vpop.f32.mrb[0].mxu0
    %1405 = vdwg.mxu0
    %v1406 = vadd.f32 %v1259, %v1403
    %v1407 = vadd.f32 %v1101, %v1102
    %1408 = vadd.xlane.f32.xlu0 %v1407
    %v1409 = vpop.xlane.xlu0 %1408
    %v1410 = vmul.f32 %v1409, %v1114
    %v1411 = vrot.slane %v1410, 4
    %v1412 = vadd.f32 %v1410, %v1411
    %v1413 = vrot.slane %v1412, 2
    %v1414 = vadd.f32 %v1412, %v1413
    %v1415 = vrot.slane %v1414, 1
    %v1416 = vadd.f32 %v1414, %v1415
    %v1417 = vmul.f32 %v1416, %v1122
    %v1418 = vsub.f32 %v1101, %v1417
    %v1419 = vsub.f32 %v1102, %v1417
    %v1420 = vmul.f32 %v1418, %v1418
    %v1421 = vmul.f32 %v1419, %v1419
    %v1422 = vadd.f32 %v1420, %v1421
    %1423 = vadd.xlane.f32.xlu0 %v1422
    %v1424 = vpop.xlane.xlu0 %1423
    %v1425 = vmul.f32 %v1424, %v1114
    %v1426 = vrot.slane %v1425, 4
    %v1427 = vadd.f32 %v1425, %v1426
    %v1428 = vrot.slane %v1427, 2
    %v1429 = vadd.f32 %v1427, %v1428
    %v1430 = vrot.slane %v1429, 1
    %v1431 = vadd.f32 %v1429, %v1430
    %v1432 = vmul.f32 %v1431, %v1122
    %v1433 = vadd.f32 %v1432, 1e-05
    %v1434 = vrsqrt.pop %v1433
    %v1435 = vmul.f32 %v1418, %v1434
    %v1436 = vmul.f32 %v1419, %v1434
    %s1437 = sld [smem:[#allocation7 + $0x2]]
    %v1438 = vstv %s1437
    %v1439 = vmul.f32 %v1435, %v1438
    %v1440 = vmul.f32 %v1436, %v1438
    %s1441 = sld [smem:[#allocation8 + $0x2]]
    %v1442 = vstv %s1441
    %v1443 = vadd.f32 %v1439, %v1442
    %v1444 = vadd.f32 %v1440, %v1442
    %vm1445 = vcmp.ge.f32.partialorder %v1443, 0.0
    %vm1446 = vcmp.ge.f32.partialorder %v1444, 0.0
    %v1447 = vmul.f32 %v1443, 0.01
    %v1448 = vmul.f32 %v1444, 0.01
    %v1449 = vsel %vm1445, %v1443, %v1447
    %v1450 = vsel %vm1446, %v1444, %v1448
    %v1451 = vld [vmem:[%s5 + $0x200] sm:$0xff]
    %v1452 = vld [vmem:[%s5 + $0x208] sm:$0xff]
    %v1453 = vld [vmem:[%s5 + $0x210] sm:$0xff]
    %v1454 = vld [vmem:[%s5 + $0x218] sm:$0xff]
    %v1455 = vld [vmem:[%s5 + $0x220] sm:$0xff]
    %v1456 = vld [vmem:[%s5 + $0x228] sm:$0xff]
    %v1457 = vld [vmem:[%s5 + $0x230] sm:$0xff]
    %v1458 = vld [vmem:[%s5 + $0x238] sm:$0xff]
    %v1459 = vld [vmem:[%s5 + $0x240] sm:$0xff]
    %v1460 = vld [vmem:[%s5 + $0x248] sm:$0xff]
    %v1461 = vld [vmem:[%s5 + $0x250] sm:$0xff]
    %v1462 = vld [vmem:[%s5 + $0x258] sm:$0xff]
    %v1463 = vld [vmem:[%s5 + $0x260] sm:$0xff]
    %v1464 = vld [vmem:[%s5 + $0x268] sm:$0xff]
    %v1465 = vld [vmem:[%s5 + $0x270] sm:$0xff]
    %v1466 = vld [vmem:[%s5 + $0x278] sm:$0xff]
    %v1467 = vld [vmem:[%s5 + $0x280] sm:$0xff]
    %v1468 = vld [vmem:[%s5 + $0x288] sm:$0xff]
    %v1469 = vld [vmem:[%s5 + $0x290] sm:$0xff]
    %v1470 = vld [vmem:[%s5 + $0x298] sm:$0xff]
    %v1471 = vld [vmem:[%s5 + $0x2a0] sm:$0xff]
    %v1472 = vld [vmem:[%s5 + $0x2a8] sm:$0xff]
    %v1473 = vld [vmem:[%s5 + $0x2b0] sm:$0xff]
    %v1474 = vld [vmem:[%s5 + $0x2b8] sm:$0xff]
    %v1475 = vld [vmem:[%s5 + $0x2c0] sm:$0xff]
    %v1476 = vld [vmem:[%s5 + $0x2c8] sm:$0xff]
    %v1477 = vld [vmem:[%s5 + $0x2d0] sm:$0xff]
    %v1478 = vld [vmem:[%s5 + $0x2d8] sm:$0xff]
    %v1479 = vld [vmem:[%s5 + $0x2e0] sm:$0xff]
    %v1480 = vld [vmem:[%s5 + $0x2e8] sm:$0xff]
    %v1481 = vld [vmem:[%s5 + $0x2f0] sm:$0xff]
    %v1482 = vld [vmem:[%s5 + $0x2f8] sm:$0xff]
    %1483 = vmatprep.subr.mxu0 0.0
    %1484 = vmatpush1.msra.mxu0 %v1451
    %1485 = vmatprep.subr.mxu0 0.0
    %1486 = vmatpush1.msra.mxu0 %v1452
    %1487 = vmatprep.subr.mxu0 0.0
    %1488 = vmatpush1.msra.mxu0 %v1453
    %1489 = vmatprep.subr.mxu0 0.0
    %1490 = vmatpush1.msra.mxu0 %v1454
    %1491 = vmatprep.subr.mxu0 0.0
    %1492 = vmatpush1.msra.mxu0 %v1455
    %1493 = vmatprep.subr.mxu0 0.0
    %1494 = vmatpush1.msra.mxu0 %v1456
    %1495 = vmatprep.subr.mxu0 0.0
    %1496 = vmatpush1.msra.mxu0 %v1457
    %1497 = vmatprep.subr.mxu0 0.0
    %1498 = vmatpush1.msra.mxu0 %v1458
    %1499 = vmatprep.subr.mxu0 0.0
    %1500 = vmatpush1.msra.mxu0 %v1459
    %1501 = vmatprep.subr.mxu0 0.0
    %1502 = vmatpush1.msra.mxu0 %v1460
    %1503 = vmatprep.subr.mxu0 0.0
    %1504 = vmatpush1.msra.mxu0 %v1461
    %1505 = vmatprep.subr.mxu0 0.0
    %1506 = vmatpush1.msra.mxu0 %v1462
    %1507 = vmatprep.subr.mxu0 0.0
    %1508 = vmatpush1.msra.mxu0 %v1463
    %1509 = vmatprep.subr.mxu0 0.0
    %1510 = vmatpush1.msra.mxu0 %v1464
    %1511 = vmatprep.subr.mxu0 0.0
    %1512 = vmatpush1.msra.mxu0 %v1465
    %1513 = vmatprep.subr.mxu0 0.0
    %1514 = vmatpush1.msra.mxu0 %v1466
    %1515 = vmatprep.subr.mxu0 0.0
    %1516 = vmatpush1.msra.mxu0 %v1467
    %1517 = vmatprep.subr.mxu0 0.0
    %1518 = vmatpush1.msra.mxu0 %v1468
    %1519 = vmatprep.subr.mxu0 0.0
    %1520 = vmatpush1.msra.mxu0 %v1469
    %1521 = vmatprep.subr.mxu0 0.0
    %1522 = vmatpush1.msra.mxu0 %v1470
    %1523 = vmatprep.subr.mxu0 0.0
    %1524 = vmatpush1.msra.mxu0 %v1471
    %1525 = vmatprep.subr.mxu0 0.0
    %1526 = vmatpush1.msra.mxu0 %v1472
    %1527 = vmatprep.subr.mxu0 0.0
    %1528 = vmatpush1.msra.mxu0 %v1473
    %1529 = vmatprep.subr.mxu0 0.0
    %1530 = vmatpush1.msra.mxu0 %v1474
    %1531 = vmatprep.subr.mxu0 0.0
    %1532 = vmatpush1.msra.mxu0 %v1475
    %1533 = vmatprep.subr.mxu0 0.0
    %1534 = vmatpush1.msra.mxu0 %v1476
    %1535 = vmatprep.subr.mxu0 0.0
    %1536 = vmatpush1.msra.mxu0 %v1477
    %1537 = vmatprep.subr.mxu0 0.0
    %1538 = vmatpush1.msra.mxu0 %v1478
    %1539 = vmatprep.subr.mxu0 0.0
    %1540 = vmatpush1.msra.mxu0 %v1479
    %1541 = vmatprep.subr.mxu0 0.0
    %1542 = vmatpush1.msra.mxu0 %v1480
    %1543 = vmatprep.subr.mxu0 0.0
    %1544 = vmatpush1.msra.mxu0 %v1481
    %1545 = vmatprep.subr.mxu0 0.0
    %1546 = vmatpush1.msra.mxu0 %v1482
    %1547 = vmatprep.mubr.f32.mxu0 %v1450
    %1548 = vmatmul.mubr.f32.gmra.mrb[0].mxu0 %v1449
    %v1549 = vpop.f32.mrb[0].mxu0
    %v1550 = vadd.f32 0.0, %v1549
    %v1551 = vpop.f32.mrb[0].mxu0
    %1552 = vdwg.mxu0
    %v1553 = vadd.f32 %v1406, %v1550
    %v1554 = vrot.slane %v1553, 4
    %v1555 = vadd.f32 %v1553, %v1554
    %v1556 = vrot.slane %v1555, 2
    %v1557 = vadd.f32 %v1555, %v1556
    %v1558 = vrot.slane %v1557, 1
    %v1559 = vadd.f32 %v1557, %v1558
    %v1560 = vmul.f32 %v1559, %v1122
    %v1561 = vsub.f32 %v1553, %v1560
    %v1562 = vmul.f32 %v1561, %v1561
    %v1563 = vrot.slane %v1562, 4
    %v1564 = vadd.f32 %v1562, %v1563
    %v1565 = vrot.slane %v1564, 2
    %v1566 = vadd.f32 %v1564, %v1565
    %v1567 = vrot.slane %v1566, 1
    %v1568 = vadd.f32 %v1566, %v1567
    %v1569 = vmul.f32 %v1568, %v1122
    %v1570 = vadd.f32 %v1569, 1e-05
    %v1571 = vrsqrt.pop %v1570
    %v1572 = vmul.f32 %v1561, %v1571
    %v1573 = vld [vmem:[%s7] sm:$0x1]
    %v1575 = vlaneseq
    %v1576 = vshrl.u32 %v1575, 7
    %v1577 = vsub.s32 0, %v1576
    %v1578 = vrot.slane %v1573, %v1577
    %v1580 = vmul.f32 %v1572, %v1578
    %v1581 = vld [vmem:[%s8] sm:$0x1]
    %v1583 = vlaneseq
    %v1584 = vshrl.u32 %v1583, 7
    %v1585 = vsub.s32 0, %v1584
    %v1586 = vrot.slane %v1581, %v1585
    %v1588 = vadd.f32 %v1580, %v1586
    %vm1589 = vcmp.ge.f32.partialorder %v1588, 0.0
    %v1590 = vmul.f32 %v1588, 0.01
    %v1591 = vsel %vm1589, %v1588, %v1590
    %v1592 = vld [vmem:[%s9] sm:$0xff]
    %v1593 = vld [vmem:[%s9 + $0x8] sm:$0xff]
    %v1594 = vld [vmem:[%s9 + $0x10] sm:$0xff]
    %v1595 = vld [vmem:[%s9 + $0x18] sm:$0xff]
    %v1596 = vld [vmem:[%s9 + $0x20] sm:$0xff]
    %v1597 = vld [vmem:[%s9 + $0x28] sm:$0xff]
    %v1598 = vld [vmem:[%s9 + $0x30] sm:$0xff]
    %v1599 = vld [vmem:[%s9 + $0x38] sm:$0xff]
    %v1600 = vld [vmem:[%s9 + $0x40] sm:$0xff]
    %v1601 = vld [vmem:[%s9 + $0x48] sm:$0xff]
    %v1602 = vld [vmem:[%s9 + $0x50] sm:$0xff]
    %v1603 = vld [vmem:[%s9 + $0x58] sm:$0xff]
    %v1604 = vld [vmem:[%s9 + $0x60] sm:$0xff]
    %v1605 = vld [vmem:[%s9 + $0x68] sm:$0xff]
    %v1606 = vld [vmem:[%s9 + $0x70] sm:$0xff]
    %v1607 = vld [vmem:[%s9 + $0x78] sm:$0xff]
    %v1608 = vld [vmem:[%s10] sm:$0x1]
    %v1610 = vlaneseq
    %v1611 = vshrl.u32 %v1610, 7
    %v1612 = vsub.s32 0, %v1611
    %v1613 = vrot.slane %v1608, %v1612
    %1615 = vmatprep.subr.mxu0 0.0
    %1616 = vmatpush1.msra.mxu0 %v1592
    %1617 = vmatprep.subr.mxu0 0.0
    %1618 = vmatpush1.msra.mxu0 %v1593
    %1619 = vmatprep.subr.mxu0 0.0
    %1620 = vmatpush1.msra.mxu0 %v1594
    %1621 = vmatprep.subr.mxu0 0.0
    %1622 = vmatpush1.msra.mxu0 %v1595
    %1623 = vmatprep.subr.mxu0 0.0
    %1624 = vmatpush1.msra.mxu0 %v1596
    %1625 = vmatprep.subr.mxu0 0.0
    %1626 = vmatpush1.msra.mxu0 %v1597
    %1627 = vmatprep.subr.mxu0 0.0
    %1628 = vmatpush1.msra.mxu0 %v1598
    %1629 = vmatprep.subr.mxu0 0.0
    %1630 = vmatpush1.msra.mxu0 %v1599
    %1631 = vmatprep.subr.mxu0 0.0
    %1632 = vmatpush1.msra.mxu0 %v1600
    %1633 = vmatprep.subr.mxu0 0.0
    %1634 = vmatpush1.msra.mxu0 %v1601
    %1635 = vmatprep.subr.mxu0 0.0
    %1636 = vmatpush1.msra.mxu0 %v1602
    %1637 = vmatprep.subr.mxu0 0.0
    %1638 = vmatpush1.msra.mxu0 %v1603
    %1639 = vmatprep.subr.mxu0 0.0
    %1640 = vmatpush1.msra.mxu0 %v1604
    %1641 = vmatprep.subr.mxu0 0.0
    %1642 = vmatpush1.msra.mxu0 %v1605
    %1643 = vmatprep.subr.mxu0 0.0
    %1644 = vmatpush1.msra.mxu0 %v1606
    %1645 = vmatprep.subr.mxu0 0.0
    %1646 = vmatpush1.msra.mxu0 %v1607
    %1647 = vmatprep.subr.mxu0 0.0
    %1648 = vmatpush1.msra.mxu0 0.0
    %1649 = vmatprep.subr.mxu0 0.0
    %1650 = vmatpush1.msra.mxu0 0.0
    %1651 = vmatprep.subr.mxu0 0.0
    %1652 = vmatpush1.msra.mxu0 0.0
    %1653 = vmatprep.subr.mxu0 0.0
    %1654 = vmatpush1.msra.mxu0 0.0
    %1655 = vmatprep.subr.mxu0 0.0
    %1656 = vmatpush1.msra.mxu0 0.0
    %1657 = vmatprep.subr.mxu0 0.0
    %1658 = vmatpush1.msra.mxu0 0.0
    %1659 = vmatprep.subr.mxu0 0.0
    %1660 = vmatpush1.msra.mxu0 0.0
    %1661 = vmatprep.subr.mxu0 0.0
    %1662 = vmatpush1.msra.mxu0 0.0
    %1663 = vmatprep.subr.mxu0 0.0
    %1664 = vmatpush1.msra.mxu0 0.0
    %1665 = vmatprep.subr.mxu0 0.0
    %1666 = vmatpush1.msra.mxu0 0.0
    %1667 = vmatprep.subr.mxu0 0.0
    %1668 = vmatpush1.msra.mxu0 0.0
    %1669 = vmatprep.subr.mxu0 0.0
    %1670 = vmatpush1.msra.mxu0 0.0
    %1671 = vmatprep.subr.mxu0 0.0
    %1672 = vmatpush1.msra.mxu0 0.0
    %1673 = vmatprep.subr.mxu0 0.0
    %1674 = vmatpush1.msra.mxu0 0.0
    %1675 = vmatprep.subr.mxu0 0.0
    %1676 = vmatpush1.msra.mxu0 0.0
    %1677 = vmatprep.subr.mxu0 0.0
    %1678 = vmatpush1.msra.mxu0 0.0
    %1679 = vmatprep.mubr.f32.mxu0 0.0
    %1680 = vmatmul.mubr.f32.gmra.mrb[0].mxu0 %v1591
    %v1681 = vpop.f32.mrb[0].mxu0
    %v1682 = vadd.f32 %v1613, %v1681
    %v1683 = vpop.f32.mrb[0].mxu0
    %1684 = vdwg.mxu0
    %v1685 = vlaneseq
    %v1686 = vand.u32 %v1685, 127
    %vm1687 = vcmp.lt.s32.totalorder %v1686, 10
    %v1688 = vsel %vm1687, %v1682, -1e+30
    %1689 = vmax.xlane.f32.xlu0 %v1688
    %v1690 = vpop.xlane.xlu0 %1689
    %v1691 = vsub.f32 %v1688, %v1690
    %v1692 = vmul.f32 %v1691, 1.442695
    %v1693 = vpow.pop %v1692
    %1694 = vadd.xlane.f32.xlu0 %v1693
    %v1695 = vpop.xlane.xlu0 %1694
    %v1696 = vrcp.pop %v1695
    %v1697 = vmul.f32 %v1695, %v1696
    %v1698 = vsub.f32 2.0, %v1697
    %v1699 = vmul.f32 %v1696, %v1698
    %v1700 = vmul.f32 %v1693, %v1699
    %vm1701 = vcmask 80896
    %1702 = vst.msk [vmem:[#allocation10] sm:$0xff] %vm1701, %v1700
    // Predicated region
    $region62: #{classifier_forward.1} parent=1 // pred_check
      _
    $region63: #{classifier_forward.1} parent=1 // pred_check_branch
      %1704 = sbr.rel (0) target = $region65
    $region64: #{classifier_forward.1} parent=1 // pred_region
      %s1706 = ssub.s32 128, 128
      %1707 = vsyncadd [#allocation3], %s1706
      %s1709 = sshll.u32 [#allocation10], 4
      %s1710 = int_to_ptr.vmem [resolvable:$true] %s1709
      %1712 = dma.vmem_to_hbm [thread:$0]  %s1710, 128, %s11, [#allocation3]
    $region65: #{classifier_forward.1} parent=1 // pred_fallthru
      _
    // Predicated region
    $region66: #{classifier_forward.1} parent=1 // pred_check
      _
    $region67: #{classifier_forward.1} parent=1 // pred_check_branch
      %1714 = sbr.rel (0) target = $region69
    $region68: #{classifier_forward.1} parent=1 // pred_region
      %1715 = dma.done [#allocation3], 128
    $region69: #{classifier_forward.1} parent=1 // pred_fallthru
      _
    %1716 = vsyncpa [#allocation3], 1
    %1717 = vsyncpa [#allocation4], 1
    %1718 = vsyncpa [#allocation6], 1
    %1719 = vsyncpa [#allocation9], 1

</llo_original>
